<compile_context>
chip_gen: v5e
topology: v5e:2x2
jax: 0.10.0
libtpu: 0.0.40
codegen_flags: <defaults>
</compile_context>

<pallas_src>
import functools

import numpy as np

import jax
import jax.numpy as jnp
from jax.experimental import pallas as pl
from jax.experimental.pallas import tpu as pltpu


def _round_up(n: int, m: int) -> int:
    return ((n + m - 1) // m) * m


def _sublane(dtype) -> int:
    # Sublane multiple for this dtype (f32: 8, bf16: 16, int8/fp8: 32).
    return max(8, 32 // jnp.dtype(dtype).itemsize)


def _vmem_capacity_bytes() -> int:
    """Physical VMEM per TensorCore; conservative (v7x, 64 MiB) default if query fails."""
    try:
        cap = int(pltpu.get_tpu_info().vmem_capacity_bytes)
        if cap > 0:
            return cap
    except Exception:
        pass
    return 64 * 1024 * 1024


# ---------------------------------------------------------------------------
# Kernels
# ---------------------------------------------------------------------------
def _upsample_mxu_kernel(x_ref, r_ref, o_ref):
    """Nearest upsample as a one-hot MXU matmul (lane-dense in and out)."""
    # x_ref: (T, H*W)          flat input rows (free view of NCHW)
    # r_ref: (H*W, H*S*W*S)    constant 0/1 replication matrix (VMEM resident)
    # o_ref: (T, H*S*W*S)      flat output rows == contiguous NCHW output view
    o_ref[...] = jnp.dot(
        x_ref[...],
        r_ref[...],
        precision=jax.lax.Precision.HIGHEST,   # keep pure replication bit-exact
        preferred_element_type=jnp.float32,
    ).astype(o_ref.dtype)


def _upsample_vec_kernel(x_ref, o_ref, *, scale: int):
    """VPU fallback: 3-D output block so the store needs no sublane->lane relayout."""
    # x_ref: (T, Ht, W);  o_ref: (T, Ht*S, W*S)
    x = x_ref[...]
    t, h, w = x.shape
    s = scale
    # W-repeat (lane interleave), then H-repeat along the sublane axis.
    xw = jnp.broadcast_to(x[:, :, :, None], (t, h, w, s)).reshape(t, h, w * s)
    o_ref[...] = jnp.broadcast_to(
        xw[:, :, None, :], (t, h, s, w * s)
    ).reshape(t, h * s, w * s)


def _replication_matrix(h: int, w: int, s: int, dtype) -> jax.Array:
    """Exact 0/1 matrix R with  x_flat @ R == nearest-upsample(x) flattened row-major."""
    oh = np.arange(h * s)
    ow = np.arange(w * s)
    src = (oh[:, None] // s) * w + (ow[None, :] // s)       # (H*S, W*S) source index
    r = np.arange(h * w)[:, None] == src.reshape(1, -1)     # (H*W, H*S*W*S)
    return jnp.asarray(r.astype(np.float32)).astype(dtype)  # exact 0/1 in x's dtype


# ---------------------------------------------------------------------------
# Wrapper
# ---------------------------------------------------------------------------
def upsample_nearest(x: jax.Array, scale_factor=2) -> jax.Array:
    """Nearest-neighbor Sx upsample of an NCHW tensor via Pallas TPU kernels."""
    B, C, H, W = x.shape
    S = int(round(float(scale_factor)))
    if abs(float(scale_factor) - S) > 1e-9 or S < 1:
        # TODO(synk): general (non-integer) nearest scale factors not implemented.
        raise NotImplementedError("Only positive integer scale factors are supported")
    if S == 1:
        return x

    dtype = x.dtype
    itemsize = jnp.dtype(dtype).itemsize
    BC = B * C
    HW = H * W
    out_hw = HW * S * S
    sub = _sublane(dtype)

    vmem_cap = _vmem_capacity_bytes()
    # Single-buffered (in + out) per-block budget; the pipeline double-buffers it.
    budget = max(4 << 20, min(12 << 20, vmem_cap // 8))

    def pick_bc_tile(per_row_bytes: int) -> int:
        max_rows = max(1, budget // max(1, per_row_bytes))
        if max_rows >= BC and BC < 2 * sub:
            return BC
        tile = min(BC, max_rows)
        if BC >= 2 * sub:
            # >= 2 balanced blocks so both v7x TensorCores get work; near-free on
            # single-TC v5e/v6e (one extra ~0.35us grid step).
            tile = min(tile, _round_up(pl.cdiv(BC, 2), sub))
        tile = max(sub, (tile // sub) * sub)
        return BC if tile >= BC else tile

    def vmem_limit_from(needed_bytes: int) -> int:
        floor = min(32 << 20, vmem_cap // 2)
        lim = max(int(1.25 * needed_bytes) + (2 << 20), floor)
        return int(min(lim, 0.75 * vmem_cap))

    hbm_bytes = (1 + S * S) * BC * HW * itemsize  # true HBM traffic (write-dominated)

    # Padded VMEM footprint of the resident replication matrix.
    r_bytes = _round_up(HW, sub) * _round_up(out_hw, 128) * itemsize
    use_mxu = (
        jnp.issubdtype(dtype, jnp.floating)   # v7x MXU has no int datapath
        and HW <= 2048
        and r_bytes <= (4 << 20)
    )

    if use_mxu:
        # ---- MXU one-hot path: lane-dense flat in/out, zero relayout. ----
        row_bytes = (_round_up(HW, 128) + _round_up(out_hw, 128)) * itemsize
        bc_tile = pick_bc_tile(row_bytes)

        x2 = x.reshape(BC, HW)                    # free view of contiguous NCHW
        R = _replication_matrix(H, W, S, dtype)

        in_block = bc_tile * _round_up(HW, 128) * itemsize
        out_block = bc_tile * _round_up(out_hw, 128) * itemsize
        needed = 2 * (in_block + out_block) + 2 * r_bytes

        out_flat = pl.pallas_call(
            _upsample_mxu_kernel,
            out_shape=jax.ShapeDtypeStruct((BC, out_hw), dtype),
            grid_spec=pltpu.PrefetchScalarGridSpec(
                num_scalar_prefetch=0,
                grid=(pl.cdiv(BC, bc_tile),),
                in_specs=[
                    pl.BlockSpec((bc_tile, HW), lambda i: (i, 0)),
                    pl.BlockSpec((HW, out_hw), lambda i: (0, 0)),  # VMEM resident
                ],
                out_specs=pl.BlockSpec((bc_tile, out_hw), lambda i: (i, 0)),
            ),
            compiler_params=pltpu.CompilerParams(
                dimension_semantics=("parallel",),
                vmem_limit_bytes=vmem_limit_from(needed),
            ),
            cost_estimate=pl.CostEstimate(
                flops=2 * BC * HW * out_hw,
                transcendentals=0,
                bytes_accessed=hbm_bytes + r_bytes,
            ),
        )(x2, R)
        # Free view back to NCHW: (BC, H*S*W*S) -> (B, C, H*S, W*S).
        return out_flat.reshape(B, C, H * S, W * S)

    # ---- VPU fallback (large planes / non-float dtypes): 3-D out block + H tiling. ----
    def vec_row_bytes(h_chunk: int) -> int:
        return (
            _round_up(h_chunk, sub) * _round_up(W, 128)
            + _round_up(h_chunk * S, sub) * _round_up(W * S, 128)
        ) * itemsize

    h_tile = H
    if vec_row_bytes(H) > budget and H > sub:
        per_h = (_round_up(W, 128) + S * _round_up(W * S, 128)) * itemsize
        h_tile = max(sub, ((budget // per_h) // sub) * sub)
        h_tile = min(h_tile, H)

    bc_tile = pick_bc_tile(vec_row_bytes(h_tile))
    x3 = x.reshape(BC, H, W)  # free view of contiguous NCHW

    out_block = bc_tile * _round_up(h_tile * S, sub) * _round_up(W * S, 128) * itemsize
    needed = 2 * bc_tile * vec_row_bytes(h_tile) + out_block  # + relayout temporaries

    kernel = functools.partial(_upsample_vec_kernel, scale=S)
    out3 = pl.pallas_call(
        kernel,
        out_shape=jax.ShapeDtypeStruct((BC, H * S, W * S), dtype),
        grid_spec=pltpu.PrefetchScalarGridSpec(
            num_scalar_prefetch=0,
            grid=(pl.cdiv(BC, bc_tile), pl.cdiv(H, h_tile)),
            in_specs=[pl.BlockSpec((bc_tile, h_tile, W), lambda i, j: (i, j, 0))],
            out_specs=pl.BlockSpec(
                (bc_tile, h_tile * S, W * S), lambda i, j: (i, j, 0)
            ),
        ),
        compiler_params=pltpu.CompilerParams(
            dimension_semantics=("parallel", "parallel"),
            vmem_limit_bytes=vmem_limit_from(needed),
        ),
        cost_estimate=pl.CostEstimate(
            flops=0, transcendentals=0, bytes_accessed=hbm_bytes
        ),
    )(x3)
    return out3.reshape(B, C, H * S, W * S)


class Upsample:
    """JAX/Pallas mirror of the PyTorch Upsample module (mode='nearest')."""

    def __init__(self, scale_factor=2, mode: str = "nearest"):
        if mode != "nearest":
            # TODO(synk): only 'nearest' mode is implemented (module default).
            raise NotImplementedError("Only mode='nearest' is implemented")
        self.scale_factor = scale_factor
        self.mode = mode

    def __call__(self, x: jax.Array) -> jax.Array:
        return upsample_nearest(x, self.scale_factor)


if __name__ == "__main__":
    key = jax.random.PRNGKey(0)

    # Main case (matches the module's typical use): 2x nearest upsample, f32 NCHW.
    B, C, H, W = 2, 4, 16, 16
    x = jax.random.normal(key, (B, C, H, W), dtype=jnp.float32)
    model = Upsample(scale_factor=2, mode="nearest")
    out = jax.block_until_ready(model(x))
    ref = jnp.repeat(jnp.repeat(x, 2, axis=2), 2, axis=3)
    assert out.shape == (B, C, H * 2, W * 2), out.shape
    assert out.dtype == x.dtype
    assert jnp.array_equal(out, ref), "mismatch vs nearest-neighbor reference (S=2)"

    # Partial trailing B*C block (BC=20 not divisible by the chosen bc_tile).
    x_p = jax.random.normal(jax.random.PRNGKey(1), (5, 4, 16, 16), dtype=jnp.float32)
    out_p = jax.block_until_ready(upsample_nearest(x_p, 2))
    ref_p = jnp.repeat(jnp.repeat(x_p, 2, axis=2), 2, axis=3)
    assert jnp.array_equal(out_p, ref_p), "mismatch with partial trailing bc block"

    # Non-default integer scale factor.
    x_s3 = jax.random.normal(jax.random.PRNGKey(2), (1, 2, 8, 8), dtype=jnp.float32)
    out_s3 = jax.block_until_ready(upsample_nearest(x_s3, 3))
    ref_s3 = jnp.repeat(jnp.repeat(x_s3, 3, axis=2), 3, axis=3)
    assert jnp.array_equal(out_s3, ref_s3), "mismatch vs reference (S=3)"

    # Non-float dtype exercises the VPU fallback path.
    x_i = jax.random.randint(jax.random.PRNGKey(3), (1, 2, 16, 16), -100, 100, jnp.int32)
    out_i = jax.block_until_ready(upsample_nearest(x_i, 2))
    ref_i = jnp.repeat(jnp.repeat(x_i, 2, axis=2), 2, axis=3)
    assert jnp.array_equal(out_i, ref_i), "mismatch vs reference (int32 fallback)"

    print("KERNEL_OK")
</pallas_src>

<mosaic_0001>
module attributes {stable_mosaic.version = 11 : i64} {
  func.func @_upsample_mxu_kernel(%arg0: i32, %arg1: memref<8x256xf32, #tpu.memory_space<vmem>>, %arg2: memref<256x1024xf32, #tpu.memory_space<vmem>>, %arg3: memref<8x1024xf32, #tpu.memory_space<vmem>>) attributes {dimension_semantics = [#tpu.dimension_semantics<parallel>], iteration_bounds = array<i64: 1>, scalar_prefetch = 0 : i64, scratch_operands = 0 : i64, tpu.core_type = #tpu.core_type<tc>, window_params = [{transform_indices = @transform_0, window_bounds = array<i64: 8, 256>}, {pipeline_mode = #tpu.pipeline_mode<synchronous>, transform_indices = @transform_1, window_bounds = array<i64: 256, 1024>}, {transform_indices = @transform_2, window_bounds = array<i64: 8, 1024>}]} {
    %c0 = arith.constant 0 : index
    %c0_0 = arith.constant 0 : index
    %0 = vector.load %arg1[%c0, %c0_0] : memref<8x256xf32, #tpu.memory_space<vmem>>, vector<8x256xf32>
    %c0_1 = arith.constant 0 : index
    %c0_2 = arith.constant 0 : index
    %1 = vector.load %arg2[%c0_1, %c0_2] : memref<256x1024xf32, #tpu.memory_space<vmem>>, vector<256x1024xf32>
    %cst = arith.constant dense<0.000000e+00> : vector<8x1024xf32>
    %2 = tpu.matmul %0, %1, %cst {dimension_numbers = #tpu.dot_dimension_numbers<[1], [0], [0], [1], [0, 0, 1, 1], [], []>, precision = #tpu.contract_precision<fp32>} : vector<8x256xf32>, vector<256x1024xf32>, vector<8x1024xf32> -> vector<8x1024xf32>
    %c0_3 = arith.constant 0 : index
    %c0_4 = arith.constant 0 : index
    %3 = vector.load %arg3[%c0_3, %c0_4] : memref<8x1024xf32, #tpu.memory_space<vmem>>, vector<8x1024xf32>
    tpu.vector_store %arg3[%c0_3, %c0_4], %2 {strides = array<i32>} : memref<8x1024xf32, #tpu.memory_space<vmem>>, vector<8x1024xf32>,
    return
  }
  func.func @transform_0(%arg0: i32) -> (i32, i32) {
    %c0_i32 = arith.constant 0 : i32
    %c0_i32_0 = arith.constant 0 : i32
    return %arg0, %c0_i32 : i32, i32
  }
  func.func @transform_1(%arg0: i32) -> (i32, i32) {
    %c0_i32 = arith.constant 0 : i32
    %c0_i32_0 = arith.constant 0 : i32
    %c0_i32_1 = arith.constant 0 : i32
    return %c0_i32, %c0_i32_0 : i32, i32
  }
  func.func @transform_2(%arg0: i32) -> (i32, i32) {
    %c0_i32 = arith.constant 0 : i32
    %c0_i32_0 = arith.constant 0 : i32
    return %arg0, %c0_i32 : i32, i32
  }
}

</mosaic_0001>

<llo_original>
// kernel: tpu_custom_call.1
$region0: #{tpu_custom_call.1}
  #allocation0 [shape = 'u32[]', space=smem, size = 0x4, offset = 0x4, fixed_abs, tag = 'smem constant byte address 0x4 - core index']
  #allocation1 [shape = 'u32[72,128]{1,0:T(1,128)}', space=vmem, size = 0x9000, scoped, tag = 'internal scratch']
  %s0 = inlined_call_operand.hbm [shape: f32[8,256], index: 0, kind: input, shape index: {}]
  %s1 = inlined_call_operand.hbm [shape: f32[256,1024], index: 1, kind: input, shape index: {}]
  %s2 = inlined_call_operand.hbm [shape: f32[8,1024], index: 2, kind: output, shape index: {}]
  %s3 = sld [smem:[#allocation0]]
  $region26: #{tpu_custom_call.1} parent=0
    _
  %s5 = ssub.s32 1, %s3
  %s6 = scalar_select 0, %s5, %s3
  $region1: #{tpu_custom_call.1} parent=0
    #allocation2 [shape = 'u8[8192]{0}', space=vmem, size = 0x2000, scoped, tag = 'input window, operand 0, single buffered']
    #allocation3 [shape = 's32[1]{0}', space=sflag, size = 0x4, scoped, tag = 'scoped memory for tpu_custom_call.1']
    #allocation4 [shape = 's32[1]{0}', space=sflag, size = 0x4, scoped, tag = 'scoped memory for tpu_custom_call.1']
    #allocation5 [shape = 'u8[1048576]{0}', space=vmem, size = 0x100000, scoped, tag = 'input window, operand 1, single buffered']
    #allocation6 [shape = 's32[1]{0}', space=sflag, size = 0x4, scoped, tag = 'scoped memory for tpu_custom_call.1']
    #allocation7 [shape = 'u8[32768]{0}', space=vmem, size = 0x8000, scoped, tag = 'output window, operand 0, single buffered']
    %7 = vsyncpa [#allocation3], 0
    %8 = vsyncpa [#allocation6], 0
    %9 = vsyncpa [#allocation4], 0
    // Predicated region
    $region2: #{tpu_custom_call.1} parent=1 // pred_check
      _
    $region3: #{tpu_custom_call.1} parent=1 // pred_check_branch
      %11 = sbr.rel (0) target = $region5
    $region4: #{tpu_custom_call.1} parent=1 // pred_region
      %13 = vsyncadd [#allocation3], 0
      %s15 = sshll.u32 %s0, 4
      %s16 = int_to_ptr.hbm [resolvable:$true] %s15
      %s17 = sshll.u32 [#allocation2], 4
      %s18 = int_to_ptr.vmem [resolvable:$true] %s17
      %20 = dma.hbm_to_vmem [thread:$0]  %s16, 256, %s18, [#allocation3]
    $region5: #{tpu_custom_call.1} parent=1 // pred_fallthru
      _
    // Predicated region
    $region6: #{tpu_custom_call.1} parent=1 // pred_check
      _
    $region7: #{tpu_custom_call.1} parent=1 // pred_check_branch
      %22 = sbr.rel (0) target = $region9
    $region8: #{tpu_custom_call.1} parent=1 // pred_region
      %24 = vsyncadd [#allocation6], 0
      %s25 = sshll.u32 %s1, 4
      %s26 = int_to_ptr.hbm [resolvable:$true] %s25
      %s27 = sshll.u32 [#allocation5], 4
      %s28 = int_to_ptr.vmem [resolvable:$true] %s27
      %33 = dma.hbm_to_vmem [thread:$0]  %s26, 32768, %s28, [#allocation6], 1024, 1024, 64
    $region9: #{tpu_custom_call.1} parent=1 // pred_fallthru
      _
    // Predicated region
    $region10: #{tpu_custom_call.1} parent=1 // pred_check
      _
    $region11: #{tpu_custom_call.1} parent=1 // pred_check_branch
      %35 = sbr.rel (0) target = $region13
    $region12: #{tpu_custom_call.1} parent=1 // pred_region
      %37 = dma.done [#allocation3], 256
    $region13: #{tpu_custom_call.1} parent=1 // pred_fallthru
      _
    // Predicated region
    $region14: #{tpu_custom_call.1} parent=1 // pred_check
      _
    $region15: #{tpu_custom_call.1} parent=1 // pred_check_branch
      %39 = sbr.rel (0) target = $region17
    $region16: #{tpu_custom_call.1} parent=1 // pred_region
      %41 = dma.done [#allocation6], 32768
    $region17: #{tpu_custom_call.1} parent=1 // pred_fallthru
      _
    %v42 = vld [vmem:[#allocation2] sm:$0xff]
    %v43 = vld [vmem:[#allocation2 + $0x8] sm:$0xff]
    %v44 = vld [vmem:[#allocation5] sm:$0xff]
    %v45 = vld [vmem:[#allocation5 + $0x8] sm:$0xff]
    %v46 = vld [vmem:[#allocation5 + $0x10] sm:$0xff]
    %v47 = vld [vmem:[#allocation5 + $0x18] sm:$0xff]
    %v48 = vld [vmem:[#allocation5 + $0x20] sm:$0xff]
    %v49 = vld [vmem:[#allocation5 + $0x28] sm:$0xff]
    %v50 = vld [vmem:[#allocation5 + $0x30] sm:$0xff]
    %v51 = vld [vmem:[#allocation5 + $0x38] sm:$0xff]
    %v52 = vld [vmem:[#allocation5 + $0x40] sm:$0xff]
    %v53 = vld [vmem:[#allocation5 + $0x48] sm:$0xff]
    %v54 = vld [vmem:[#allocation5 + $0x50] sm:$0xff]
    %v55 = vld [vmem:[#allocation5 + $0x58] sm:$0xff]
    %v56 = vld [vmem:[#allocation5 + $0x60] sm:$0xff]
    %v57 = vld [vmem:[#allocation5 + $0x68] sm:$0xff]
    %v58 = vld [vmem:[#allocation5 + $0x70] sm:$0xff]
    %v59 = vld [vmem:[#allocation5 + $0x78] sm:$0xff]
    %v60 = vld [vmem:[#allocation5 + $0x80] sm:$0xff]
    %v61 = vld [vmem:[#allocation5 + $0x88] sm:$0xff]
    %v62 = vld [vmem:[#allocation5 + $0x90] sm:$0xff]
    %v63 = vld [vmem:[#allocation5 + $0x98] sm:$0xff]
    %v64 = vld [vmem:[#allocation5 + $0xa0] sm:$0xff]
    %v65 = vld [vmem:[#allocation5 + $0xa8] sm:$0xff]
    %v66 = vld [vmem:[#allocation5 + $0xb0] sm:$0xff]
    %v67 = vld [vmem:[#allocation5 + $0xb8] sm:$0xff]
    %v68 = vld [vmem:[#allocation5 + $0xc0] sm:$0xff]
    %v69 = vld [vmem:[#allocation5 + $0xc8] sm:$0xff]
    %v70 = vld [vmem:[#allocation5 + $0xd0] sm:$0xff]
    %v71 = vld [vmem:[#allocation5 + $0xd8] sm:$0xff]
    %v72 = vld [vmem:[#allocation5 + $0xe0] sm:$0xff]
    %v73 = vld [vmem:[#allocation5 + $0xe8] sm:$0xff]
    %v74 = vld [vmem:[#allocation5 + $0xf0] sm:$0xff]
    %v75 = vld [vmem:[#allocation5 + $0xf8] sm:$0xff]
    %v76 = vld [vmem:[#allocation5 + $0x100] sm:$0xff]
    %v77 = vld [vmem:[#allocation5 + $0x108] sm:$0xff]
    %v78 = vld [vmem:[#allocation5 + $0x110] sm:$0xff]
    %v79 = vld [vmem:[#allocation5 + $0x118] sm:$0xff]
    %v80 = vld [vmem:[#allocation5 + $0x120] sm:$0xff]
    %v81 = vld [vmem:[#allocation5 + $0x128] sm:$0xff]
    %v82 = vld [vmem:[#allocation5 + $0x130] sm:$0xff]
    %v83 = vld [vmem:[#allocation5 + $0x138] sm:$0xff]
    %v84 = vld [vmem:[#allocation5 + $0x140] sm:$0xff]
    %v85 = vld [vmem:[#allocation5 + $0x148] sm:$0xff]
    %v86 = vld [vmem:[#allocation5 + $0x150] sm:$0xff]
    %v87 = vld [vmem:[#allocation5 + $0x158] sm:$0xff]
    %v88 = vld [vmem:[#allocation5 + $0x160] sm:$0xff]
    %v89 = vld [vmem:[#allocation5 + $0x168] sm:$0xff]
    %v90 = vld [vmem:[#allocation5 + $0x170] sm:$0xff]
    %v91 = vld [vmem:[#allocation5 + $0x178] sm:$0xff]
    %v92 = vld [vmem:[#allocation5 + $0x180] sm:$0xff]
    %v93 = vld [vmem:[#allocation5 + $0x188] sm:$0xff]
    %v94 = vld [vmem:[#allocation5 + $0x190] sm:$0xff]
    %v95 = vld [vmem:[#allocation5 + $0x198] sm:$0xff]
    %v96 = vld [vmem:[#allocation5 + $0x1a0] sm:$0xff]
    %v97 = vld [vmem:[#allocation5 + $0x1a8] sm:$0xff]
    %v98 = vld [vmem:[#allocation5 + $0x1b0] sm:$0xff]
    %v99 = vld [vmem:[#allocation5 + $0x1b8] sm:$0xff]
    %v100 = vld [vmem:[#allocation5 + $0x1c0] sm:$0xff]
    %v101 = vld [vmem:[#allocation5 + $0x1c8] sm:$0xff]
    %v102 = vld [vmem:[#allocation5 + $0x1d0] sm:$0xff]
    %v103 = vld [vmem:[#allocation5 + $0x1d8] sm:$0xff]
    %v104 = vld [vmem:[#allocation5 + $0x1e0] sm:$0xff]
    %v105 = vld [vmem:[#allocation5 + $0x1e8] sm:$0xff]
    %v106 = vld [vmem:[#allocation5 + $0x1f0] sm:$0xff]
    %v107 = vld [vmem:[#allocation5 + $0x1f8] sm:$0xff]
    %v108 = vld [vmem:[#allocation5 + $0x200] sm:$0xff]
    %v109 = vld [vmem:[#allocation5 + $0x208] sm:$0xff]
    %v110 = vld [vmem:[#allocation5 + $0x210] sm:$0xff]
    %v111 = vld [vmem:[#allocation5 + $0x218] sm:$0xff]
    %v112 = vld [vmem:[#allocation5 + $0x220] sm:$0xff]
    %v113 = vld [vmem:[#allocation5 + $0x228] sm:$0xff]
    %v114 = vld [vmem:[#allocation5 + $0x230] sm:$0xff]
    %v115 = vld [vmem:[#allocation5 + $0x238] sm:$0xff]
    %v116 = vld [vmem:[#allocation5 + $0x240] sm:$0xff]
    %v117 = vld [vmem:[#allocation5 + $0x248] sm:$0xff]
    %v118 = vld [vmem:[#allocation5 + $0x250] sm:$0xff]
    %v119 = vld [vmem:[#allocation5 + $0x258] sm:$0xff]
    %v120 = vld [vmem:[#allocation5 + $0x260] sm:$0xff]
    %v121 = vld [vmem:[#allocation5 + $0x268] sm:$0xff]
    %v122 = vld [vmem:[#allocation5 + $0x270] sm:$0xff]
    %v123 = vld [vmem:[#allocation5 + $0x278] sm:$0xff]
    %v124 = vld [vmem:[#allocation5 + $0x280] sm:$0xff]
    %v125 = vld [vmem:[#allocation5 + $0x288] sm:$0xff]
    %v126 = vld [vmem:[#allocation5 + $0x290] sm:$0xff]
    %v127 = vld [vmem:[#allocation5 + $0x298] sm:$0xff]
    %v128 = vld [vmem:[#allocation5 + $0x2a0] sm:$0xff]
    %v129 = vld [vmem:[#allocation5 + $0x2a8] sm:$0xff]
    %v130 = vld [vmem:[#allocation5 + $0x2b0] sm:$0xff]
    %v131 = vld [vmem:[#allocation5 + $0x2b8] sm:$0xff]
    %v132 = vld [vmem:[#allocation5 + $0x2c0] sm:$0xff]
    %v133 = vld [vmem:[#allocation5 + $0x2c8] sm:$0xff]
    %v134 = vld [vmem:[#allocation5 + $0x2d0] sm:$0xff]
    %v135 = vld [vmem:[#allocation5 + $0x2d8] sm:$0xff]
    %v136 = vld [vmem:[#allocation5 + $0x2e0] sm:$0xff]
    %v137 = vld [vmem:[#allocation5 + $0x2e8] sm:$0xff]
    %v138 = vld [vmem:[#allocation5 + $0x2f0] sm:$0xff]
    %v139 = vld [vmem:[#allocation5 + $0x2f8] sm:$0xff]
    %v140 = vld [vmem:[#allocation5 + $0x300] sm:$0xff]
    %v141 = vld [vmem:[#allocation5 + $0x308] sm:$0xff]
    %v142 = vld [vmem:[#allocation5 + $0x310] sm:$0xff]
    %v143 = vld [vmem:[#allocation5 + $0x318] sm:$0xff]
    %v144 = vld [vmem:[#allocation5 + $0x320] sm:$0xff]
    %v145 = vld [vmem:[#allocation5 + $0x328] sm:$0xff]
    %v146 = vld [vmem:[#allocation5 + $0x330] sm:$0xff]
    %v147 = vld [vmem:[#allocation5 + $0x338] sm:$0xff]
    %v148 = vld [vmem:[#allocation5 + $0x340] sm:$0xff]
    %v149 = vld [vmem:[#allocation5 + $0x348] sm:$0xff]
    %v150 = vld [vmem:[#allocation5 + $0x350] sm:$0xff]
    %v151 = vld [vmem:[#allocation5 + $0x358] sm:$0xff]
    %v152 = vld [vmem:[#allocation5 + $0x360] sm:$0xff]
    %v153 = vld [vmem:[#allocation5 + $0x368] sm:$0xff]
    %v154 = vld [vmem:[#allocation5 + $0x370] sm:$0xff]
    %v155 = vld [vmem:[#allocation5 + $0x378] sm:$0xff]
    %v156 = vld [vmem:[#allocation5 + $0x380] sm:$0xff]
    %v157 = vld [vmem:[#allocation5 + $0x388] sm:$0xff]
    %v158 = vld [vmem:[#allocation5 + $0x390] sm:$0xff]
    %v159 = vld [vmem:[#allocation5 + $0x398] sm:$0xff]
    %v160 = vld [vmem:[#allocation5 + $0x3a0] sm:$0xff]
    %v161 = vld [vmem:[#allocation5 + $0x3a8] sm:$0xff]
    %v162 = vld [vmem:[#allocation5 + $0x3b0] sm:$0xff]
    %v163 = vld [vmem:[#allocation5 + $0x3b8] sm:$0xff]
    %v164 = vld [vmem:[#allocation5 + $0x3c0] sm:$0xff]
    %v165 = vld [vmem:[#allocation5 + $0x3c8] sm:$0xff]
    %v166 = vld [vmem:[#allocation5 + $0x3d0] sm:$0xff]
    %v167 = vld [vmem:[#allocation5 + $0x3d8] sm:$0xff]
    %v168 = vld [vmem:[#allocation5 + $0x3e0] sm:$0xff]
    %v169 = vld [vmem:[#allocation5 + $0x3e8] sm:$0xff]
    %v170 = vld [vmem:[#allocation5 + $0x3f0] sm:$0xff]
    %v171 = vld [vmem:[#allocation5 + $0x3f8] sm:$0xff]
    %v172 = vld [vmem:[#allocation5 + $0x400] sm:$0xff]
    %v173 = vld [vmem:[#allocation5 + $0x408] sm:$0xff]
    %v174 = vld [vmem:[#allocation5 + $0x410] sm:$0xff]
    %v175 = vld [vmem:[#allocation5 + $0x418] sm:$0xff]
    %v176 = vld [vmem:[#allocation5 + $0x420] sm:$0xff]
    %v177 = vld [vmem:[#allocation5 + $0x428] sm:$0xff]
    %v178 = vld [vmem:[#allocation5 + $0x430] sm:$0xff]
    %v179 = vld [vmem:[#allocation5 + $0x438] sm:$0xff]
    %v180 = vld [vmem:[#allocation5 + $0x440] sm:$0xff]
    %v181 = vld [vmem:[#allocation5 + $0x448] sm:$0xff]
    %v182 = vld [vmem:[#allocation5 + $0x450] sm:$0xff]
    %v183 = vld [vmem:[#allocation5 + $0x458] sm:$0xff]
    %v184 = vld [vmem:[#allocation5 + $0x460] sm:$0xff]
    %v185 = vld [vmem:[#allocation5 + $0x468] sm:$0xff]
    %v186 = vld [vmem:[#allocation5 + $0x470] sm:$0xff]
    %v187 = vld [vmem:[#allocation5 + $0x478] sm:$0xff]
    %v188 = vld [vmem:[#allocation5 + $0x480] sm:$0xff]
    %v189 = vld [vmem:[#allocation5 + $0x488] sm:$0xff]
    %v190 = vld [vmem:[#allocation5 + $0x490] sm:$0xff]
    %v191 = vld [vmem:[#allocation5 + $0x498] sm:$0xff]
    %v192 = vld [vmem:[#allocation5 + $0x4a0] sm:$0xff]
    %v193 = vld [vmem:[#allocation5 + $0x4a8] sm:$0xff]
    %v194 = vld [vmem:[#allocation5 + $0x4b0] sm:$0xff]
    %v195 = vld [vmem:[#allocation5 + $0x4b8] sm:$0xff]
    %v196 = vld [vmem:[#allocation5 + $0x4c0] sm:$0xff]
    %v197 = vld [vmem:[#allocation5 + $0x4c8] sm:$0xff]
    %v198 = vld [vmem:[#allocation5 + $0x4d0] sm:$0xff]
    %v199 = vld [vmem:[#allocation5 + $0x4d8] sm:$0xff]
    %v200 = vld [vmem:[#allocation5 + $0x4e0] sm:$0xff]
    %v201 = vld [vmem:[#allocation5 + $0x4e8] sm:$0xff]
    %v202 = vld [vmem:[#allocation5 + $0x4f0] sm:$0xff]
    %v203 = vld [vmem:[#allocation5 + $0x4f8] sm:$0xff]
    %v204 = vld [vmem:[#allocation5 + $0x500] sm:$0xff]
    %v205 = vld [vmem:[#allocation5 + $0x508] sm:$0xff]
    %v206 = vld [vmem:[#allocation5 + $0x510] sm:$0xff]
    %v207 = vld [vmem:[#allocation5 + $0x518] sm:$0xff]
    %v208 = vld [vmem:[#allocation5 + $0x520] sm:$0xff]
    %v209 = vld [vmem:[#allocation5 + $0x528] sm:$0xff]
    %v210 = vld [vmem:[#allocation5 + $0x530] sm:$0xff]
    %v211 = vld [vmem:[#allocation5 + $0x538] sm:$0xff]
    %v212 = vld [vmem:[#allocation5 + $0x540] sm:$0xff]
    %v213 = vld [vmem:[#allocation5 + $0x548] sm:$0xff]
    %v214 = vld [vmem:[#allocation5 + $0x550] sm:$0xff]
    %v215 = vld [vmem:[#allocation5 + $0x558] sm:$0xff]
    %v216 = vld [vmem:[#allocation5 + $0x560] sm:$0xff]
    %v217 = vld [vmem:[#allocation5 + $0x568] sm:$0xff]
    %v218 = vld [vmem:[#allocation5 + $0x570] sm:$0xff]
    %v219 = vld [vmem:[#allocation5 + $0x578] sm:$0xff]
    %v220 = vld [vmem:[#allocation5 + $0x580] sm:$0xff]
    %v221 = vld [vmem:[#allocation5 + $0x588] sm:$0xff]
    %v222 = vld [vmem:[#allocation5 + $0x590] sm:$0xff]
    %v223 = vld [vmem:[#allocation5 + $0x598] sm:$0xff]
    %v224 = vld [vmem:[#allocation5 + $0x5a0] sm:$0xff]
    %v225 = vld [vmem:[#allocation5 + $0x5a8] sm:$0xff]
    %v226 = vld [vmem:[#allocation5 + $0x5b0] sm:$0xff]
    %v227 = vld [vmem:[#allocation5 + $0x5b8] sm:$0xff]
    %v228 = vld [vmem:[#allocation5 + $0x5c0] sm:$0xff]
    %v229 = vld [vmem:[#allocation5 + $0x5c8] sm:$0xff]
    %v230 = vld [vmem:[#allocation5 + $0x5d0] sm:$0xff]
    %v231 = vld [vmem:[#allocation5 + $0x5d8] sm:$0xff]
    %v232 = vld [vmem:[#allocation5 + $0x5e0] sm:$0xff]
    %v233 = vld [vmem:[#allocation5 + $0x5e8] sm:$0xff]
    %v234 = vld [vmem:[#allocation5 + $0x5f0] sm:$0xff]
    %v235 = vld [vmem:[#allocation5 + $0x5f8] sm:$0xff]
    %v236 = vld [vmem:[#allocation5 + $0x600] sm:$0xff]
    %v237 = vld [vmem:[#allocation5 + $0x608] sm:$0xff]
    %v238 = vld [vmem:[#allocation5 + $0x610] sm:$0xff]
    %v239 = vld [vmem:[#allocation5 + $0x618] sm:$0xff]
    %v240 = vld [vmem:[#allocation5 + $0x620] sm:$0xff]
    %v241 = vld [vmem:[#allocation5 + $0x628] sm:$0xff]
    %v242 = vld [vmem:[#allocation5 + $0x630] sm:$0xff]
    %v243 = vld [vmem:[#allocation5 + $0x638] sm:$0xff]
    %v244 = vld [vmem:[#allocation5 + $0x640] sm:$0xff]
    %v245 = vld [vmem:[#allocation5 + $0x648] sm:$0xff]
    %v246 = vld [vmem:[#allocation5 + $0x650] sm:$0xff]
    %v247 = vld [vmem:[#allocation5 + $0x658] sm:$0xff]
    %v248 = vld [vmem:[#allocation5 + $0x660] sm:$0xff]
    %v249 = vld [vmem:[#allocation5 + $0x668] sm:$0xff]
    %v250 = vld [vmem:[#allocation5 + $0x670] sm:$0xff]
    %v251 = vld [vmem:[#allocation5 + $0x678] sm:$0xff]
    %v252 = vld [vmem:[#allocation5 + $0x680] sm:$0xff]
    %v253 = vld [vmem:[#allocation5 + $0x688] sm:$0xff]
    %v254 = vld [vmem:[#allocation5 + $0x690] sm:$0xff]
    %v255 = vld [vmem:[#allocation5 + $0x698] sm:$0xff]
    %v256 = vld [vmem:[#allocation5 + $0x6a0] sm:$0xff]
    %v257 = vld [vmem:[#allocation5 + $0x6a8] sm:$0xff]
    %v258 = vld [vmem:[#allocation5 + $0x6b0] sm:$0xff]
    %v259 = vld [vmem:[#allocation5 + $0x6b8] sm:$0xff]
    %v260 = vld [vmem:[#allocation5 + $0x6c0] sm:$0xff]
    %v261 = vld [vmem:[#allocation5 + $0x6c8] sm:$0xff]
    %v262 = vld [vmem:[#allocation5 + $0x6d0] sm:$0xff]
    %v263 = vld [vmem:[#allocation5 + $0x6d8] sm:$0xff]
    %v264 = vld [vmem:[#allocation5 + $0x6e0] sm:$0xff]
    %v265 = vld [vmem:[#allocation5 + $0x6e8] sm:$0xff]
    %v266 = vld [vmem:[#allocation5 + $0x6f0] sm:$0xff]
    %v267 = vld [vmem:[#allocation5 + $0x6f8] sm:$0xff]
    %v268 = vld [vmem:[#allocation5 + $0x700] sm:$0xff]
    %v269 = vld [vmem:[#allocation5 + $0x708] sm:$0xff]
    %v270 = vld [vmem:[#allocation5 + $0x710] sm:$0xff]
    %v271 = vld [vmem:[#allocation5 + $0x718] sm:$0xff]
    %v272 = vld [vmem:[#allocation5 + $0x720] sm:$0xff]
    %v273 = vld [vmem:[#allocation5 + $0x728] sm:$0xff]
    %v274 = vld [vmem:[#allocation5 + $0x730] sm:$0xff]
    %v275 = vld [vmem:[#allocation5 + $0x738] sm:$0xff]
    %v276 = vld [vmem:[#allocation5 + $0x740] sm:$0xff]
    %v277 = vld [vmem:[#allocation5 + $0x748] sm:$0xff]
    %v278 = vld [vmem:[#allocation5 + $0x750] sm:$0xff]
    %v279 = vld [vmem:[#allocation5 + $0x758] sm:$0xff]
    %v280 = vld [vmem:[#allocation5 + $0x760] sm:$0xff]
    %v281 = vld [vmem:[#allocation5 + $0x768] sm:$0xff]
    %v282 = vld [vmem:[#allocation5 + $0x770] sm:$0xff]
    %v283 = vld [vmem:[#allocation5 + $0x778] sm:$0xff]
    %v284 = vld [vmem:[#allocation5 + $0x780] sm:$0xff]
    %v285 = vld [vmem:[#allocation5 + $0x788] sm:$0xff]
    %v286 = vld [vmem:[#allocation5 + $0x790] sm:$0xff]
    %v287 = vld [vmem:[#allocation5 + $0x798] sm:$0xff]
    %v288 = vld [vmem:[#allocation5 + $0x7a0] sm:$0xff]
    %v289 = vld [vmem:[#allocation5 + $0x7a8] sm:$0xff]
    %v290 = vld [vmem:[#allocation5 + $0x7b0] sm:$0xff]
    %v291 = vld [vmem:[#allocation5 + $0x7b8] sm:$0xff]
    %v292 = vld [vmem:[#allocation5 + $0x7c0] sm:$0xff]
    %v293 = vld [vmem:[#allocation5 + $0x7c8] sm:$0xff]
    %v294 = vld [vmem:[#allocation5 + $0x7d0] sm:$0xff]
    %v295 = vld [vmem:[#allocation5 + $0x7d8] sm:$0xff]
    %v296 = vld [vmem:[#allocation5 + $0x7e0] sm:$0xff]
    %v297 = vld [vmem:[#allocation5 + $0x7e8] sm:$0xff]
    %v298 = vld [vmem:[#allocation5 + $0x7f0] sm:$0xff]
    %v299 = vld [vmem:[#allocation5 + $0x7f8] sm:$0xff]
    %v300 = vand.u32 %v164, 4294901760
    %301 = vmatpush.msra.mxu0 %v300
    %v302 = vand.u32 %v156, 4294901760
    %303 = vmatpush.msra.mxu0 %v302
    %v304 = vand.u32 %v148, 4294901760
    %305 = vmatpush.msra.mxu0 %v304
    %v306 = vand.u32 %v140, 4294901760
    %307 = vmatpush.msra.mxu0 %v306
    %v308 = vand.u32 %v132, 4294901760
    %309 = vmatpush.msra.mxu0 %v308
    %v310 = vand.u32 %v124, 4294901760
    %311 = vmatpush.msra.mxu0 %v310
    %v312 = vand.u32 %v116, 4294901760
    %313 = vmatpush.msra.mxu0 %v312
    %v314 = vand.u32 %v108, 4294901760
    %315 = vmatpush.msra.mxu0 %v314
    %v316 = vand.u32 %v100, 4294901760
    %317 = vmatpush.msra.mxu0 %v316
    %v318 = vand.u32 %v92, 4294901760
    %319 = vmatpush.msra.mxu0 %v318
    %v320 = vand.u32 %v84, 4294901760
    %321 = vmatpush.msra.mxu0 %v320
    %v322 = vand.u32 %v76, 4294901760
    %323 = vmatpush.msra.mxu0 %v322
    %v324 = vand.u32 %v68, 4294901760
    %325 = vmatpush.msra.mxu0 %v324
    %v326 = vand.u32 %v60, 4294901760
    %327 = vmatpush.msra.mxu0 %v326
    %v328 = vand.u32 %v52, 4294901760
    %329 = vmatpush.msra.mxu0 %v328
    %v330 = vand.u32 %v44, 4294901760
    %331 = vmatpush.msra.mxu0 %v330
    %v332 = vand.u32 %v42, 4294901760
    %v333 = vsub.f32 %v42, %v332
    %v334 = vand.u32 %v333, 4294901760
    %v335 = vsub.f32 %v333, %v334
    %v336 = vand.u32 %v335, 4294901760
    %337 = vmatmul.f32.gmra.mxu0 %v336
    %v338 = vpop.f32.mrf.mxu0
    %v339 = vadd.f32 0.0, %v338
    %340 = vdwg.mxu0
    %v341 = vand.u32 %v164, 4294901760
    %v342 = vsub.f32 %v164, %v341
    %v343 = vand.u32 %v342, 4294901760
    %v344 = vsub.f32 %v342, %v343
    %v345 = vand.u32 %v344, 4294901760
    %346 = vmatpush.msra.mxu0 %v345
    %v347 = vand.u32 %v156, 4294901760
    %v348 = vsub.f32 %v156, %v347
    %v349 = vand.u32 %v348, 4294901760
    %v350 = vsub.f32 %v348, %v349
    %v351 = vand.u32 %v350, 4294901760
    %352 = vmatpush.msra.mxu0 %v351
    %v353 = vand.u32 %v148, 4294901760
    %v354 = vsub.f32 %v148, %v353
    %v355 = vand.u32 %v354, 4294901760
    %v356 = vsub.f32 %v354, %v355
    %v357 = vand.u32 %v356, 4294901760
    %358 = vmatpush.msra.mxu0 %v357
    %v359 = vand.u32 %v140, 4294901760
    %v360 = vsub.f32 %v140, %v359
    %v361 = vand.u32 %v360, 4294901760
    %v362 = vsub.f32 %v360, %v361
    %v363 = vand.u32 %v362, 4294901760
    %364 = vmatpush.msra.mxu0 %v363
    %v365 = vand.u32 %v132, 4294901760
    %v366 = vsub.f32 %v132, %v365
    %v367 = vand.u32 %v366, 4294901760
    %v368 = vsub.f32 %v366, %v367
    %v369 = vand.u32 %v368, 4294901760
    %370 = vmatpush.msra.mxu0 %v369
    %v371 = vand.u32 %v124, 4294901760
    %v372 = vsub.f32 %v124, %v371
    %v373 = vand.u32 %v372, 4294901760
    %v374 = vsub.f32 %v372, %v373
    %v375 = vand.u32 %v374, 4294901760
    %376 = vmatpush.msra.mxu0 %v375
    %v377 = vand.u32 %v116, 4294901760
    %v378 = vsub.f32 %v116, %v377
    %v379 = vand.u32 %v378, 4294901760
    %v380 = vsub.f32 %v378, %v379
    %v381 = vand.u32 %v380, 4294901760
    %382 = vmatpush.msra.mxu0 %v381
    %v383 = vand.u32 %v108, 4294901760
    %v384 = vsub.f32 %v108, %v383
    %v385 = vand.u32 %v384, 4294901760
    %v386 = vsub.f32 %v384, %v385
    %v387 = vand.u32 %v386, 4294901760
    %388 = vmatpush.msra.mxu0 %v387
    %v389 = vand.u32 %v100, 4294901760
    %v390 = vsub.f32 %v100, %v389
    %v391 = vand.u32 %v390, 4294901760
    %v392 = vsub.f32 %v390, %v391
    %v393 = vand.u32 %v392, 4294901760
    %394 = vmatpush.msra.mxu0 %v393
    %v395 = vand.u32 %v92, 4294901760
    %v396 = vsub.f32 %v92, %v395
    %v397 = vand.u32 %v396, 4294901760
    %v398 = vsub.f32 %v396, %v397
    %v399 = vand.u32 %v398, 4294901760
    %400 = vmatpush.msra.mxu0 %v399
    %v401 = vand.u32 %v84, 4294901760
    %v402 = vsub.f32 %v84, %v401
    %v403 = vand.u32 %v402, 4294901760
    %v404 = vsub.f32 %v402, %v403
    %v405 = vand.u32 %v404, 4294901760
    %406 = vmatpush.msra.mxu0 %v405
    %v407 = vand.u32 %v76, 4294901760
    %v408 = vsub.f32 %v76, %v407
    %v409 = vand.u32 %v408, 4294901760
    %v410 = vsub.f32 %v408, %v409
    %v411 = vand.u32 %v410, 4294901760
    %412 = vmatpush.msra.mxu0 %v411
    %v413 = vand.u32 %v68, 4294901760
    %v414 = vsub.f32 %v68, %v413
    %v415 = vand.u32 %v414, 4294901760
    %v416 = vsub.f32 %v414, %v415
    %v417 = vand.u32 %v416, 4294901760
    %418 = vmatpush.msra.mxu0 %v417
    %v419 = vand.u32 %v60, 4294901760
    %v420 = vsub.f32 %v60, %v419
    %v421 = vand.u32 %v420, 4294901760
    %v422 = vsub.f32 %v420, %v421
    %v423 = vand.u32 %v422, 4294901760
    %424 = vmatpush.msra.mxu0 %v423
    %v425 = vand.u32 %v52, 4294901760
    %v426 = vsub.f32 %v52, %v425
    %v427 = vand.u32 %v426, 4294901760
    %v428 = vsub.f32 %v426, %v427
    %v429 = vand.u32 %v428, 4294901760
    %430 = vmatpush.msra.mxu0 %v429
    %v431 = vand.u32 %v44, 4294901760
    %v432 = vsub.f32 %v44, %v431
    %v433 = vand.u32 %v432, 4294901760
    %v434 = vsub.f32 %v432, %v433
    %v435 = vand.u32 %v434, 4294901760
    %436 = vmatpush.msra.mxu0 %v435
    %v437 = vand.u32 %v42, 4294901760
    %438 = vmatmul.f32.gmra.mxu0 %v437
    %v439 = vpop.f32.mrf.mxu0
    %v440 = vadd.f32 %v339, %v439
    %441 = vdwg.mxu0
    %v442 = vand.u32 %v164, 4294901760
    %v443 = vsub.f32 %v164, %v442
    %444 = vmatpush.msra.mxu0 %v443
    %v445 = vand.u32 %v156, 4294901760
    %v446 = vsub.f32 %v156, %v445
    %447 = vmatpush.msra.mxu0 %v446
    %v448 = vand.u32 %v148, 4294901760
    %v449 = vsub.f32 %v148, %v448
    %450 = vmatpush.msra.mxu0 %v449
    %v451 = vand.u32 %v140, 4294901760
    %v452 = vsub.f32 %v140, %v451
    %453 = vmatpush.msra.mxu0 %v452
    %v454 = vand.u32 %v132, 4294901760
    %v455 = vsub.f32 %v132, %v454
    %456 = vmatpush.msra.mxu0 %v455
    %v457 = vand.u32 %v124, 4294901760
    %v458 = vsub.f32 %v124, %v457
    %459 = vmatpush.msra.mxu0 %v458
    %v460 = vand.u32 %v116, 4294901760
    %v461 = vsub.f32 %v116, %v460
    %462 = vmatpush.msra.mxu0 %v461
    %v463 = vand.u32 %v108, 4294901760
    %v464 = vsub.f32 %v108, %v463
    %465 = vmatpush.msra.mxu0 %v464
    %v466 = vand.u32 %v100, 4294901760
    %v467 = vsub.f32 %v100, %v466
    %468 = vmatpush.msra.mxu0 %v467
    %v469 = vand.u32 %v92, 4294901760
    %v470 = vsub.f32 %v92, %v469
    %471 = vmatpush.msra.mxu0 %v470
    %v472 = vand.u32 %v84, 4294901760
    %v473 = vsub.f32 %v84, %v472
    %474 = vmatpush.msra.mxu0 %v473
    %v475 = vand.u32 %v76, 4294901760
    %v476 = vsub.f32 %v76, %v475
    %477 = vmatpush.msra.mxu0 %v476
    %v478 = vand.u32 %v68, 4294901760
    %v479 = vsub.f32 %v68, %v478
    %480 = vmatpush.msra.mxu0 %v479
    %v481 = vand.u32 %v60, 4294901760
    %v482 = vsub.f32 %v60, %v481
    %483 = vmatpush.msra.mxu0 %v482
    %v484 = vand.u32 %v52, 4294901760
    %v485 = vsub.f32 %v52, %v484
    %486 = vmatpush.msra.mxu0 %v485
    %v487 = vand.u32 %v44, 4294901760
    %v488 = vsub.f32 %v44, %v487
    %489 = vmatpush.msra.mxu0 %v488
    %v490 = vand.u32 %v42, 4294901760
    %v491 = vsub.f32 %v42, %v490
    %492 = vmatmul.f32.gmra.mxu0 %v491
    %v493 = vpop.f32.mrf.mxu0
    %v494 = vadd.f32 %v440, %v493
    %495 = vdwg.mxu0
    %v496 = vand.u32 %v164, 4294901760
    %497 = vmatpush.msra.mxu0 %v496
    %v498 = vand.u32 %v156, 4294901760
    %499 = vmatpush.msra.mxu0 %v498
    %v500 = vand.u32 %v148, 4294901760
    %501 = vmatpush.msra.mxu0 %v500
    %v502 = vand.u32 %v140, 4294901760
    %503 = vmatpush.msra.mxu0 %v502
    %v504 = vand.u32 %v132, 4294901760
    %505 = vmatpush.msra.mxu0 %v504
    %v506 = vand.u32 %v124, 4294901760
    %507 = vmatpush.msra.mxu0 %v506
    %v508 = vand.u32 %v116, 4294901760
    %509 = vmatpush.msra.mxu0 %v508
    %v510 = vand.u32 %v108, 4294901760
    %511 = vmatpush.msra.mxu0 %v510
    %v512 = vand.u32 %v100, 4294901760
    %513 = vmatpush.msra.mxu0 %v512
    %v514 = vand.u32 %v92, 4294901760
    %515 = vmatpush.msra.mxu0 %v514
    %v516 = vand.u32 %v84, 4294901760
    %517 = vmatpush.msra.mxu0 %v516
    %v518 = vand.u32 %v76, 4294901760
    %519 = vmatpush.msra.mxu0 %v518
    %v520 = vand.u32 %v68, 4294901760
    %521 = vmatpush.msra.mxu0 %v520
    %v522 = vand.u32 %v60, 4294901760
    %523 = vmatpush.msra.mxu0 %v522
    %v524 = vand.u32 %v52, 4294901760
    %525 = vmatpush.msra.mxu0 %v524
    %v526 = vand.u32 %v44, 4294901760
    %527 = vmatpush.msra.mxu0 %v526
    %v528 = vand.u32 %v42, 4294901760
    %v529 = vsub.f32 %v42, %v528
    %v530 = vand.u32 %v529, 4294901760
    %531 = vmatmul.f32.gmra.mxu0 %v530
    %v532 = vpop.f32.mrf.mxu0
    %v533 = vadd.f32 %v494, %v532
    %534 = vdwg.mxu0
    %v535 = vand.u32 %v164, 4294901760
    %v536 = vsub.f32 %v164, %v535
    %v537 = vand.u32 %v536, 4294901760
    %538 = vmatpush.msra.mxu0 %v537
    %v539 = vand.u32 %v156, 4294901760
    %v540 = vsub.f32 %v156, %v539
    %v541 = vand.u32 %v540, 4294901760
    %542 = vmatpush.msra.mxu0 %v541
    %v543 = vand.u32 %v148, 4294901760
    %v544 = vsub.f32 %v148, %v543
    %v545 = vand.u32 %v544, 4294901760
    %546 = vmatpush.msra.mxu0 %v545
    %v547 = vand.u32 %v140, 4294901760
    %v548 = vsub.f32 %v140, %v547
    %v549 = vand.u32 %v548, 4294901760
    %550 = vmatpush.msra.mxu0 %v549
    %v551 = vand.u32 %v132, 4294901760
    %v552 = vsub.f32 %v132, %v551
    %v553 = vand.u32 %v552, 4294901760
    %554 = vmatpush.msra.mxu0 %v553
    %v555 = vand.u32 %v124, 4294901760
    %v556 = vsub.f32 %v124, %v555
    %v557 = vand.u32 %v556, 4294901760
    %558 = vmatpush.msra.mxu0 %v557
    %v559 = vand.u32 %v116, 4294901760
    %v560 = vsub.f32 %v116, %v559
    %v561 = vand.u32 %v560, 4294901760
    %562 = vmatpush.msra.mxu0 %v561
    %v563 = vand.u32 %v108, 4294901760
    %v564 = vsub.f32 %v108, %v563
    %v565 = vand.u32 %v564, 4294901760
    %566 = vmatpush.msra.mxu0 %v565
    %v567 = vand.u32 %v100, 4294901760
    %v568 = vsub.f32 %v100, %v567
    %v569 = vand.u32 %v568, 4294901760
    %570 = vmatpush.msra.mxu0 %v569
    %v571 = vand.u32 %v92, 4294901760
    %v572 = vsub.f32 %v92, %v571
    %v573 = vand.u32 %v572, 4294901760
    %574 = vmatpush.msra.mxu0 %v573
    %v575 = vand.u32 %v84, 4294901760
    %v576 = vsub.f32 %v84, %v575
    %v577 = vand.u32 %v576, 4294901760
    %578 = vmatpush.msra.mxu0 %v577
    %v579 = vand.u32 %v76, 4294901760
    %v580 = vsub.f32 %v76, %v579
    %v581 = vand.u32 %v580, 4294901760
    %582 = vmatpush.msra.mxu0 %v581
    %v583 = vand.u32 %v68, 4294901760
    %v584 = vsub.f32 %v68, %v583
    %v585 = vand.u32 %v584, 4294901760
    %586 = vmatpush.msra.mxu0 %v585
    %v587 = vand.u32 %v60, 4294901760
    %v588 = vsub.f32 %v60, %v587
    %v589 = vand.u32 %v588, 4294901760
    %590 = vmatpush.msra.mxu0 %v589
    %v591 = vand.u32 %v52, 4294901760
    %v592 = vsub.f32 %v52, %v591
    %v593 = vand.u32 %v592, 4294901760
    %594 = vmatpush.msra.mxu0 %v593
    %v595 = vand.u32 %v44, 4294901760
    %v596 = vsub.f32 %v44, %v595
    %v597 = vand.u32 %v596, 4294901760
    %598 = vmatpush.msra.mxu0 %v597
    %v599 = vand.u32 %v42, 4294901760
    %600 = vmatmul.f32.gmra.mxu0 %v599
    %v601 = vpop.f32.mrf.mxu0
    %v602 = vadd.f32 %v533, %v601
    %603 = vdwg.mxu0
    %v604 = vand.u32 %v164, 4294901760
    %605 = vmatpush.msra.mxu0 %v604
    %v606 = vand.u32 %v156, 4294901760
    %607 = vmatpush.msra.mxu0 %v606
    %v608 = vand.u32 %v148, 4294901760
    %609 = vmatpush.msra.mxu0 %v608
    %v610 = vand.u32 %v140, 4294901760
    %611 = vmatpush.msra.mxu0 %v610
    %v612 = vand.u32 %v132, 4294901760
    %613 = vmatpush.msra.mxu0 %v612
    %v614 = vand.u32 %v124, 4294901760
    %615 = vmatpush.msra.mxu0 %v614
    %v616 = vand.u32 %v116, 4294901760
    %617 = vmatpush.msra.mxu0 %v616
    %v618 = vand.u32 %v108, 4294901760
    %619 = vmatpush.msra.mxu0 %v618
    %v620 = vand.u32 %v100, 4294901760
    %621 = vmatpush.msra.mxu0 %v620
    %v622 = vand.u32 %v92, 4294901760
    %623 = vmatpush.msra.mxu0 %v622
    %v624 = vand.u32 %v84, 4294901760
    %625 = vmatpush.msra.mxu0 %v624
    %v626 = vand.u32 %v76, 4294901760
    %627 = vmatpush.msra.mxu0 %v626
    %v628 = vand.u32 %v68, 4294901760
    %629 = vmatpush.msra.mxu0 %v628
    %v630 = vand.u32 %v60, 4294901760
    %631 = vmatpush.msra.mxu0 %v630
    %v632 = vand.u32 %v52, 4294901760
    %633 = vmatpush.msra.mxu0 %v632
    %v634 = vand.u32 %v44, 4294901760
    %635 = vmatpush.msra.mxu0 %v634
    %v636 = vand.u32 %v42, 4294901760
    %637 = vmatmul.f32.gmra.mxu0 %v636
    %v638 = vpop.f32.mrf.mxu0
    %v639 = vadd.f32 %v602, %v638
    %640 = vdwg.mxu0
    %v641 = vand.u32 %v292, 4294901760
    %642 = vmatpush.msra.mxu0 %v641
    %v643 = vand.u32 %v284, 4294901760
    %644 = vmatpush.msra.mxu0 %v643
    %v645 = vand.u32 %v276, 4294901760
    %646 = vmatpush.msra.mxu0 %v645
    %v647 = vand.u32 %v268, 4294901760
    %648 = vmatpush.msra.mxu0 %v647
    %v649 = vand.u32 %v260, 4294901760
    %650 = vmatpush.msra.mxu0 %v649
    %v651 = vand.u32 %v252, 4294901760
    %652 = vmatpush.msra.mxu0 %v651
    %v653 = vand.u32 %v244, 4294901760
    %654 = vmatpush.msra.mxu0 %v653
    %v655 = vand.u32 %v236, 4294901760
    %656 = vmatpush.msra.mxu0 %v655
    %v657 = vand.u32 %v228, 4294901760
    %658 = vmatpush.msra.mxu0 %v657
    %v659 = vand.u32 %v220, 4294901760
    %660 = vmatpush.msra.mxu0 %v659
    %v661 = vand.u32 %v212, 4294901760
    %662 = vmatpush.msra.mxu0 %v661
    %v663 = vand.u32 %v204, 4294901760
    %664 = vmatpush.msra.mxu0 %v663
    %v665 = vand.u32 %v196, 4294901760
    %666 = vmatpush.msra.mxu0 %v665
    %v667 = vand.u32 %v188, 4294901760
    %668 = vmatpush.msra.mxu0 %v667
    %v669 = vand.u32 %v180, 4294901760
    %670 = vmatpush.msra.mxu0 %v669
    %v671 = vand.u32 %v172, 4294901760
    %672 = vmatpush.msra.mxu0 %v671
    %v673 = vand.u32 %v43, 4294901760
    %v674 = vsub.f32 %v43, %v673
    %v675 = vand.u32 %v674, 4294901760
    %v676 = vsub.f32 %v674, %v675
    %v677 = vand.u32 %v676, 4294901760
    %678 = vmatmul.f32.gmra.mxu0 %v677
    %v679 = vpop.f32.mrf.mxu0
    %v680 = vadd.f32 %v639, %v679
    %681 = vdwg.mxu0
    %v682 = vand.u32 %v292, 4294901760
    %v683 = vsub.f32 %v292, %v682
    %v684 = vand.u32 %v683, 4294901760
    %v685 = vsub.f32 %v683, %v684
    %v686 = vand.u32 %v685, 4294901760
    %687 = vmatpush.msra.mxu0 %v686
    %v688 = vand.u32 %v284, 4294901760
    %v689 = vsub.f32 %v284, %v688
    %v690 = vand.u32 %v689, 4294901760
    %v691 = vsub.f32 %v689, %v690
    %v692 = vand.u32 %v691, 4294901760
    %693 = vmatpush.msra.mxu0 %v692
    %v694 = vand.u32 %v276, 4294901760
    %v695 = vsub.f32 %v276, %v694
    %v696 = vand.u32 %v695, 4294901760
    %v697 = vsub.f32 %v695, %v696
    %v698 = vand.u32 %v697, 4294901760
    %699 = vmatpush.msra.mxu0 %v698
    %v700 = vand.u32 %v268, 4294901760
    %v701 = vsub.f32 %v268, %v700
    %v702 = vand.u32 %v701, 4294901760
    %v703 = vsub.f32 %v701, %v702
    %v704 = vand.u32 %v703, 4294901760
    %705 = vmatpush.msra.mxu0 %v704
    %v706 = vand.u32 %v260, 4294901760
    %v707 = vsub.f32 %v260, %v706
    %v708 = vand.u32 %v707, 4294901760
    %v709 = vsub.f32 %v707, %v708
    %v710 = vand.u32 %v709, 4294901760
    %711 = vmatpush.msra.mxu0 %v710
    %v712 = vand.u32 %v252, 4294901760
    %v713 = vsub.f32 %v252, %v712
    %v714 = vand.u32 %v713, 4294901760
    %v715 = vsub.f32 %v713, %v714
    %v716 = vand.u32 %v715, 4294901760
    %717 = vmatpush.msra.mxu0 %v716
    %v718 = vand.u32 %v244, 4294901760
    %v719 = vsub.f32 %v244, %v718
    %v720 = vand.u32 %v719, 4294901760
    %v721 = vsub.f32 %v719, %v720
    %v722 = vand.u32 %v721, 4294901760
    %723 = vmatpush.msra.mxu0 %v722
    %v724 = vand.u32 %v236, 4294901760
    %v725 = vsub.f32 %v236, %v724
    %v726 = vand.u32 %v725, 4294901760
    %v727 = vsub.f32 %v725, %v726
    %v728 = vand.u32 %v727, 4294901760
    %729 = vmatpush.msra.mxu0 %v728
    %v730 = vand.u32 %v228, 4294901760
    %v731 = vsub.f32 %v228, %v730
    %v732 = vand.u32 %v731, 4294901760
    %v733 = vsub.f32 %v731, %v732
    %v734 = vand.u32 %v733, 4294901760
    %735 = vmatpush.msra.mxu0 %v734
    %v736 = vand.u32 %v220, 4294901760
    %v737 = vsub.f32 %v220, %v736
    %v738 = vand.u32 %v737, 4294901760
    %v739 = vsub.f32 %v737, %v738
    %v740 = vand.u32 %v739, 4294901760
    %741 = vmatpush.msra.mxu0 %v740
    %v742 = vand.u32 %v212, 4294901760
    %v743 = vsub.f32 %v212, %v742
    %v744 = vand.u32 %v743, 4294901760
    %v745 = vsub.f32 %v743, %v744
    %v746 = vand.u32 %v745, 4294901760
    %747 = vmatpush.msra.mxu0 %v746
    %v748 = vand.u32 %v204, 4294901760
    %v749 = vsub.f32 %v204, %v748
    %v750 = vand.u32 %v749, 4294901760
    %v751 = vsub.f32 %v749, %v750
    %v752 = vand.u32 %v751, 4294901760
    %753 = vmatpush.msra.mxu0 %v752
    %v754 = vand.u32 %v196, 4294901760
    %v755 = vsub.f32 %v196, %v754
    %v756 = vand.u32 %v755, 4294901760
    %v757 = vsub.f32 %v755, %v756
    %v758 = vand.u32 %v757, 4294901760
    %759 = vmatpush.msra.mxu0 %v758
    %v760 = vand.u32 %v188, 4294901760
    %v761 = vsub.f32 %v188, %v760
    %v762 = vand.u32 %v761, 4294901760
    %v763 = vsub.f32 %v761, %v762
    %v764 = vand.u32 %v763, 4294901760
    %765 = vmatpush.msra.mxu0 %v764
    %v766 = vand.u32 %v180, 4294901760
    %v767 = vsub.f32 %v180, %v766
    %v768 = vand.u32 %v767, 4294901760
    %v769 = vsub.f32 %v767, %v768
    %v770 = vand.u32 %v769, 4294901760
    %771 = vmatpush.msra.mxu0 %v770
    %v772 = vand.u32 %v172, 4294901760
    %v773 = vsub.f32 %v172, %v772
    %v774 = vand.u32 %v773, 4294901760
    %v775 = vsub.f32 %v773, %v774
    %v776 = vand.u32 %v775, 4294901760
    %777 = vmatpush.msra.mxu0 %v776
    %v778 = vand.u32 %v43, 4294901760
    %779 = vmatmul.f32.gmra.mxu0 %v778
    %v780 = vpop.f32.mrf.mxu0
    %v781 = vadd.f32 %v680, %v780
    %782 = vdwg.mxu0
    %v783 = vand.u32 %v292, 4294901760
    %v784 = vsub.f32 %v292, %v783
    %785 = vmatpush.msra.mxu0 %v784
    %v786 = vand.u32 %v284, 4294901760
    %v787 = vsub.f32 %v284, %v786
    %788 = vmatpush.msra.mxu0 %v787
    %v789 = vand.u32 %v276, 4294901760
    %v790 = vsub.f32 %v276, %v789
    %791 = vmatpush.msra.mxu0 %v790
    %v792 = vand.u32 %v268, 4294901760
    %v793 = vsub.f32 %v268, %v792
    %794 = vmatpush.msra.mxu0 %v793
    %v795 = vand.u32 %v260, 4294901760
    %v796 = vsub.f32 %v260, %v795
    %797 = vmatpush.msra.mxu0 %v796
    %v798 = vand.u32 %v252, 4294901760
    %v799 = vsub.f32 %v252, %v798
    %800 = vmatpush.msra.mxu0 %v799
    %v801 = vand.u32 %v244, 4294901760
    %v802 = vsub.f32 %v244, %v801
    %803 = vmatpush.msra.mxu0 %v802
    %v804 = vand.u32 %v236, 4294901760
    %v805 = vsub.f32 %v236, %v804
    %806 = vmatpush.msra.mxu0 %v805
    %v807 = vand.u32 %v228, 4294901760
    %v808 = vsub.f32 %v228, %v807
    %809 = vmatpush.msra.mxu0 %v808
    %v810 = vand.u32 %v220, 4294901760
    %v811 = vsub.f32 %v220, %v810
    %812 = vmatpush.msra.mxu0 %v811
    %v813 = vand.u32 %v212, 4294901760
    %v814 = vsub.f32 %v212, %v813
    %815 = vmatpush.msra.mxu0 %v814
    %v816 = vand.u32 %v204, 4294901760
    %v817 = vsub.f32 %v204, %v816
    %818 = vmatpush.msra.mxu0 %v817
    %v819 = vand.u32 %v196, 4294901760
    %v820 = vsub.f32 %v196, %v819
    %821 = vmatpush.msra.mxu0 %v820
    %v822 = vand.u32 %v188, 4294901760
    %v823 = vsub.f32 %v188, %v822
    %824 = vmatpush.msra.mxu0 %v823
    %v825 = vand.u32 %v180, 4294901760
    %v826 = vsub.f32 %v180, %v825
    %827 = vmatpush.msra.mxu0 %v826
    %v828 = vand.u32 %v172, 4294901760
    %v829 = vsub.f32 %v172, %v828
    %830 = vmatpush.msra.mxu0 %v829
    %v831 = vand.u32 %v43, 4294901760
    %v832 = vsub.f32 %v43, %v831
    %833 = vmatmul.f32.gmra.mxu0 %v832
    %v834 = vpop.f32.mrf.mxu0
    %v835 = vadd.f32 %v781, %v834
    %836 = vdwg.mxu0
    %v837 = vand.u32 %v292, 4294901760
    %838 = vmatpush.msra.mxu0 %v837
    %v839 = vand.u32 %v284, 4294901760
    %840 = vmatpush.msra.mxu0 %v839
    %v841 = vand.u32 %v276, 4294901760
    %842 = vmatpush.msra.mxu0 %v841
    %v843 = vand.u32 %v268, 4294901760
    %844 = vmatpush.msra.mxu0 %v843
    %v845 = vand.u32 %v260, 4294901760
    %846 = vmatpush.msra.mxu0 %v845
    %v847 = vand.u32 %v252, 4294901760
    %848 = vmatpush.msra.mxu0 %v847
    %v849 = vand.u32 %v244, 4294901760
    %850 = vmatpush.msra.mxu0 %v849
    %v851 = vand.u32 %v236, 4294901760
    %852 = vmatpush.msra.mxu0 %v851
    %v853 = vand.u32 %v228, 4294901760
    %854 = vmatpush.msra.mxu0 %v853
    %v855 = vand.u32 %v220, 4294901760
    %856 = vmatpush.msra.mxu0 %v855
    %v857 = vand.u32 %v212, 4294901760
    %858 = vmatpush.msra.mxu0 %v857
    %v859 = vand.u32 %v204, 4294901760
    %860 = vmatpush.msra.mxu0 %v859
    %v861 = vand.u32 %v196, 4294901760
    %862 = vmatpush.msra.mxu0 %v861
    %v863 = vand.u32 %v188, 4294901760
    %864 = vmatpush.msra.mxu0 %v863
    %v865 = vand.u32 %v180, 4294901760
    %866 = vmatpush.msra.mxu0 %v865
    %v867 = vand.u32 %v172, 4294901760
    %868 = vmatpush.msra.mxu0 %v867
    %v869 = vand.u32 %v43, 4294901760
    %v870 = vsub.f32 %v43, %v869
    %v871 = vand.u32 %v870, 4294901760
    %872 = vmatmul.f32.gmra.mxu0 %v871
    %v873 = vpop.f32.mrf.mxu0
    %v874 = vadd.f32 %v835, %v873
    %875 = vdwg.mxu0
    %v876 = vand.u32 %v292, 4294901760
    %v877 = vsub.f32 %v292, %v876
    %v878 = vand.u32 %v877, 4294901760
    %879 = vmatpush.msra.mxu0 %v878
    %v880 = vand.u32 %v284, 4294901760
    %v881 = vsub.f32 %v284, %v880
    %v882 = vand.u32 %v881, 4294901760
    %883 = vmatpush.msra.mxu0 %v882
    %v884 = vand.u32 %v276, 4294901760
    %v885 = vsub.f32 %v276, %v884
    %v886 = vand.u32 %v885, 4294901760
    %887 = vmatpush.msra.mxu0 %v886
    %v888 = vand.u32 %v268, 4294901760
    %v889 = vsub.f32 %v268, %v888
    %v890 = vand.u32 %v889, 4294901760
    %891 = vmatpush.msra.mxu0 %v890
    %v892 = vand.u32 %v260, 4294901760
    %v893 = vsub.f32 %v260, %v892
    %v894 = vand.u32 %v893, 4294901760
    %895 = vmatpush.msra.mxu0 %v894
    %v896 = vand.u32 %v252, 4294901760
    %v897 = vsub.f32 %v252, %v896
    %v898 = vand.u32 %v897, 4294901760
    %899 = vmatpush.msra.mxu0 %v898
    %v900 = vand.u32 %v244, 4294901760
    %v901 = vsub.f32 %v244, %v900
    %v902 = vand.u32 %v901, 4294901760
    %903 = vmatpush.msra.mxu0 %v902
    %v904 = vand.u32 %v236, 4294901760
    %v905 = vsub.f32 %v236, %v904
    %v906 = vand.u32 %v905, 4294901760
    %907 = vmatpush.msra.mxu0 %v906
    %v908 = vand.u32 %v228, 4294901760
    %v909 = vsub.f32 %v228, %v908
    %v910 = vand.u32 %v909, 4294901760
    %911 = vmatpush.msra.mxu0 %v910
    %v912 = vand.u32 %v220, 4294901760
    %v913 = vsub.f32 %v220, %v912
    %v914 = vand.u32 %v913, 4294901760
    %915 = vmatpush.msra.mxu0 %v914
    %v916 = vand.u32 %v212, 4294901760
    %v917 = vsub.f32 %v212, %v916
    %v918 = vand.u32 %v917, 4294901760
    %919 = vmatpush.msra.mxu0 %v918
    %v920 = vand.u32 %v204, 4294901760
    %v921 = vsub.f32 %v204, %v920
    %v922 = vand.u32 %v921, 4294901760
    %923 = vmatpush.msra.mxu0 %v922
    %v924 = vand.u32 %v196, 4294901760
    %v925 = vsub.f32 %v196, %v924
    %v926 = vand.u32 %v925, 4294901760
    %927 = vmatpush.msra.mxu0 %v926
    %v928 = vand.u32 %v188, 4294901760
    %v929 = vsub.f32 %v188, %v928
    %v930 = vand.u32 %v929, 4294901760
    %931 = vmatpush.msra.mxu0 %v930
    %v932 = vand.u32 %v180, 4294901760
    %v933 = vsub.f32 %v180, %v932
    %v934 = vand.u32 %v933, 4294901760
    %935 = vmatpush.msra.mxu0 %v934
    %v936 = vand.u32 %v172, 4294901760
    %v937 = vsub.f32 %v172, %v936
    %v938 = vand.u32 %v937, 4294901760
    %939 = vmatpush.msra.mxu0 %v938
    %v940 = vand.u32 %v43, 4294901760
    %941 = vmatmul.f32.gmra.mxu0 %v940
    %v942 = vpop.f32.mrf.mxu0
    %v943 = vadd.f32 %v874, %v942
    %944 = vdwg.mxu0
    %v945 = vand.u32 %v292, 4294901760
    %946 = vmatpush.msra.mxu0 %v945
    %v947 = vand.u32 %v284, 4294901760
    %948 = vmatpush.msra.mxu0 %v947
    %v949 = vand.u32 %v276, 4294901760
    %950 = vmatpush.msra.mxu0 %v949
    %v951 = vand.u32 %v268, 4294901760
    %952 = vmatpush.msra.mxu0 %v951
    %v953 = vand.u32 %v260, 4294901760
    %954 = vmatpush.msra.mxu0 %v953
    %v955 = vand.u32 %v252, 4294901760
    %956 = vmatpush.msra.mxu0 %v955
    %v957 = vand.u32 %v244, 4294901760
    %958 = vmatpush.msra.mxu0 %v957
    %v959 = vand.u32 %v236, 4294901760
    %960 = vmatpush.msra.mxu0 %v959
    %v961 = vand.u32 %v228, 4294901760
    %962 = vmatpush.msra.mxu0 %v961
    %v963 = vand.u32 %v220, 4294901760
    %964 = vmatpush.msra.mxu0 %v963
    %v965 = vand.u32 %v212, 4294901760
    %966 = vmatpush.msra.mxu0 %v965
    %v967 = vand.u32 %v204, 4294901760
    %968 = vmatpush.msra.mxu0 %v967
    %v969 = vand.u32 %v196, 4294901760
    %970 = vmatpush.msra.mxu0 %v969
    %v971 = vand.u32 %v188, 4294901760
    %972 = vmatpush.msra.mxu0 %v971
    %v973 = vand.u32 %v180, 4294901760
    %974 = vmatpush.msra.mxu0 %v973
    %v975 = vand.u32 %v172, 4294901760
    %976 = vmatpush.msra.mxu0 %v975
    %v977 = vand.u32 %v43, 4294901760
    %978 = vmatmul.f32.gmra.mxu0 %v977
    %v979 = vpop.f32.mrf.mxu0
    %v980 = vadd.f32 %v943, %v979
    %981 = vdwg.mxu0
    %v982 = vand.u32 %v165, 4294901760
    %983 = vmatpush.msra.mxu0 %v982
    %v984 = vand.u32 %v157, 4294901760
    %985 = vmatpush.msra.mxu0 %v984
    %v986 = vand.u32 %v149, 4294901760
    %987 = vmatpush.msra.mxu0 %v986
    %v988 = vand.u32 %v141, 4294901760
    %989 = vmatpush.msra.mxu0 %v988
    %v990 = vand.u32 %v133, 4294901760
    %991 = vmatpush.msra.mxu0 %v990
    %v992 = vand.u32 %v125, 4294901760
    %993 = vmatpush.msra.mxu0 %v992
    %v994 = vand.u32 %v117, 4294901760
    %995 = vmatpush.msra.mxu0 %v994
    %v996 = vand.u32 %v109, 4294901760
    %997 = vmatpush.msra.mxu0 %v996
    %v998 = vand.u32 %v101, 4294901760
    %999 = vmatpush.msra.mxu0 %v998
    %v1000 = vand.u32 %v93, 4294901760
    %1001 = vmatpush.msra.mxu0 %v1000
    %v1002 = vand.u32 %v85, 4294901760
    %1003 = vmatpush.msra.mxu0 %v1002
    %v1004 = vand.u32 %v77, 4294901760
    %1005 = vmatpush.msra.mxu0 %v1004
    %v1006 = vand.u32 %v69, 4294901760
    %1007 = vmatpush.msra.mxu0 %v1006
    %v1008 = vand.u32 %v61, 4294901760
    %1009 = vmatpush.msra.mxu0 %v1008
    %v1010 = vand.u32 %v53, 4294901760
    %1011 = vmatpush.msra.mxu0 %v1010
    %v1012 = vand.u32 %v45, 4294901760
    %1013 = vmatpush.msra.mxu0 %v1012
    %v1014 = vand.u32 %v42, 4294901760
    %v1015 = vsub.f32 %v42, %v1014
    %v1016 = vand.u32 %v1015, 4294901760
    %v1017 = vsub.f32 %v1015, %v1016
    %v1018 = vand.u32 %v1017, 4294901760
    %1019 = vmatmul.f32.gmra.mxu0 %v1018
    %v1020 = vpop.f32.mrf.mxu0
    %v1021 = vadd.f32 0.0, %v1020
    %1022 = vdwg.mxu0
    %v1023 = vand.u32 %v165, 4294901760
    %v1024 = vsub.f32 %v165, %v1023
    %v1025 = vand.u32 %v1024, 4294901760
    %v1026 = vsub.f32 %v1024, %v1025
    %v1027 = vand.u32 %v1026, 4294901760
    %1028 = vmatpush.msra.mxu0 %v1027
    %v1029 = vand.u32 %v157, 4294901760
    %v1030 = vsub.f32 %v157, %v1029
    %v1031 = vand.u32 %v1030, 4294901760
    %v1032 = vsub.f32 %v1030, %v1031
    %v1033 = vand.u32 %v1032, 4294901760
    %1034 = vmatpush.msra.mxu0 %v1033
    %v1035 = vand.u32 %v149, 4294901760
    %v1036 = vsub.f32 %v149, %v1035
    %v1037 = vand.u32 %v1036, 4294901760
    %v1038 = vsub.f32 %v1036, %v1037
    %v1039 = vand.u32 %v1038, 4294901760
    %1040 = vmatpush.msra.mxu0 %v1039
    %v1041 = vand.u32 %v141, 4294901760
    %v1042 = vsub.f32 %v141, %v1041
    %v1043 = vand.u32 %v1042, 4294901760
    %v1044 = vsub.f32 %v1042, %v1043
    %v1045 = vand.u32 %v1044, 4294901760
    %1046 = vmatpush.msra.mxu0 %v1045
    %v1047 = vand.u32 %v133, 4294901760
    %v1048 = vsub.f32 %v133, %v1047
    %v1049 = vand.u32 %v1048, 4294901760
    %v1050 = vsub.f32 %v1048, %v1049
    %v1051 = vand.u32 %v1050, 4294901760
    %1052 = vmatpush.msra.mxu0 %v1051
    %v1053 = vand.u32 %v125, 4294901760
    %v1054 = vsub.f32 %v125, %v1053
    %v1055 = vand.u32 %v1054, 4294901760
    %v1056 = vsub.f32 %v1054, %v1055
    %v1057 = vand.u32 %v1056, 4294901760
    %1058 = vmatpush.msra.mxu0 %v1057
    %v1059 = vand.u32 %v117, 4294901760
    %v1060 = vsub.f32 %v117, %v1059
    %v1061 = vand.u32 %v1060, 4294901760
    %v1062 = vsub.f32 %v1060, %v1061
    %v1063 = vand.u32 %v1062, 4294901760
    %1064 = vmatpush.msra.mxu0 %v1063
    %v1065 = vand.u32 %v109, 4294901760
    %v1066 = vsub.f32 %v109, %v1065
    %v1067 = vand.u32 %v1066, 4294901760
    %v1068 = vsub.f32 %v1066, %v1067
    %v1069 = vand.u32 %v1068, 4294901760
    %1070 = vmatpush.msra.mxu0 %v1069
    %v1071 = vand.u32 %v101, 4294901760
    %v1072 = vsub.f32 %v101, %v1071
    %v1073 = vand.u32 %v1072, 4294901760
    %v1074 = vsub.f32 %v1072, %v1073
    %v1075 = vand.u32 %v1074, 4294901760
    %1076 = vmatpush.msra.mxu0 %v1075
    %v1077 = vand.u32 %v93, 4294901760
    %v1078 = vsub.f32 %v93, %v1077
    %v1079 = vand.u32 %v1078, 4294901760
    %v1080 = vsub.f32 %v1078, %v1079
    %v1081 = vand.u32 %v1080, 4294901760
    %1082 = vmatpush.msra.mxu0 %v1081
    %v1083 = vand.u32 %v85, 4294901760
    %v1084 = vsub.f32 %v85, %v1083
    %v1085 = vand.u32 %v1084, 4294901760
    %v1086 = vsub.f32 %v1084, %v1085
    %v1087 = vand.u32 %v1086, 4294901760
    %1088 = vmatpush.msra.mxu0 %v1087
    %v1089 = vand.u32 %v77, 4294901760
    %v1090 = vsub.f32 %v77, %v1089
    %v1091 = vand.u32 %v1090, 4294901760
    %v1092 = vsub.f32 %v1090, %v1091
    %v1093 = vand.u32 %v1092, 4294901760
    %1094 = vmatpush.msra.mxu0 %v1093
    %v1095 = vand.u32 %v69, 4294901760
    %v1096 = vsub.f32 %v69, %v1095
    %v1097 = vand.u32 %v1096, 4294901760
    %v1098 = vsub.f32 %v1096, %v1097
    %v1099 = vand.u32 %v1098, 4294901760
    %1100 = vmatpush.msra.mxu0 %v1099
    %v1101 = vand.u32 %v61, 4294901760
    %v1102 = vsub.f32 %v61, %v1101
    %v1103 = vand.u32 %v1102, 4294901760
    %v1104 = vsub.f32 %v1102, %v1103
    %v1105 = vand.u32 %v1104, 4294901760
    %1106 = vmatpush.msra.mxu0 %v1105
    %v1107 = vand.u32 %v53, 4294901760
    %v1108 = vsub.f32 %v53, %v1107
    %v1109 = vand.u32 %v1108, 4294901760
    %v1110 = vsub.f32 %v1108, %v1109
    %v1111 = vand.u32 %v1110, 4294901760
    %1112 = vmatpush.msra.mxu0 %v1111
    %v1113 = vand.u32 %v45, 4294901760
    %v1114 = vsub.f32 %v45, %v1113
    %v1115 = vand.u32 %v1114, 4294901760
    %v1116 = vsub.f32 %v1114, %v1115
    %v1117 = vand.u32 %v1116, 4294901760
    %1118 = vmatpush.msra.mxu0 %v1117
    %v1119 = vand.u32 %v42, 4294901760
    %1120 = vmatmul.f32.gmra.mxu0 %v1119
    %v1121 = vpop.f32.mrf.mxu0
    %v1122 = vadd.f32 %v1021, %v1121
    %1123 = vdwg.mxu0
    %v1124 = vand.u32 %v165, 4294901760
    %v1125 = vsub.f32 %v165, %v1124
    %1126 = vmatpush.msra.mxu0 %v1125
    %v1127 = vand.u32 %v157, 4294901760
    %v1128 = vsub.f32 %v157, %v1127
    %1129 = vmatpush.msra.mxu0 %v1128
    %v1130 = vand.u32 %v149, 4294901760
    %v1131 = vsub.f32 %v149, %v1130
    %1132 = vmatpush.msra.mxu0 %v1131
    %v1133 = vand.u32 %v141, 4294901760
    %v1134 = vsub.f32 %v141, %v1133
    %1135 = vmatpush.msra.mxu0 %v1134
    %v1136 = vand.u32 %v133, 4294901760
    %v1137 = vsub.f32 %v133, %v1136
    %1138 = vmatpush.msra.mxu0 %v1137
    %v1139 = vand.u32 %v125, 4294901760
    %v1140 = vsub.f32 %v125, %v1139
    %1141 = vmatpush.msra.mxu0 %v1140
    %v1142 = vand.u32 %v117, 4294901760
    %v1143 = vsub.f32 %v117, %v1142
    %1144 = vmatpush.msra.mxu0 %v1143
    %v1145 = vand.u32 %v109, 4294901760
    %v1146 = vsub.f32 %v109, %v1145
    %1147 = vmatpush.msra.mxu0 %v1146
    %v1148 = vand.u32 %v101, 4294901760
    %v1149 = vsub.f32 %v101, %v1148
    %1150 = vmatpush.msra.mxu0 %v1149
    %v1151 = vand.u32 %v93, 4294901760
    %v1152 = vsub.f32 %v93, %v1151
    %1153 = vmatpush.msra.mxu0 %v1152
    %v1154 = vand.u32 %v85, 4294901760
    %v1155 = vsub.f32 %v85, %v1154
    %1156 = vmatpush.msra.mxu0 %v1155
    %v1157 = vand.u32 %v77, 4294901760
    %v1158 = vsub.f32 %v77, %v1157
    %1159 = vmatpush.msra.mxu0 %v1158
    %v1160 = vand.u32 %v69, 4294901760
    %v1161 = vsub.f32 %v69, %v1160
    %1162 = vmatpush.msra.mxu0 %v1161
    %v1163 = vand.u32 %v61, 4294901760
    %v1164 = vsub.f32 %v61, %v1163
    %1165 = vmatpush.msra.mxu0 %v1164
    %v1166 = vand.u32 %v53, 4294901760
    %v1167 = vsub.f32 %v53, %v1166
    %1168 = vmatpush.msra.mxu0 %v1167
    %v1169 = vand.u32 %v45, 4294901760
    %v1170 = vsub.f32 %v45, %v1169
    %1171 = vmatpush.msra.mxu0 %v1170
    %v1172 = vand.u32 %v42, 4294901760
    %v1173 = vsub.f32 %v42, %v1172
    %1174 = vmatmul.f32.gmra.mxu0 %v1173
    %v1175 = vpop.f32.mrf.mxu0
    %v1176 = vadd.f32 %v1122, %v1175
    %1177 = vdwg.mxu0
    %v1178 = vand.u32 %v165, 4294901760
    %1179 = vmatpush.msra.mxu0 %v1178
    %v1180 = vand.u32 %v157, 4294901760
    %1181 = vmatpush.msra.mxu0 %v1180
    %v1182 = vand.u32 %v149, 4294901760
    %1183 = vmatpush.msra.mxu0 %v1182
    %v1184 = vand.u32 %v141, 4294901760
    %1185 = vmatpush.msra.mxu0 %v1184
    %v1186 = vand.u32 %v133, 4294901760
    %1187 = vmatpush.msra.mxu0 %v1186
    %v1188 = vand.u32 %v125, 4294901760
    %1189 = vmatpush.msra.mxu0 %v1188
    %v1190 = vand.u32 %v117, 4294901760
    %1191 = vmatpush.msra.mxu0 %v1190
    %v1192 = vand.u32 %v109, 4294901760
    %1193 = vmatpush.msra.mxu0 %v1192
    %v1194 = vand.u32 %v101, 4294901760
    %1195 = vmatpush.msra.mxu0 %v1194
    %v1196 = vand.u32 %v93, 4294901760
    %1197 = vmatpush.msra.mxu0 %v1196
    %v1198 = vand.u32 %v85, 4294901760
    %1199 = vmatpush.msra.mxu0 %v1198
    %v1200 = vand.u32 %v77, 4294901760
    %1201 = vmatpush.msra.mxu0 %v1200
    %v1202 = vand.u32 %v69, 4294901760
    %1203 = vmatpush.msra.mxu0 %v1202
    %v1204 = vand.u32 %v61, 4294901760
    %1205 = vmatpush.msra.mxu0 %v1204
    %v1206 = vand.u32 %v53, 4294901760
    %1207 = vmatpush.msra.mxu0 %v1206
    %v1208 = vand.u32 %v45, 4294901760
    %1209 = vmatpush.msra.mxu0 %v1208
    %v1210 = vand.u32 %v42, 4294901760
    %v1211 = vsub.f32 %v42, %v1210
    %v1212 = vand.u32 %v1211, 4294901760
    %1213 = vmatmul.f32.gmra.mxu0 %v1212
    %v1214 = vpop.f32.mrf.mxu0
    %v1215 = vadd.f32 %v1176, %v1214
    %1216 = vdwg.mxu0
    %v1217 = vand.u32 %v165, 4294901760
    %v1218 = vsub.f32 %v165, %v1217
    %v1219 = vand.u32 %v1218, 4294901760
    %1220 = vmatpush.msra.mxu0 %v1219
    %v1221 = vand.u32 %v157, 4294901760
    %v1222 = vsub.f32 %v157, %v1221
    %v1223 = vand.u32 %v1222, 4294901760
    %1224 = vmatpush.msra.mxu0 %v1223
    %v1225 = vand.u32 %v149, 4294901760
    %v1226 = vsub.f32 %v149, %v1225
    %v1227 = vand.u32 %v1226, 4294901760
    %1228 = vmatpush.msra.mxu0 %v1227
    %v1229 = vand.u32 %v141, 4294901760
    %v1230 = vsub.f32 %v141, %v1229
    %v1231 = vand.u32 %v1230, 4294901760
    %1232 = vmatpush.msra.mxu0 %v1231
    %v1233 = vand.u32 %v133, 4294901760
    %v1234 = vsub.f32 %v133, %v1233
    %v1235 = vand.u32 %v1234, 4294901760
    %1236 = vmatpush.msra.mxu0 %v1235
    %v1237 = vand.u32 %v125, 4294901760
    %v1238 = vsub.f32 %v125, %v1237
    %v1239 = vand.u32 %v1238, 4294901760
    %1240 = vmatpush.msra.mxu0 %v1239
    %v1241 = vand.u32 %v117, 4294901760
    %v1242 = vsub.f32 %v117, %v1241
    %v1243 = vand.u32 %v1242, 4294901760
    %1244 = vmatpush.msra.mxu0 %v1243
    %v1245 = vand.u32 %v109, 4294901760
    %v1246 = vsub.f32 %v109, %v1245
    %v1247 = vand.u32 %v1246, 4294901760
    %1248 = vmatpush.msra.mxu0 %v1247
    %v1249 = vand.u32 %v101, 4294901760
    %v1250 = vsub.f32 %v101, %v1249
    %v1251 = vand.u32 %v1250, 4294901760
    %1252 = vmatpush.msra.mxu0 %v1251
    %v1253 = vand.u32 %v93, 4294901760
    %v1254 = vsub.f32 %v93, %v1253
    %v1255 = vand.u32 %v1254, 4294901760
    %1256 = vmatpush.msra.mxu0 %v1255
    %v1257 = vand.u32 %v85, 4294901760
    %v1258 = vsub.f32 %v85, %v1257
    %v1259 = vand.u32 %v1258, 4294901760
    %1260 = vmatpush.msra.mxu0 %v1259
    %v1261 = vand.u32 %v77, 4294901760
    %v1262 = vsub.f32 %v77, %v1261
    %v1263 = vand.u32 %v1262, 4294901760
    %1264 = vmatpush.msra.mxu0 %v1263
    %v1265 = vand.u32 %v69, 4294901760
    %v1266 = vsub.f32 %v69, %v1265
    %v1267 = vand.u32 %v1266, 4294901760
    %1268 = vmatpush.msra.mxu0 %v1267
    %v1269 = vand.u32 %v61, 4294901760
    %v1270 = vsub.f32 %v61, %v1269
    %v1271 = vand.u32 %v1270, 4294901760
    %1272 = vmatpush.msra.mxu0 %v1271
    %v1273 = vand.u32 %v53, 4294901760
    %v1274 = vsub.f32 %v53, %v1273
    %v1275 = vand.u32 %v1274, 4294901760
    %1276 = vmatpush.msra.mxu0 %v1275
    %v1277 = vand.u32 %v45, 4294901760
    %v1278 = vsub.f32 %v45, %v1277
    %v1279 = vand.u32 %v1278, 4294901760
    %1280 = vmatpush.msra.mxu0 %v1279
    %v1281 = vand.u32 %v42, 4294901760
    %1282 = vmatmul.f32.gmra.mxu0 %v1281
    %v1283 = vpop.f32.mrf.mxu0
    %v1284 = vadd.f32 %v1215, %v1283
    %1285 = vdwg.mxu0
    %v1286 = vand.u32 %v165, 4294901760
    %1287 = vmatpush.msra.mxu0 %v1286
    %v1288 = vand.u32 %v157, 4294901760
    %1289 = vmatpush.msra.mxu0 %v1288
    %v1290 = vand.u32 %v149, 4294901760
    %1291 = vmatpush.msra.mxu0 %v1290
    %v1292 = vand.u32 %v141, 4294901760
    %1293 = vmatpush.msra.mxu0 %v1292
    %v1294 = vand.u32 %v133, 4294901760
    %1295 = vmatpush.msra.mxu0 %v1294
    %v1296 = vand.u32 %v125, 4294901760
    %1297 = vmatpush.msra.mxu0 %v1296
    %v1298 = vand.u32 %v117, 4294901760
    %1299 = vmatpush.msra.mxu0 %v1298
    %v1300 = vand.u32 %v109, 4294901760
    %1301 = vmatpush.msra.mxu0 %v1300
    %v1302 = vand.u32 %v101, 4294901760
    %1303 = vmatpush.msra.mxu0 %v1302
    %v1304 = vand.u32 %v93, 4294901760
    %1305 = vmatpush.msra.mxu0 %v1304
    %v1306 = vand.u32 %v85, 4294901760
    %1307 = vmatpush.msra.mxu0 %v1306
    %v1308 = vand.u32 %v77, 4294901760
    %1309 = vmatpush.msra.mxu0 %v1308
    %v1310 = vand.u32 %v69, 4294901760
    %1311 = vmatpush.msra.mxu0 %v1310
    %v1312 = vand.u32 %v61, 4294901760
    %1313 = vmatpush.msra.mxu0 %v1312
    %v1314 = vand.u32 %v53, 4294901760
    %1315 = vmatpush.msra.mxu0 %v1314
    %v1316 = vand.u32 %v45, 4294901760
    %1317 = vmatpush.msra.mxu0 %v1316
    %v1318 = vand.u32 %v42, 4294901760
    %1319 = vmatmul.f32.gmra.mxu0 %v1318
    %v1320 = vpop.f32.mrf.mxu0
    %v1321 = vadd.f32 %v1284, %v1320
    %1322 = vdwg.mxu0
    %v1323 = vand.u32 %v293, 4294901760
    %1324 = vmatpush.msra.mxu0 %v1323
    %v1325 = vand.u32 %v285, 4294901760
    %1326 = vmatpush.msra.mxu0 %v1325
    %v1327 = vand.u32 %v277, 4294901760
    %1328 = vmatpush.msra.mxu0 %v1327
    %v1329 = vand.u32 %v269, 4294901760
    %1330 = vmatpush.msra.mxu0 %v1329
    %v1331 = vand.u32 %v261, 4294901760
    %1332 = vmatpush.msra.mxu0 %v1331
    %v1333 = vand.u32 %v253, 4294901760
    %1334 = vmatpush.msra.mxu0 %v1333
    %v1335 = vand.u32 %v245, 4294901760
    %1336 = vmatpush.msra.mxu0 %v1335
    %v1337 = vand.u32 %v237, 4294901760
    %1338 = vmatpush.msra.mxu0 %v1337
    %v1339 = vand.u32 %v229, 4294901760
    %1340 = vmatpush.msra.mxu0 %v1339
    %v1341 = vand.u32 %v221, 4294901760
    %1342 = vmatpush.msra.mxu0 %v1341
    %v1343 = vand.u32 %v213, 4294901760
    %1344 = vmatpush.msra.mxu0 %v1343
    %v1345 = vand.u32 %v205, 4294901760
    %1346 = vmatpush.msra.mxu0 %v1345
    %v1347 = vand.u32 %v197, 4294901760
    %1348 = vmatpush.msra.mxu0 %v1347
    %v1349 = vand.u32 %v189, 4294901760
    %1350 = vmatpush.msra.mxu0 %v1349
    %v1351 = vand.u32 %v181, 4294901760
    %1352 = vmatpush.msra.mxu0 %v1351
    %v1353 = vand.u32 %v173, 4294901760
    %1354 = vmatpush.msra.mxu0 %v1353
    %v1355 = vand.u32 %v43, 4294901760
    %v1356 = vsub.f32 %v43, %v1355
    %v1357 = vand.u32 %v1356, 4294901760
    %v1358 = vsub.f32 %v1356, %v1357
    %v1359 = vand.u32 %v1358, 4294901760
    %1360 = vmatmul.f32.gmra.mxu0 %v1359
    %v1361 = vpop.f32.mrf.mxu0
    %v1362 = vadd.f32 %v1321, %v1361
    %1363 = vdwg.mxu0
    %v1364 = vand.u32 %v293, 4294901760
    %v1365 = vsub.f32 %v293, %v1364
    %v1366 = vand.u32 %v1365, 4294901760
    %v1367 = vsub.f32 %v1365, %v1366
    %v1368 = vand.u32 %v1367, 4294901760
    %1369 = vmatpush.msra.mxu0 %v1368
    %v1370 = vand.u32 %v285, 4294901760
    %v1371 = vsub.f32 %v285, %v1370
    %v1372 = vand.u32 %v1371, 4294901760
    %v1373 = vsub.f32 %v1371, %v1372
    %v1374 = vand.u32 %v1373, 4294901760
    %1375 = vmatpush.msra.mxu0 %v1374
    %v1376 = vand.u32 %v277, 4294901760
    %v1377 = vsub.f32 %v277, %v1376
    %v1378 = vand.u32 %v1377, 4294901760
    %v1379 = vsub.f32 %v1377, %v1378
    %v1380 = vand.u32 %v1379, 4294901760
    %1381 = vmatpush.msra.mxu0 %v1380
    %v1382 = vand.u32 %v269, 4294901760
    %v1383 = vsub.f32 %v269, %v1382
    %v1384 = vand.u32 %v1383, 4294901760
    %v1385 = vsub.f32 %v1383, %v1384
    %v1386 = vand.u32 %v1385, 4294901760
    %1387 = vmatpush.msra.mxu0 %v1386
    %v1388 = vand.u32 %v261, 4294901760
    %v1389 = vsub.f32 %v261, %v1388
    %v1390 = vand.u32 %v1389, 4294901760
    %v1391 = vsub.f32 %v1389, %v1390
    %v1392 = vand.u32 %v1391, 4294901760
    %1393 = vmatpush.msra.mxu0 %v1392
    %v1394 = vand.u32 %v253, 4294901760
    %v1395 = vsub.f32 %v253, %v1394
    %v1396 = vand.u32 %v1395, 4294901760
    %v1397 = vsub.f32 %v1395, %v1396
    %v1398 = vand.u32 %v1397, 4294901760
    %1399 = vmatpush.msra.mxu0 %v1398
    %v1400 = vand.u32 %v245, 4294901760
    %v1401 = vsub.f32 %v245, %v1400
    %v1402 = vand.u32 %v1401, 4294901760
    %v1403 = vsub.f32 %v1401, %v1402
    %v1404 = vand.u32 %v1403, 4294901760
    %1405 = vmatpush.msra.mxu0 %v1404
    %v1406 = vand.u32 %v237, 4294901760
    %v1407 = vsub.f32 %v237, %v1406
    %v1408 = vand.u32 %v1407, 4294901760
    %v1409 = vsub.f32 %v1407, %v1408
    %v1410 = vand.u32 %v1409, 4294901760
    %1411 = vmatpush.msra.mxu0 %v1410
    %v1412 = vand.u32 %v229, 4294901760
    %v1413 = vsub.f32 %v229, %v1412
    %v1414 = vand.u32 %v1413, 4294901760
    %v1415 = vsub.f32 %v1413, %v1414
    %v1416 = vand.u32 %v1415, 4294901760
    %1417 = vmatpush.msra.mxu0 %v1416
    %v1418 = vand.u32 %v221, 4294901760
    %v1419 = vsub.f32 %v221, %v1418
    %v1420 = vand.u32 %v1419, 4294901760
    %v1421 = vsub.f32 %v1419, %v1420
    %v1422 = vand.u32 %v1421, 4294901760
    %1423 = vmatpush.msra.mxu0 %v1422
    %v1424 = vand.u32 %v213, 4294901760
    %v1425 = vsub.f32 %v213, %v1424
    %v1426 = vand.u32 %v1425, 4294901760
    %v1427 = vsub.f32 %v1425, %v1426
    %v1428 = vand.u32 %v1427, 4294901760
    %1429 = vmatpush.msra.mxu0 %v1428
    %v1430 = vand.u32 %v205, 4294901760
    %v1431 = vsub.f32 %v205, %v1430
    %v1432 = vand.u32 %v1431, 4294901760
    %v1433 = vsub.f32 %v1431, %v1432
    %v1434 = vand.u32 %v1433, 4294901760
    %1435 = vmatpush.msra.mxu0 %v1434
    %v1436 = vand.u32 %v197, 4294901760
    %v1437 = vsub.f32 %v197, %v1436
    %v1438 = vand.u32 %v1437, 4294901760
    %v1439 = vsub.f32 %v1437, %v1438
    %v1440 = vand.u32 %v1439, 4294901760
    %1441 = vmatpush.msra.mxu0 %v1440
    %v1442 = vand.u32 %v189, 4294901760
    %v1443 = vsub.f32 %v189, %v1442
    %v1444 = vand.u32 %v1443, 4294901760
    %v1445 = vsub.f32 %v1443, %v1444
    %v1446 = vand.u32 %v1445, 4294901760
    %1447 = vmatpush.msra.mxu0 %v1446
    %v1448 = vand.u32 %v181, 4294901760
    %v1449 = vsub.f32 %v181, %v1448
    %v1450 = vand.u32 %v1449, 4294901760
    %v1451 = vsub.f32 %v1449, %v1450
    %v1452 = vand.u32 %v1451, 4294901760
    %1453 = vmatpush.msra.mxu0 %v1452
    %v1454 = vand.u32 %v173, 4294901760
    %v1455 = vsub.f32 %v173, %v1454
    %v1456 = vand.u32 %v1455, 4294901760
    %v1457 = vsub.f32 %v1455, %v1456
    %v1458 = vand.u32 %v1457, 4294901760
    %1459 = vmatpush.msra.mxu0 %v1458
    %v1460 = vand.u32 %v43, 4294901760
    %1461 = vmatmul.f32.gmra.mxu0 %v1460
    %v1462 = vpop.f32.mrf.mxu0
    %v1463 = vadd.f32 %v1362, %v1462
    %1464 = vdwg.mxu0
    %v1465 = vand.u32 %v293, 4294901760
    %v1466 = vsub.f32 %v293, %v1465
    %1467 = vmatpush.msra.mxu0 %v1466
    %v1468 = vand.u32 %v285, 4294901760
    %v1469 = vsub.f32 %v285, %v1468
    %1470 = vmatpush.msra.mxu0 %v1469
    %v1471 = vand.u32 %v277, 4294901760
    %v1472 = vsub.f32 %v277, %v1471
    %1473 = vmatpush.msra.mxu0 %v1472
    %v1474 = vand.u32 %v269, 4294901760
    %v1475 = vsub.f32 %v269, %v1474
    %1476 = vmatpush.msra.mxu0 %v1475
    %v1477 = vand.u32 %v261, 4294901760
    %v1478 = vsub.f32 %v261, %v1477
    %1479 = vmatpush.msra.mxu0 %v1478
    %v1480 = vand.u32 %v253, 4294901760
    %v1481 = vsub.f32 %v253, %v1480
    %1482 = vmatpush.msra.mxu0 %v1481
    %v1483 = vand.u32 %v245, 4294901760
    %v1484 = vsub.f32 %v245, %v1483
    %1485 = vmatpush.msra.mxu0 %v1484
    %v1486 = vand.u32 %v237, 4294901760
    %v1487 = vsub.f32 %v237, %v1486
    %1488 = vmatpush.msra.mxu0 %v1487
    %v1489 = vand.u32 %v229, 4294901760
    %v1490 = vsub.f32 %v229, %v1489
    %1491 = vmatpush.msra.mxu0 %v1490
    %v1492 = vand.u32 %v221, 4294901760
    %v1493 = vsub.f32 %v221, %v1492
    %1494 = vmatpush.msra.mxu0 %v1493
    %v1495 = vand.u32 %v213, 4294901760
    %v1496 = vsub.f32 %v213, %v1495
    %1497 = vmatpush.msra.mxu0 %v1496
    %v1498 = vand.u32 %v205, 4294901760
    %v1499 = vsub.f32 %v205, %v1498
    %1500 = vmatpush.msra.mxu0 %v1499
    %v1501 = vand.u32 %v197, 4294901760
    %v1502 = vsub.f32 %v197, %v1501
    %1503 = vmatpush.msra.mxu0 %v1502
    %v1504 = vand.u32 %v189, 4294901760
    %v1505 = vsub.f32 %v189, %v1504
    %1506 = vmatpush.msra.mxu0 %v1505
    %v1507 = vand.u32 %v181, 4294901760
    %v1508 = vsub.f32 %v181, %v1507
    %1509 = vmatpush.msra.mxu0 %v1508
    %v1510 = vand.u32 %v173, 4294901760
    %v1511 = vsub.f32 %v173, %v1510
    %1512 = vmatpush.msra.mxu0 %v1511
    %v1513 = vand.u32 %v43, 4294901760
    %v1514 = vsub.f32 %v43, %v1513
    %1515 = vmatmul.f32.gmra.mxu0 %v1514
    %v1516 = vpop.f32.mrf.mxu0
    %v1517 = vadd.f32 %v1463, %v1516
    %1518 = vdwg.mxu0
    %v1519 = vand.u32 %v293, 4294901760
    %1520 = vmatpush.msra.mxu0 %v1519
    %v1521 = vand.u32 %v285, 4294901760
    %1522 = vmatpush.msra.mxu0 %v1521
    %v1523 = vand.u32 %v277, 4294901760
    %1524 = vmatpush.msra.mxu0 %v1523
    %v1525 = vand.u32 %v269, 4294901760
    %1526 = vmatpush.msra.mxu0 %v1525
    %v1527 = vand.u32 %v261, 4294901760
    %1528 = vmatpush.msra.mxu0 %v1527
    %v1529 = vand.u32 %v253, 4294901760
    %1530 = vmatpush.msra.mxu0 %v1529
    %v1531 = vand.u32 %v245, 4294901760
    %1532 = vmatpush.msra.mxu0 %v1531
    %v1533 = vand.u32 %v237, 4294901760
    %1534 = vmatpush.msra.mxu0 %v1533
    %v1535 = vand.u32 %v229, 4294901760
    %1536 = vmatpush.msra.mxu0 %v1535
    %v1537 = vand.u32 %v221, 4294901760
    %1538 = vmatpush.msra.mxu0 %v1537
    %v1539 = vand.u32 %v213, 4294901760
    %1540 = vmatpush.msra.mxu0 %v1539
    %v1541 = vand.u32 %v205, 4294901760
    %1542 = vmatpush.msra.mxu0 %v1541
    %v1543 = vand.u32 %v197, 4294901760
    %1544 = vmatpush.msra.mxu0 %v1543
    %v1545 = vand.u32 %v189, 4294901760
    %1546 = vmatpush.msra.mxu0 %v1545
    %v1547 = vand.u32 %v181, 4294901760
    %1548 = vmatpush.msra.mxu0 %v1547
    %v1549 = vand.u32 %v173, 4294901760
    %1550 = vmatpush.msra.mxu0 %v1549
    %v1551 = vand.u32 %v43, 4294901760
    %v1552 = vsub.f32 %v43, %v1551
    %v1553 = vand.u32 %v1552, 4294901760
    %1554 = vmatmul.f32.gmra.mxu0 %v1553
    %v1555 = vpop.f32.mrf.mxu0
    %v1556 = vadd.f32 %v1517, %v1555
    %1557 = vdwg.mxu0
    %v1558 = vand.u32 %v293, 4294901760
    %v1559 = vsub.f32 %v293, %v1558
    %v1560 = vand.u32 %v1559, 4294901760
    %1561 = vmatpush.msra.mxu0 %v1560
    %v1562 = vand.u32 %v285, 4294901760
    %v1563 = vsub.f32 %v285, %v1562
    %v1564 = vand.u32 %v1563, 4294901760
    %1565 = vmatpush.msra.mxu0 %v1564
    %v1566 = vand.u32 %v277, 4294901760
    %v1567 = vsub.f32 %v277, %v1566
    %v1568 = vand.u32 %v1567, 4294901760
    %1569 = vmatpush.msra.mxu0 %v1568
    %v1570 = vand.u32 %v269, 4294901760
    %v1571 = vsub.f32 %v269, %v1570
    %v1572 = vand.u32 %v1571, 4294901760
    %1573 = vmatpush.msra.mxu0 %v1572
    %v1574 = vand.u32 %v261, 4294901760
    %v1575 = vsub.f32 %v261, %v1574
    %v1576 = vand.u32 %v1575, 4294901760
    %1577 = vmatpush.msra.mxu0 %v1576
    %v1578 = vand.u32 %v253, 4294901760
    %v1579 = vsub.f32 %v253, %v1578
    %v1580 = vand.u32 %v1579, 4294901760
    %1581 = vmatpush.msra.mxu0 %v1580
    %v1582 = vand.u32 %v245, 4294901760
    %v1583 = vsub.f32 %v245, %v1582
    %v1584 = vand.u32 %v1583, 4294901760
    %1585 = vmatpush.msra.mxu0 %v1584
    %v1586 = vand.u32 %v237, 4294901760
    %v1587 = vsub.f32 %v237, %v1586
    %v1588 = vand.u32 %v1587, 4294901760
    %1589 = vmatpush.msra.mxu0 %v1588
    %v1590 = vand.u32 %v229, 4294901760
    %v1591 = vsub.f32 %v229, %v1590
    %v1592 = vand.u32 %v1591, 4294901760
    %1593 = vmatpush.msra.mxu0 %v1592
    %v1594 = vand.u32 %v221, 4294901760
    %v1595 = vsub.f32 %v221, %v1594
    %v1596 = vand.u32 %v1595, 4294901760
    %1597 = vmatpush.msra.mxu0 %v1596
    %v1598 = vand.u32 %v213, 4294901760
    %v1599 = vsub.f32 %v213, %v1598
    %v1600 = vand.u32 %v1599, 4294901760
    %1601 = vmatpush.msra.mxu0 %v1600
    %v1602 = vand.u32 %v205, 4294901760
    %v1603 = vsub.f32 %v205, %v1602
    %v1604 = vand.u32 %v1603, 4294901760
    %1605 = vmatpush.msra.mxu0 %v1604
    %v1606 = vand.u32 %v197, 4294901760
    %v1607 = vsub.f32 %v197, %v1606
    %v1608 = vand.u32 %v1607, 4294901760
    %1609 = vmatpush.msra.mxu0 %v1608
    %v1610 = vand.u32 %v189, 4294901760
    %v1611 = vsub.f32 %v189, %v1610
    %v1612 = vand.u32 %v1611, 4294901760
    %1613 = vmatpush.msra.mxu0 %v1612
    %v1614 = vand.u32 %v181, 4294901760
    %v1615 = vsub.f32 %v181, %v1614
    %v1616 = vand.u32 %v1615, 4294901760
    %1617 = vmatpush.msra.mxu0 %v1616
    %v1618 = vand.u32 %v173, 4294901760
    %v1619 = vsub.f32 %v173, %v1618
    %v1620 = vand.u32 %v1619, 4294901760
    %1621 = vmatpush.msra.mxu0 %v1620
    %v1622 = vand.u32 %v43, 4294901760
    %1623 = vmatmul.f32.gmra.mxu0 %v1622
    %v1624 = vpop.f32.mrf.mxu0
    %v1625 = vadd.f32 %v1556, %v1624
    %1626 = vdwg.mxu0
    %v1627 = vand.u32 %v293, 4294901760
    %1628 = vmatpush.msra.mxu0 %v1627
    %v1629 = vand.u32 %v285, 4294901760
    %1630 = vmatpush.msra.mxu0 %v1629
    %v1631 = vand.u32 %v277, 4294901760
    %1632 = vmatpush.msra.mxu0 %v1631
    %v1633 = vand.u32 %v269, 4294901760
    %1634 = vmatpush.msra.mxu0 %v1633
    %v1635 = vand.u32 %v261, 4294901760
    %1636 = vmatpush.msra.mxu0 %v1635
    %v1637 = vand.u32 %v253, 4294901760
    %1638 = vmatpush.msra.mxu0 %v1637
    %v1639 = vand.u32 %v245, 4294901760
    %1640 = vmatpush.msra.mxu0 %v1639
    %v1641 = vand.u32 %v237, 4294901760
    %1642 = vmatpush.msra.mxu0 %v1641
    %v1643 = vand.u32 %v229, 4294901760
    %1644 = vmatpush.msra.mxu0 %v1643
    %v1645 = vand.u32 %v221, 4294901760
    %1646 = vmatpush.msra.mxu0 %v1645
    %v1647 = vand.u32 %v213, 4294901760
    %1648 = vmatpush.msra.mxu0 %v1647
    %v1649 = vand.u32 %v205, 4294901760
    %1650 = vmatpush.msra.mxu0 %v1649
    %v1651 = vand.u32 %v197, 4294901760
    %1652 = vmatpush.msra.mxu0 %v1651
    %v1653 = vand.u32 %v189, 4294901760
    %1654 = vmatpush.msra.mxu0 %v1653
    %v1655 = vand.u32 %v181, 4294901760
    %1656 = vmatpush.msra.mxu0 %v1655
    %v1657 = vand.u32 %v173, 4294901760
    %1658 = vmatpush.msra.mxu0 %v1657
    %v1659 = vand.u32 %v43, 4294901760
    %1660 = vmatmul.f32.gmra.mxu0 %v1659
    %v1661 = vpop.f32.mrf.mxu0
    %v1662 = vadd.f32 %v1625, %v1661
    %1663 = vdwg.mxu0
    %v1664 = vand.u32 %v166, 4294901760
    %1665 = vmatpush.msra.mxu0 %v1664
    %v1666 = vand.u32 %v158, 4294901760
    %1667 = vmatpush.msra.mxu0 %v1666
    %v1668 = vand.u32 %v150, 4294901760
    %1669 = vmatpush.msra.mxu0 %v1668
    %v1670 = vand.u32 %v142, 4294901760
    %1671 = vmatpush.msra.mxu0 %v1670
    %v1672 = vand.u32 %v134, 4294901760
    %1673 = vmatpush.msra.mxu0 %v1672
    %v1674 = vand.u32 %v126, 4294901760
    %1675 = vmatpush.msra.mxu0 %v1674
    %v1676 = vand.u32 %v118, 4294901760
    %1677 = vmatpush.msra.mxu0 %v1676
    %v1678 = vand.u32 %v110, 4294901760
    %1679 = vmatpush.msra.mxu0 %v1678
    %v1680 = vand.u32 %v102, 4294901760
    %1681 = vmatpush.msra.mxu0 %v1680
    %v1682 = vand.u32 %v94, 4294901760
    %1683 = vmatpush.msra.mxu0 %v1682
    %v1684 = vand.u32 %v86, 4294901760
    %1685 = vmatpush.msra.mxu0 %v1684
    %v1686 = vand.u32 %v78, 4294901760
    %1687 = vmatpush.msra.mxu0 %v1686
    %v1688 = vand.u32 %v70, 4294901760
    %1689 = vmatpush.msra.mxu0 %v1688
    %v1690 = vand.u32 %v62, 4294901760
    %1691 = vmatpush.msra.mxu0 %v1690
    %v1692 = vand.u32 %v54, 4294901760
    %1693 = vmatpush.msra.mxu0 %v1692
    %v1694 = vand.u32 %v46, 4294901760
    %1695 = vmatpush.msra.mxu0 %v1694
    %v1696 = vand.u32 %v42, 4294901760
    %v1697 = vsub.f32 %v42, %v1696
    %v1698 = vand.u32 %v1697, 4294901760
    %v1699 = vsub.f32 %v1697, %v1698
    %v1700 = vand.u32 %v1699, 4294901760
    %1701 = vmatmul.f32.gmra.mxu0 %v1700
    %v1702 = vpop.f32.mrf.mxu0
    %v1703 = vadd.f32 0.0, %v1702
    %1704 = vdwg.mxu0
    %v1705 = vand.u32 %v166, 4294901760
    %v1706 = vsub.f32 %v166, %v1705
    %v1707 = vand.u32 %v1706, 4294901760
    %v1708 = vsub.f32 %v1706, %v1707
    %v1709 = vand.u32 %v1708, 4294901760
    %1710 = vmatpush.msra.mxu0 %v1709
    %v1711 = vand.u32 %v158, 4294901760
    %v1712 = vsub.f32 %v158, %v1711
    %v1713 = vand.u32 %v1712, 4294901760
    %v1714 = vsub.f32 %v1712, %v1713
    %v1715 = vand.u32 %v1714, 4294901760
    %1716 = vmatpush.msra.mxu0 %v1715
    %v1717 = vand.u32 %v150, 4294901760
    %v1718 = vsub.f32 %v150, %v1717
    %v1719 = vand.u32 %v1718, 4294901760
    %v1720 = vsub.f32 %v1718, %v1719
    %v1721 = vand.u32 %v1720, 4294901760
    %1722 = vmatpush.msra.mxu0 %v1721
    %v1723 = vand.u32 %v142, 4294901760
    %v1724 = vsub.f32 %v142, %v1723
    %v1725 = vand.u32 %v1724, 4294901760
    %v1726 = vsub.f32 %v1724, %v1725
    %v1727 = vand.u32 %v1726, 4294901760
    %1728 = vmatpush.msra.mxu0 %v1727
    %v1729 = vand.u32 %v134, 4294901760
    %v1730 = vsub.f32 %v134, %v1729
    %v1731 = vand.u32 %v1730, 4294901760
    %v1732 = vsub.f32 %v1730, %v1731
    %v1733 = vand.u32 %v1732, 4294901760
    %1734 = vmatpush.msra.mxu0 %v1733
    %v1735 = vand.u32 %v126, 4294901760
    %v1736 = vsub.f32 %v126, %v1735
    %v1737 = vand.u32 %v1736, 4294901760
    %v1738 = vsub.f32 %v1736, %v1737
    %v1739 = vand.u32 %v1738, 4294901760
    %1740 = vmatpush.msra.mxu0 %v1739
    %v1741 = vand.u32 %v118, 4294901760
    %v1742 = vsub.f32 %v118, %v1741
    %v1743 = vand.u32 %v1742, 4294901760
    %v1744 = vsub.f32 %v1742, %v1743
    %v1745 = vand.u32 %v1744, 4294901760
    %1746 = vmatpush.msra.mxu0 %v1745
    %v1747 = vand.u32 %v110, 4294901760
    %v1748 = vsub.f32 %v110, %v1747
    %v1749 = vand.u32 %v1748, 4294901760
    %v1750 = vsub.f32 %v1748, %v1749
    %v1751 = vand.u32 %v1750, 4294901760
    %1752 = vmatpush.msra.mxu0 %v1751
    %v1753 = vand.u32 %v102, 4294901760
    %v1754 = vsub.f32 %v102, %v1753
    %v1755 = vand.u32 %v1754, 4294901760
    %v1756 = vsub.f32 %v1754, %v1755
    %v1757 = vand.u32 %v1756, 4294901760
    %1758 = vmatpush.msra.mxu0 %v1757
    %v1759 = vand.u32 %v94, 4294901760
    %v1760 = vsub.f32 %v94, %v1759
    %v1761 = vand.u32 %v1760, 4294901760
    %v1762 = vsub.f32 %v1760, %v1761
    %v1763 = vand.u32 %v1762, 4294901760
    %1764 = vmatpush.msra.mxu0 %v1763
    %v1765 = vand.u32 %v86, 4294901760
    %v1766 = vsub.f32 %v86, %v1765
    %v1767 = vand.u32 %v1766, 4294901760
    %v1768 = vsub.f32 %v1766, %v1767
    %v1769 = vand.u32 %v1768, 4294901760
    %1770 = vmatpush.msra.mxu0 %v1769
    %v1771 = vand.u32 %v78, 4294901760
    %v1772 = vsub.f32 %v78, %v1771
    %v1773 = vand.u32 %v1772, 4294901760
    %v1774 = vsub.f32 %v1772, %v1773
    %v1775 = vand.u32 %v1774, 4294901760
    %1776 = vmatpush.msra.mxu0 %v1775
    %v1777 = vand.u32 %v70, 4294901760
    %v1778 = vsub.f32 %v70, %v1777
    %v1779 = vand.u32 %v1778, 4294901760
    %v1780 = vsub.f32 %v1778, %v1779
    %v1781 = vand.u32 %v1780, 4294901760
    %1782 = vmatpush.msra.mxu0 %v1781
    %v1783 = vand.u32 %v62, 4294901760
    %v1784 = vsub.f32 %v62, %v1783
    %v1785 = vand.u32 %v1784, 4294901760
    %v1786 = vsub.f32 %v1784, %v1785
    %v1787 = vand.u32 %v1786, 4294901760
    %1788 = vmatpush.msra.mxu0 %v1787
    %v1789 = vand.u32 %v54, 4294901760
    %v1790 = vsub.f32 %v54, %v1789
    %v1791 = vand.u32 %v1790, 4294901760
    %v1792 = vsub.f32 %v1790, %v1791
    %v1793 = vand.u32 %v1792, 4294901760
    %1794 = vmatpush.msra.mxu0 %v1793
    %v1795 = vand.u32 %v46, 4294901760
    %v1796 = vsub.f32 %v46, %v1795
    %v1797 = vand.u32 %v1796, 4294901760
    %v1798 = vsub.f32 %v1796, %v1797
    %v1799 = vand.u32 %v1798, 4294901760
    %1800 = vmatpush.msra.mxu0 %v1799
    %v1801 = vand.u32 %v42, 4294901760
    %1802 = vmatmul.f32.gmra.mxu0 %v1801
    %v1803 = vpop.f32.mrf.mxu0
    %v1804 = vadd.f32 %v1703, %v1803
    %1805 = vdwg.mxu0
    %v1806 = vand.u32 %v166, 4294901760
    %v1807 = vsub.f32 %v166, %v1806
    %1808 = vmatpush.msra.mxu0 %v1807
    %v1809 = vand.u32 %v158, 4294901760
    %v1810 = vsub.f32 %v158, %v1809
    %1811 = vmatpush.msra.mxu0 %v1810
    %v1812 = vand.u32 %v150, 4294901760
    %v1813 = vsub.f32 %v150, %v1812
    %1814 = vmatpush.msra.mxu0 %v1813
    %v1815 = vand.u32 %v142, 4294901760
    %v1816 = vsub.f32 %v142, %v1815
    %1817 = vmatpush.msra.mxu0 %v1816
    %v1818 = vand.u32 %v134, 4294901760
    %v1819 = vsub.f32 %v134, %v1818
    %1820 = vmatpush.msra.mxu0 %v1819
    %v1821 = vand.u32 %v126, 4294901760
    %v1822 = vsub.f32 %v126, %v1821
    %1823 = vmatpush.msra.mxu0 %v1822
    %v1824 = vand.u32 %v118, 4294901760
    %v1825 = vsub.f32 %v118, %v1824
    %1826 = vmatpush.msra.mxu0 %v1825
    %v1827 = vand.u32 %v110, 4294901760
    %v1828 = vsub.f32 %v110, %v1827
    %1829 = vmatpush.msra.mxu0 %v1828
    %v1830 = vand.u32 %v102, 4294901760
    %v1831 = vsub.f32 %v102, %v1830
    %1832 = vmatpush.msra.mxu0 %v1831
    %v1833 = vand.u32 %v94, 4294901760
    %v1834 = vsub.f32 %v94, %v1833
    %1835 = vmatpush.msra.mxu0 %v1834
    %v1836 = vand.u32 %v86, 4294901760
    %v1837 = vsub.f32 %v86, %v1836
    %1838 = vmatpush.msra.mxu0 %v1837
    %v1839 = vand.u32 %v78, 4294901760
    %v1840 = vsub.f32 %v78, %v1839
    %1841 = vmatpush.msra.mxu0 %v1840
    %v1842 = vand.u32 %v70, 4294901760
    %v1843 = vsub.f32 %v70, %v1842
    %1844 = vmatpush.msra.mxu0 %v1843
    %v1845 = vand.u32 %v62, 4294901760
    %v1846 = vsub.f32 %v62, %v1845
    %1847 = vmatpush.msra.mxu0 %v1846
    %v1848 = vand.u32 %v54, 4294901760
    %v1849 = vsub.f32 %v54, %v1848
    %1850 = vmatpush.msra.mxu0 %v1849
    %v1851 = vand.u32 %v46, 4294901760
    %v1852 = vsub.f32 %v46, %v1851
    %1853 = vmatpush.msra.mxu0 %v1852
    %v1854 = vand.u32 %v42, 4294901760
    %v1855 = vsub.f32 %v42, %v1854
    %1856 = vmatmul.f32.gmra.mxu0 %v1855
    %v1857 = vpop.f32.mrf.mxu0
    %v1858 = vadd.f32 %v1804, %v1857
    %1859 = vdwg.mxu0
    %v1860 = vand.u32 %v166, 4294901760
    %1861 = vmatpush.msra.mxu0 %v1860
    %v1862 = vand.u32 %v158, 4294901760
    %1863 = vmatpush.msra.mxu0 %v1862
    %v1864 = vand.u32 %v150, 4294901760
    %1865 = vmatpush.msra.mxu0 %v1864
    %v1866 = vand.u32 %v142, 4294901760
    %1867 = vmatpush.msra.mxu0 %v1866
    %v1868 = vand.u32 %v134, 4294901760
    %1869 = vmatpush.msra.mxu0 %v1868
    %v1870 = vand.u32 %v126, 4294901760
    %1871 = vmatpush.msra.mxu0 %v1870
    %v1872 = vand.u32 %v118, 4294901760
    %1873 = vmatpush.msra.mxu0 %v1872
    %v1874 = vand.u32 %v110, 4294901760
    %1875 = vmatpush.msra.mxu0 %v1874
    %v1876 = vand.u32 %v102, 4294901760
    %1877 = vmatpush.msra.mxu0 %v1876
    %v1878 = vand.u32 %v94, 4294901760
    %1879 = vmatpush.msra.mxu0 %v1878
    %v1880 = vand.u32 %v86, 4294901760
    %1881 = vmatpush.msra.mxu0 %v1880
    %v1882 = vand.u32 %v78, 4294901760
    %1883 = vmatpush.msra.mxu0 %v1882
    %v1884 = vand.u32 %v70, 4294901760
    %1885 = vmatpush.msra.mxu0 %v1884
    %v1886 = vand.u32 %v62, 4294901760
    %1887 = vmatpush.msra.mxu0 %v1886
    %v1888 = vand.u32 %v54, 4294901760
    %1889 = vmatpush.msra.mxu0 %v1888
    %v1890 = vand.u32 %v46, 4294901760
    %1891 = vmatpush.msra.mxu0 %v1890
    %v1892 = vand.u32 %v42, 4294901760
    %v1893 = vsub.f32 %v42, %v1892
    %v1894 = vand.u32 %v1893, 4294901760
    %1895 = vmatmul.f32.gmra.mxu0 %v1894
    %v1896 = vpop.f32.mrf.mxu0
    %v1897 = vadd.f32 %v1858, %v1896
    %1898 = vdwg.mxu0
    %v1899 = vand.u32 %v166, 4294901760
    %v1900 = vsub.f32 %v166, %v1899
    %v1901 = vand.u32 %v1900, 4294901760
    %1902 = vmatpush.msra.mxu0 %v1901
    %v1903 = vand.u32 %v158, 4294901760
    %v1904 = vsub.f32 %v158, %v1903
    %v1905 = vand.u32 %v1904, 4294901760
    %1906 = vmatpush.msra.mxu0 %v1905
    %v1907 = vand.u32 %v150, 4294901760
    %v1908 = vsub.f32 %v150, %v1907
    %v1909 = vand.u32 %v1908, 4294901760
    %1910 = vmatpush.msra.mxu0 %v1909
    %v1911 = vand.u32 %v142, 4294901760
    %v1912 = vsub.f32 %v142, %v1911
    %v1913 = vand.u32 %v1912, 4294901760
    %1914 = vmatpush.msra.mxu0 %v1913
    %v1915 = vand.u32 %v134, 4294901760
    %v1916 = vsub.f32 %v134, %v1915
    %v1917 = vand.u32 %v1916, 4294901760
    %1918 = vmatpush.msra.mxu0 %v1917
    %v1919 = vand.u32 %v126, 4294901760
    %v1920 = vsub.f32 %v126, %v1919
    %v1921 = vand.u32 %v1920, 4294901760
    %1922 = vmatpush.msra.mxu0 %v1921
    %v1923 = vand.u32 %v118, 4294901760
    %v1924 = vsub.f32 %v118, %v1923
    %v1925 = vand.u32 %v1924, 4294901760
    %1926 = vmatpush.msra.mxu0 %v1925
    %v1927 = vand.u32 %v110, 4294901760
    %v1928 = vsub.f32 %v110, %v1927
    %v1929 = vand.u32 %v1928, 4294901760
    %1930 = vmatpush.msra.mxu0 %v1929
    %v1931 = vand.u32 %v102, 4294901760
    %v1932 = vsub.f32 %v102, %v1931
    %v1933 = vand.u32 %v1932, 4294901760
    %1934 = vmatpush.msra.mxu0 %v1933
    %v1935 = vand.u32 %v94, 4294901760
    %v1936 = vsub.f32 %v94, %v1935
    %v1937 = vand.u32 %v1936, 4294901760
    %1938 = vmatpush.msra.mxu0 %v1937
    %v1939 = vand.u32 %v86, 4294901760
    %v1940 = vsub.f32 %v86, %v1939
    %v1941 = vand.u32 %v1940, 4294901760
    %1942 = vmatpush.msra.mxu0 %v1941
    %v1943 = vand.u32 %v78, 4294901760
    %v1944 = vsub.f32 %v78, %v1943
    %v1945 = vand.u32 %v1944, 4294901760
    %1946 = vmatpush.msra.mxu0 %v1945
    %v1947 = vand.u32 %v70, 4294901760
    %v1948 = vsub.f32 %v70, %v1947
    %v1949 = vand.u32 %v1948, 4294901760
    %1950 = vmatpush.msra.mxu0 %v1949
    %v1951 = vand.u32 %v62, 4294901760
    %v1952 = vsub.f32 %v62, %v1951
    %v1953 = vand.u32 %v1952, 4294901760
    %1954 = vmatpush.msra.mxu0 %v1953
    %v1955 = vand.u32 %v54, 4294901760
    %v1956 = vsub.f32 %v54, %v1955
    %v1957 = vand.u32 %v1956, 4294901760
    %1958 = vmatpush.msra.mxu0 %v1957
    %v1959 = vand.u32 %v46, 4294901760
    %v1960 = vsub.f32 %v46, %v1959
    %v1961 = vand.u32 %v1960, 4294901760
    %1962 = vmatpush.msra.mxu0 %v1961
    %v1963 = vand.u32 %v42, 4294901760
    %1964 = vmatmul.f32.gmra.mxu0 %v1963
    %v1965 = vpop.f32.mrf.mxu0
    %v1966 = vadd.f32 %v1897, %v1965
    %1967 = vdwg.mxu0
    %v1968 = vand.u32 %v166, 4294901760
    %1969 = vmatpush.msra.mxu0 %v1968
    %v1970 = vand.u32 %v158, 4294901760
    %1971 = vmatpush.msra.mxu0 %v1970
    %v1972 = vand.u32 %v150, 4294901760
    %1973 = vmatpush.msra.mxu0 %v1972
    %v1974 = vand.u32 %v142, 4294901760
    %1975 = vmatpush.msra.mxu0 %v1974
    %v1976 = vand.u32 %v134, 4294901760
    %1977 = vmatpush.msra.mxu0 %v1976
    %v1978 = vand.u32 %v126, 4294901760
    %1979 = vmatpush.msra.mxu0 %v1978
    %v1980 = vand.u32 %v118, 4294901760
    %1981 = vmatpush.msra.mxu0 %v1980
    %v1982 = vand.u32 %v110, 4294901760
    %1983 = vmatpush.msra.mxu0 %v1982
    %v1984 = vand.u32 %v102, 4294901760
    %1985 = vmatpush.msra.mxu0 %v1984
    %v1986 = vand.u32 %v94, 4294901760
    %1987 = vmatpush.msra.mxu0 %v1986
    %v1988 = vand.u32 %v86, 4294901760
    %1989 = vmatpush.msra.mxu0 %v1988
    %v1990 = vand.u32 %v78, 4294901760
    %1991 = vmatpush.msra.mxu0 %v1990
    %v1992 = vand.u32 %v70, 4294901760
    %1993 = vmatpush.msra.mxu0 %v1992
    %v1994 = vand.u32 %v62, 4294901760
    %1995 = vmatpush.msra.mxu0 %v1994
    %v1996 = vand.u32 %v54, 4294901760
    %1997 = vmatpush.msra.mxu0 %v1996
    %v1998 = vand.u32 %v46, 4294901760
    %1999 = vmatpush.msra.mxu0 %v1998
    %v2000 = vand.u32 %v42, 4294901760
    %2001 = vmatmul.f32.gmra.mxu0 %v2000
    %v2002 = vpop.f32.mrf.mxu0
    %v2003 = vadd.f32 %v1966, %v2002
    %2004 = vdwg.mxu0
    %v2005 = vand.u32 %v294, 4294901760
    %2006 = vmatpush.msra.mxu0 %v2005
    %v2007 = vand.u32 %v286, 4294901760
    %2008 = vmatpush.msra.mxu0 %v2007
    %v2009 = vand.u32 %v278, 4294901760
    %2010 = vmatpush.msra.mxu0 %v2009
    %v2011 = vand.u32 %v270, 4294901760
    %2012 = vmatpush.msra.mxu0 %v2011
    %v2013 = vand.u32 %v262, 4294901760
    %2014 = vmatpush.msra.mxu0 %v2013
    %v2015 = vand.u32 %v254, 4294901760
    %2016 = vmatpush.msra.mxu0 %v2015
    %v2017 = vand.u32 %v246, 4294901760
    %2018 = vmatpush.msra.mxu0 %v2017
    %v2019 = vand.u32 %v238, 4294901760
    %2020 = vmatpush.msra.mxu0 %v2019
    %v2021 = vand.u32 %v230, 4294901760
    %2022 = vmatpush.msra.mxu0 %v2021
    %v2023 = vand.u32 %v222, 4294901760
    %2024 = vmatpush.msra.mxu0 %v2023
    %v2025 = vand.u32 %v214, 4294901760
    %2026 = vmatpush.msra.mxu0 %v2025
    %v2027 = vand.u32 %v206, 4294901760
    %2028 = vmatpush.msra.mxu0 %v2027
    %v2029 = vand.u32 %v198, 4294901760
    %2030 = vmatpush.msra.mxu0 %v2029
    %v2031 = vand.u32 %v190, 4294901760
    %2032 = vmatpush.msra.mxu0 %v2031
    %v2033 = vand.u32 %v182, 4294901760
    %2034 = vmatpush.msra.mxu0 %v2033
    %v2035 = vand.u32 %v174, 4294901760
    %2036 = vmatpush.msra.mxu0 %v2035
    %v2037 = vand.u32 %v43, 4294901760
    %v2038 = vsub.f32 %v43, %v2037
    %v2039 = vand.u32 %v2038, 4294901760
    %v2040 = vsub.f32 %v2038, %v2039
    %v2041 = vand.u32 %v2040, 4294901760
    %2042 = vmatmul.f32.gmra.mxu0 %v2041
    %v2043 = vpop.f32.mrf.mxu0
    %v2044 = vadd.f32 %v2003, %v2043
    %2045 = vdwg.mxu0
    %v2046 = vand.u32 %v294, 4294901760
    %v2047 = vsub.f32 %v294, %v2046
    %v2048 = vand.u32 %v2047, 4294901760
    %v2049 = vsub.f32 %v2047, %v2048
    %v2050 = vand.u32 %v2049, 4294901760
    %2051 = vmatpush.msra.mxu0 %v2050
    %v2052 = vand.u32 %v286, 4294901760
    %v2053 = vsub.f32 %v286, %v2052
    %v2054 = vand.u32 %v2053, 4294901760
    %v2055 = vsub.f32 %v2053, %v2054
    %v2056 = vand.u32 %v2055, 4294901760
    %2057 = vmatpush.msra.mxu0 %v2056
    %v2058 = vand.u32 %v278, 4294901760
    %v2059 = vsub.f32 %v278, %v2058
    %v2060 = vand.u32 %v2059, 4294901760
    %v2061 = vsub.f32 %v2059, %v2060
    %v2062 = vand.u32 %v2061, 4294901760
    %2063 = vmatpush.msra.mxu0 %v2062
    %v2064 = vand.u32 %v270, 4294901760
    %v2065 = vsub.f32 %v270, %v2064
    %v2066 = vand.u32 %v2065, 4294901760
    %v2067 = vsub.f32 %v2065, %v2066
    %v2068 = vand.u32 %v2067, 4294901760
    %2069 = vmatpush.msra.mxu0 %v2068
    %v2070 = vand.u32 %v262, 4294901760
    %v2071 = vsub.f32 %v262, %v2070
    %v2072 = vand.u32 %v2071, 4294901760
    %v2073 = vsub.f32 %v2071, %v2072
    %v2074 = vand.u32 %v2073, 4294901760
    %2075 = vmatpush.msra.mxu0 %v2074
    %v2076 = vand.u32 %v254, 4294901760
    %v2077 = vsub.f32 %v254, %v2076
    %v2078 = vand.u32 %v2077, 4294901760
    %v2079 = vsub.f32 %v2077, %v2078
    %v2080 = vand.u32 %v2079, 4294901760
    %2081 = vmatpush.msra.mxu0 %v2080
    %v2082 = vand.u32 %v246, 4294901760
    %v2083 = vsub.f32 %v246, %v2082
    %v2084 = vand.u32 %v2083, 4294901760
    %v2085 = vsub.f32 %v2083, %v2084
    %v2086 = vand.u32 %v2085, 4294901760
    %2087 = vmatpush.msra.mxu0 %v2086
    %v2088 = vand.u32 %v238, 4294901760
    %v2089 = vsub.f32 %v238, %v2088
    %v2090 = vand.u32 %v2089, 4294901760
    %v2091 = vsub.f32 %v2089, %v2090
    %v2092 = vand.u32 %v2091, 4294901760
    %2093 = vmatpush.msra.mxu0 %v2092
    %v2094 = vand.u32 %v230, 4294901760
    %v2095 = vsub.f32 %v230, %v2094
    %v2096 = vand.u32 %v2095, 4294901760
    %v2097 = vsub.f32 %v2095, %v2096
    %v2098 = vand.u32 %v2097, 4294901760
    %2099 = vmatpush.msra.mxu0 %v2098
    %v2100 = vand.u32 %v222, 4294901760
    %v2101 = vsub.f32 %v222, %v2100
    %v2102 = vand.u32 %v2101, 4294901760
    %v2103 = vsub.f32 %v2101, %v2102
    %v2104 = vand.u32 %v2103, 4294901760
    %2105 = vmatpush.msra.mxu0 %v2104
    %v2106 = vand.u32 %v214, 4294901760
    %v2107 = vsub.f32 %v214, %v2106
    %v2108 = vand.u32 %v2107, 4294901760
    %v2109 = vsub.f32 %v2107, %v2108
    %v2110 = vand.u32 %v2109, 4294901760
    %2111 = vmatpush.msra.mxu0 %v2110
    %v2112 = vand.u32 %v206, 4294901760
    %v2113 = vsub.f32 %v206, %v2112
    %v2114 = vand.u32 %v2113, 4294901760
    %v2115 = vsub.f32 %v2113, %v2114
    %v2116 = vand.u32 %v2115, 4294901760
    %2117 = vmatpush.msra.mxu0 %v2116
    %v2118 = vand.u32 %v198, 4294901760
    %v2119 = vsub.f32 %v198, %v2118
    %v2120 = vand.u32 %v2119, 4294901760
    %v2121 = vsub.f32 %v2119, %v2120
    %v2122 = vand.u32 %v2121, 4294901760
    %2123 = vmatpush.msra.mxu0 %v2122
    %v2124 = vand.u32 %v190, 4294901760
    %v2125 = vsub.f32 %v190, %v2124
    %v2126 = vand.u32 %v2125, 4294901760
    %v2127 = vsub.f32 %v2125, %v2126
    %v2128 = vand.u32 %v2127, 4294901760
    %2129 = vmatpush.msra.mxu0 %v2128
    %v2130 = vand.u32 %v182, 4294901760
    %v2131 = vsub.f32 %v182, %v2130
    %v2132 = vand.u32 %v2131, 4294901760
    %v2133 = vsub.f32 %v2131, %v2132
    %v2134 = vand.u32 %v2133, 4294901760
    %2135 = vmatpush.msra.mxu0 %v2134
    %v2136 = vand.u32 %v174, 4294901760
    %v2137 = vsub.f32 %v174, %v2136
    %v2138 = vand.u32 %v2137, 4294901760
    %v2139 = vsub.f32 %v2137, %v2138
    %v2140 = vand.u32 %v2139, 4294901760
    %2141 = vmatpush.msra.mxu0 %v2140
    %v2142 = vand.u32 %v43, 4294901760
    %2143 = vmatmul.f32.gmra.mxu0 %v2142
    %v2144 = vpop.f32.mrf.mxu0
    %v2145 = vadd.f32 %v2044, %v2144
    %2146 = vdwg.mxu0
    %v2147 = vand.u32 %v294, 4294901760
    %v2148 = vsub.f32 %v294, %v2147
    %2149 = vmatpush.msra.mxu0 %v2148
    %v2150 = vand.u32 %v286, 4294901760
    %v2151 = vsub.f32 %v286, %v2150
    %2152 = vmatpush.msra.mxu0 %v2151
    %v2153 = vand.u32 %v278, 4294901760
    %v2154 = vsub.f32 %v278, %v2153
    %2155 = vmatpush.msra.mxu0 %v2154
    %v2156 = vand.u32 %v270, 4294901760
    %v2157 = vsub.f32 %v270, %v2156
    %2158 = vmatpush.msra.mxu0 %v2157
    %v2159 = vand.u32 %v262, 4294901760
    %v2160 = vsub.f32 %v262, %v2159
    %2161 = vmatpush.msra.mxu0 %v2160
    %v2162 = vand.u32 %v254, 4294901760
    %v2163 = vsub.f32 %v254, %v2162
    %2164 = vmatpush.msra.mxu0 %v2163
    %v2165 = vand.u32 %v246, 4294901760
    %v2166 = vsub.f32 %v246, %v2165
    %2167 = vmatpush.msra.mxu0 %v2166
    %v2168 = vand.u32 %v238, 4294901760
    %v2169 = vsub.f32 %v238, %v2168
    %2170 = vmatpush.msra.mxu0 %v2169
    %v2171 = vand.u32 %v230, 4294901760
    %v2172 = vsub.f32 %v230, %v2171
    %2173 = vmatpush.msra.mxu0 %v2172
    %v2174 = vand.u32 %v222, 4294901760
    %v2175 = vsub.f32 %v222, %v2174
    %2176 = vmatpush.msra.mxu0 %v2175
    %v2177 = vand.u32 %v214, 4294901760
    %v2178 = vsub.f32 %v214, %v2177
    %2179 = vmatpush.msra.mxu0 %v2178
    %v2180 = vand.u32 %v206, 4294901760
    %v2181 = vsub.f32 %v206, %v2180
    %2182 = vmatpush.msra.mxu0 %v2181
    %v2183 = vand.u32 %v198, 4294901760
    %v2184 = vsub.f32 %v198, %v2183
    %2185 = vmatpush.msra.mxu0 %v2184
    %v2186 = vand.u32 %v190, 4294901760
    %v2187 = vsub.f32 %v190, %v2186
    %2188 = vmatpush.msra.mxu0 %v2187
    %v2189 = vand.u32 %v182, 4294901760
    %v2190 = vsub.f32 %v182, %v2189
    %2191 = vmatpush.msra.mxu0 %v2190
    %v2192 = vand.u32 %v174, 4294901760
    %v2193 = vsub.f32 %v174, %v2192
    %2194 = vmatpush.msra.mxu0 %v2193
    %v2195 = vand.u32 %v43, 4294901760
    %v2196 = vsub.f32 %v43, %v2195
    %2197 = vmatmul.f32.gmra.mxu0 %v2196
    %v2198 = vpop.f32.mrf.mxu0
    %v2199 = vadd.f32 %v2145, %v2198
    %2200 = vdwg.mxu0
    %v2201 = vand.u32 %v294, 4294901760
    %2202 = vmatpush.msra.mxu0 %v2201
    %v2203 = vand.u32 %v286, 4294901760
    %2204 = vmatpush.msra.mxu0 %v2203
    %v2205 = vand.u32 %v278, 4294901760
    %2206 = vmatpush.msra.mxu0 %v2205
    %v2207 = vand.u32 %v270, 4294901760
    %2208 = vmatpush.msra.mxu0 %v2207
    %v2209 = vand.u32 %v262, 4294901760
    %2210 = vmatpush.msra.mxu0 %v2209
    %v2211 = vand.u32 %v254, 4294901760
    %2212 = vmatpush.msra.mxu0 %v2211
    %v2213 = vand.u32 %v246, 4294901760
    %2214 = vmatpush.msra.mxu0 %v2213
    %v2215 = vand.u32 %v238, 4294901760
    %2216 = vmatpush.msra.mxu0 %v2215
    %v2217 = vand.u32 %v230, 4294901760
    %2218 = vmatpush.msra.mxu0 %v2217
    %v2219 = vand.u32 %v222, 4294901760
    %2220 = vmatpush.msra.mxu0 %v2219
    %v2221 = vand.u32 %v214, 4294901760
    %2222 = vmatpush.msra.mxu0 %v2221
    %v2223 = vand.u32 %v206, 4294901760
    %2224 = vmatpush.msra.mxu0 %v2223
    %v2225 = vand.u32 %v198, 4294901760
    %2226 = vmatpush.msra.mxu0 %v2225
    %v2227 = vand.u32 %v190, 4294901760
    %2228 = vmatpush.msra.mxu0 %v2227
    %v2229 = vand.u32 %v182, 4294901760
    %2230 = vmatpush.msra.mxu0 %v2229
    %v2231 = vand.u32 %v174, 4294901760
    %2232 = vmatpush.msra.mxu0 %v2231
    %v2233 = vand.u32 %v43, 4294901760
    %v2234 = vsub.f32 %v43, %v2233
    %v2235 = vand.u32 %v2234, 4294901760
    %2236 = vmatmul.f32.gmra.mxu0 %v2235
    %v2237 = vpop.f32.mrf.mxu0
    %v2238 = vadd.f32 %v2199, %v2237
    %2239 = vdwg.mxu0
    %v2240 = vand.u32 %v294, 4294901760
    %v2241 = vsub.f32 %v294, %v2240
    %v2242 = vand.u32 %v2241, 4294901760
    %2243 = vmatpush.msra.mxu0 %v2242
    %v2244 = vand.u32 %v286, 4294901760
    %v2245 = vsub.f32 %v286, %v2244
    %v2246 = vand.u32 %v2245, 4294901760
    %2247 = vmatpush.msra.mxu0 %v2246
    %v2248 = vand.u32 %v278, 4294901760
    %v2249 = vsub.f32 %v278, %v2248
    %v2250 = vand.u32 %v2249, 4294901760
    %2251 = vmatpush.msra.mxu0 %v2250
    %v2252 = vand.u32 %v270, 4294901760
    %v2253 = vsub.f32 %v270, %v2252
    %v2254 = vand.u32 %v2253, 4294901760
    %2255 = vmatpush.msra.mxu0 %v2254
    %v2256 = vand.u32 %v262, 4294901760
    %v2257 = vsub.f32 %v262, %v2256
    %v2258 = vand.u32 %v2257, 4294901760
    %2259 = vmatpush.msra.mxu0 %v2258
    %v2260 = vand.u32 %v254, 4294901760
    %v2261 = vsub.f32 %v254, %v2260
    %v2262 = vand.u32 %v2261, 4294901760
    %2263 = vmatpush.msra.mxu0 %v2262
    %v2264 = vand.u32 %v246, 4294901760
    %v2265 = vsub.f32 %v246, %v2264
    %v2266 = vand.u32 %v2265, 4294901760
    %2267 = vmatpush.msra.mxu0 %v2266
    %v2268 = vand.u32 %v238, 4294901760
    %v2269 = vsub.f32 %v238, %v2268
    %v2270 = vand.u32 %v2269, 4294901760
    %2271 = vmatpush.msra.mxu0 %v2270
    %v2272 = vand.u32 %v230, 4294901760
    %v2273 = vsub.f32 %v230, %v2272
    %v2274 = vand.u32 %v2273, 4294901760
    %2275 = vmatpush.msra.mxu0 %v2274
    %v2276 = vand.u32 %v222, 4294901760
    %v2277 = vsub.f32 %v222, %v2276
    %v2278 = vand.u32 %v2277, 4294901760
    %2279 = vmatpush.msra.mxu0 %v2278
    %v2280 = vand.u32 %v214, 4294901760
    %v2281 = vsub.f32 %v214, %v2280
    %v2282 = vand.u32 %v2281, 4294901760
    %2283 = vmatpush.msra.mxu0 %v2282
    %v2284 = vand.u32 %v206, 4294901760
    %v2285 = vsub.f32 %v206, %v2284
    %v2286 = vand.u32 %v2285, 4294901760
    %2287 = vmatpush.msra.mxu0 %v2286
    %v2288 = vand.u32 %v198, 4294901760
    %v2289 = vsub.f32 %v198, %v2288
    %v2290 = vand.u32 %v2289, 4294901760
    %2291 = vmatpush.msra.mxu0 %v2290
    %v2292 = vand.u32 %v190, 4294901760
    %v2293 = vsub.f32 %v190, %v2292
    %v2294 = vand.u32 %v2293, 4294901760
    %2295 = vmatpush.msra.mxu0 %v2294
    %v2296 = vand.u32 %v182, 4294901760
    %v2297 = vsub.f32 %v182, %v2296
    %v2298 = vand.u32 %v2297, 4294901760
    %2299 = vmatpush.msra.mxu0 %v2298
    %v2300 = vand.u32 %v174, 4294901760
    %v2301 = vsub.f32 %v174, %v2300
    %v2302 = vand.u32 %v2301, 4294901760
    %2303 = vmatpush.msra.mxu0 %v2302
    %v2304 = vand.u32 %v43, 4294901760
    %2305 = vmatmul.f32.gmra.mxu0 %v2304
    %v2306 = vpop.f32.mrf.mxu0
    %v2307 = vadd.f32 %v2238, %v2306
    %2308 = vdwg.mxu0
    %v2309 = vand.u32 %v294, 4294901760
    %2310 = vmatpush.msra.mxu0 %v2309
    %v2311 = vand.u32 %v286, 4294901760
    %2312 = vmatpush.msra.mxu0 %v2311
    %v2313 = vand.u32 %v278, 4294901760
    %2314 = vmatpush.msra.mxu0 %v2313
    %v2315 = vand.u32 %v270, 4294901760
    %2316 = vmatpush.msra.mxu0 %v2315
    %v2317 = vand.u32 %v262, 4294901760
    %2318 = vmatpush.msra.mxu0 %v2317
    %v2319 = vand.u32 %v254, 4294901760
    %2320 = vmatpush.msra.mxu0 %v2319
    %v2321 = vand.u32 %v246, 4294901760
    %2322 = vmatpush.msra.mxu0 %v2321
    %v2323 = vand.u32 %v238, 4294901760
    %2324 = vmatpush.msra.mxu0 %v2323
    %v2325 = vand.u32 %v230, 4294901760
    %2326 = vmatpush.msra.mxu0 %v2325
    %v2327 = vand.u32 %v222, 4294901760
    %2328 = vmatpush.msra.mxu0 %v2327
    %v2329 = vand.u32 %v214, 4294901760
    %2330 = vmatpush.msra.mxu0 %v2329
    %v2331 = vand.u32 %v206, 4294901760
    %2332 = vmatpush.msra.mxu0 %v2331
    %v2333 = vand.u32 %v198, 4294901760
    %2334 = vmatpush.msra.mxu0 %v2333
    %v2335 = vand.u32 %v190, 4294901760
    %2336 = vmatpush.msra.mxu0 %v2335
    %v2337 = vand.u32 %v182, 4294901760
    %2338 = vmatpush.msra.mxu0 %v2337
    %v2339 = vand.u32 %v174, 4294901760
    %2340 = vmatpush.msra.mxu0 %v2339
    %v2341 = vand.u32 %v43, 4294901760
    %2342 = vmatmul.f32.gmra.mxu0 %v2341
    %v2343 = vpop.f32.mrf.mxu0
    %v2344 = vadd.f32 %v2307, %v2343
    %2345 = vdwg.mxu0
    %v2346 = vand.u32 %v167, 4294901760
    %2347 = vmatpush.msra.mxu0 %v2346
    %v2348 = vand.u32 %v159, 4294901760
    %2349 = vmatpush.msra.mxu0 %v2348
    %v2350 = vand.u32 %v151, 4294901760
    %2351 = vmatpush.msra.mxu0 %v2350
    %v2352 = vand.u32 %v143, 4294901760
    %2353 = vmatpush.msra.mxu0 %v2352
    %v2354 = vand.u32 %v135, 4294901760
    %2355 = vmatpush.msra.mxu0 %v2354
    %v2356 = vand.u32 %v127, 4294901760
    %2357 = vmatpush.msra.mxu0 %v2356
    %v2358 = vand.u32 %v119, 4294901760
    %2359 = vmatpush.msra.mxu0 %v2358
    %v2360 = vand.u32 %v111, 4294901760
    %2361 = vmatpush.msra.mxu0 %v2360
    %v2362 = vand.u32 %v103, 4294901760
    %2363 = vmatpush.msra.mxu0 %v2362
    %v2364 = vand.u32 %v95, 4294901760
    %2365 = vmatpush.msra.mxu0 %v2364
    %v2366 = vand.u32 %v87, 4294901760
    %2367 = vmatpush.msra.mxu0 %v2366
    %v2368 = vand.u32 %v79, 4294901760
    %2369 = vmatpush.msra.mxu0 %v2368
    %v2370 = vand.u32 %v71, 4294901760
    %2371 = vmatpush.msra.mxu0 %v2370
    %v2372 = vand.u32 %v63, 4294901760
    %2373 = vmatpush.msra.mxu0 %v2372
    %v2374 = vand.u32 %v55, 4294901760
    %2375 = vmatpush.msra.mxu0 %v2374
    %v2376 = vand.u32 %v47, 4294901760
    %2377 = vmatpush.msra.mxu0 %v2376
    %v2378 = vand.u32 %v42, 4294901760
    %v2379 = vsub.f32 %v42, %v2378
    %v2380 = vand.u32 %v2379, 4294901760
    %v2381 = vsub.f32 %v2379, %v2380
    %v2382 = vand.u32 %v2381, 4294901760
    %2383 = vmatmul.f32.gmra.mxu0 %v2382
    %v2384 = vpop.f32.mrf.mxu0
    %v2385 = vadd.f32 0.0, %v2384
    %2386 = vdwg.mxu0
    %v2387 = vand.u32 %v167, 4294901760
    %v2388 = vsub.f32 %v167, %v2387
    %v2389 = vand.u32 %v2388, 4294901760
    %v2390 = vsub.f32 %v2388, %v2389
    %v2391 = vand.u32 %v2390, 4294901760
    %2392 = vmatpush.msra.mxu0 %v2391
    %v2393 = vand.u32 %v159, 4294901760
    %v2394 = vsub.f32 %v159, %v2393
    %v2395 = vand.u32 %v2394, 4294901760
    %v2396 = vsub.f32 %v2394, %v2395
    %v2397 = vand.u32 %v2396, 4294901760
    %2398 = vmatpush.msra.mxu0 %v2397
    %v2399 = vand.u32 %v151, 4294901760
    %v2400 = vsub.f32 %v151, %v2399
    %v2401 = vand.u32 %v2400, 4294901760
    %v2402 = vsub.f32 %v2400, %v2401
    %v2403 = vand.u32 %v2402, 4294901760
    %2404 = vmatpush.msra.mxu0 %v2403
    %v2405 = vand.u32 %v143, 4294901760
    %v2406 = vsub.f32 %v143, %v2405
    %v2407 = vand.u32 %v2406, 4294901760
    %v2408 = vsub.f32 %v2406, %v2407
    %v2409 = vand.u32 %v2408, 4294901760
    %2410 = vmatpush.msra.mxu0 %v2409
    %v2411 = vand.u32 %v135, 4294901760
    %v2412 = vsub.f32 %v135, %v2411
    %v2413 = vand.u32 %v2412, 4294901760
    %v2414 = vsub.f32 %v2412, %v2413
    %v2415 = vand.u32 %v2414, 4294901760
    %2416 = vmatpush.msra.mxu0 %v2415
    %v2417 = vand.u32 %v127, 4294901760
    %v2418 = vsub.f32 %v127, %v2417
    %v2419 = vand.u32 %v2418, 4294901760
    %v2420 = vsub.f32 %v2418, %v2419
    %v2421 = vand.u32 %v2420, 4294901760
    %2422 = vmatpush.msra.mxu0 %v2421
    %v2423 = vand.u32 %v119, 4294901760
    %v2424 = vsub.f32 %v119, %v2423
    %v2425 = vand.u32 %v2424, 4294901760
    %v2426 = vsub.f32 %v2424, %v2425
    %v2427 = vand.u32 %v2426, 4294901760
    %2428 = vmatpush.msra.mxu0 %v2427
    %v2429 = vand.u32 %v111, 4294901760
    %v2430 = vsub.f32 %v111, %v2429
    %v2431 = vand.u32 %v2430, 4294901760
    %v2432 = vsub.f32 %v2430, %v2431
    %v2433 = vand.u32 %v2432, 4294901760
    %2434 = vmatpush.msra.mxu0 %v2433
    %v2435 = vand.u32 %v103, 4294901760
    %v2436 = vsub.f32 %v103, %v2435
    %v2437 = vand.u32 %v2436, 4294901760
    %v2438 = vsub.f32 %v2436, %v2437
    %v2439 = vand.u32 %v2438, 4294901760
    %2440 = vmatpush.msra.mxu0 %v2439
    %v2441 = vand.u32 %v95, 4294901760
    %v2442 = vsub.f32 %v95, %v2441
    %v2443 = vand.u32 %v2442, 4294901760
    %v2444 = vsub.f32 %v2442, %v2443
    %v2445 = vand.u32 %v2444, 4294901760
    %2446 = vmatpush.msra.mxu0 %v2445
    %v2447 = vand.u32 %v87, 4294901760
    %v2448 = vsub.f32 %v87, %v2447
    %v2449 = vand.u32 %v2448, 4294901760
    %v2450 = vsub.f32 %v2448, %v2449
    %v2451 = vand.u32 %v2450, 4294901760
    %2452 = vmatpush.msra.mxu0 %v2451
    %v2453 = vand.u32 %v79, 4294901760
    %v2454 = vsub.f32 %v79, %v2453
    %v2455 = vand.u32 %v2454, 4294901760
    %v2456 = vsub.f32 %v2454, %v2455
    %v2457 = vand.u32 %v2456, 4294901760
    %2458 = vmatpush.msra.mxu0 %v2457
    %v2459 = vand.u32 %v71, 4294901760
    %v2460 = vsub.f32 %v71, %v2459
    %v2461 = vand.u32 %v2460, 4294901760
    %v2462 = vsub.f32 %v2460, %v2461
    %v2463 = vand.u32 %v2462, 4294901760
    %2464 = vmatpush.msra.mxu0 %v2463
    %v2465 = vand.u32 %v63, 4294901760
    %v2466 = vsub.f32 %v63, %v2465
    %v2467 = vand.u32 %v2466, 4294901760
    %v2468 = vsub.f32 %v2466, %v2467
    %v2469 = vand.u32 %v2468, 4294901760
    %2470 = vmatpush.msra.mxu0 %v2469
    %v2471 = vand.u32 %v55, 4294901760
    %v2472 = vsub.f32 %v55, %v2471
    %v2473 = vand.u32 %v2472, 4294901760
    %v2474 = vsub.f32 %v2472, %v2473
    %v2475 = vand.u32 %v2474, 4294901760
    %2476 = vmatpush.msra.mxu0 %v2475
    %v2477 = vand.u32 %v47, 4294901760
    %v2478 = vsub.f32 %v47, %v2477
    %v2479 = vand.u32 %v2478, 4294901760
    %v2480 = vsub.f32 %v2478, %v2479
    %v2481 = vand.u32 %v2480, 4294901760
    %2482 = vmatpush.msra.mxu0 %v2481
    %v2483 = vand.u32 %v42, 4294901760
    %2484 = vmatmul.f32.gmra.mxu0 %v2483
    %v2485 = vpop.f32.mrf.mxu0
    %v2486 = vadd.f32 %v2385, %v2485
    %2487 = vdwg.mxu0
    %v2488 = vand.u32 %v167, 4294901760
    %v2489 = vsub.f32 %v167, %v2488
    %2490 = vmatpush.msra.mxu0 %v2489
    %v2491 = vand.u32 %v159, 4294901760
    %v2492 = vsub.f32 %v159, %v2491
    %2493 = vmatpush.msra.mxu0 %v2492
    %v2494 = vand.u32 %v151, 4294901760
    %v2495 = vsub.f32 %v151, %v2494
    %2496 = vmatpush.msra.mxu0 %v2495
    %v2497 = vand.u32 %v143, 4294901760
    %v2498 = vsub.f32 %v143, %v2497
    %2499 = vmatpush.msra.mxu0 %v2498
    %v2500 = vand.u32 %v135, 4294901760
    %v2501 = vsub.f32 %v135, %v2500
    %2502 = vmatpush.msra.mxu0 %v2501
    %v2503 = vand.u32 %v127, 4294901760
    %v2504 = vsub.f32 %v127, %v2503
    %2505 = vmatpush.msra.mxu0 %v2504
    %v2506 = vand.u32 %v119, 4294901760
    %v2507 = vsub.f32 %v119, %v2506
    %2508 = vmatpush.msra.mxu0 %v2507
    %v2509 = vand.u32 %v111, 4294901760
    %v2510 = vsub.f32 %v111, %v2509
    %2511 = vmatpush.msra.mxu0 %v2510
    %v2512 = vand.u32 %v103, 4294901760
    %v2513 = vsub.f32 %v103, %v2512
    %2514 = vmatpush.msra.mxu0 %v2513
    %v2515 = vand.u32 %v95, 4294901760
    %v2516 = vsub.f32 %v95, %v2515
    %2517 = vmatpush.msra.mxu0 %v2516
    %v2518 = vand.u32 %v87, 4294901760
    %v2519 = vsub.f32 %v87, %v2518
    %2520 = vmatpush.msra.mxu0 %v2519
    %v2521 = vand.u32 %v79, 4294901760
    %v2522 = vsub.f32 %v79, %v2521
    %2523 = vmatpush.msra.mxu0 %v2522
    %v2524 = vand.u32 %v71, 4294901760
    %v2525 = vsub.f32 %v71, %v2524
    %2526 = vmatpush.msra.mxu0 %v2525
    %v2527 = vand.u32 %v63, 4294901760
    %v2528 = vsub.f32 %v63, %v2527
    %2529 = vmatpush.msra.mxu0 %v2528
    %v2530 = vand.u32 %v55, 4294901760
    %v2531 = vsub.f32 %v55, %v2530
    %2532 = vmatpush.msra.mxu0 %v2531
    %v2533 = vand.u32 %v47, 4294901760
    %v2534 = vsub.f32 %v47, %v2533
    %2535 = vmatpush.msra.mxu0 %v2534
    %v2536 = vand.u32 %v42, 4294901760
    %v2537 = vsub.f32 %v42, %v2536
    %2538 = vmatmul.f32.gmra.mxu0 %v2537
    %v2539 = vpop.f32.mrf.mxu0
    %v2540 = vadd.f32 %v2486, %v2539
    %2541 = vdwg.mxu0
    %v2542 = vand.u32 %v167, 4294901760
    %2543 = vmatpush.msra.mxu0 %v2542
    %v2544 = vand.u32 %v159, 4294901760
    %2545 = vmatpush.msra.mxu0 %v2544
    %v2546 = vand.u32 %v151, 4294901760
    %2547 = vmatpush.msra.mxu0 %v2546
    %v2548 = vand.u32 %v143, 4294901760
    %2549 = vmatpush.msra.mxu0 %v2548
    %v2550 = vand.u32 %v135, 4294901760
    %2551 = vmatpush.msra.mxu0 %v2550
    %v2552 = vand.u32 %v127, 4294901760
    %2553 = vmatpush.msra.mxu0 %v2552
    %v2554 = vand.u32 %v119, 4294901760
    %2555 = vmatpush.msra.mxu0 %v2554
    %v2556 = vand.u32 %v111, 4294901760
    %2557 = vmatpush.msra.mxu0 %v2556
    %v2558 = vand.u32 %v103, 4294901760
    %2559 = vmatpush.msra.mxu0 %v2558
    %v2560 = vand.u32 %v95, 4294901760
    %2561 = vmatpush.msra.mxu0 %v2560
    %v2562 = vand.u32 %v87, 4294901760
    %2563 = vmatpush.msra.mxu0 %v2562
    %v2564 = vand.u32 %v79, 4294901760
    %2565 = vmatpush.msra.mxu0 %v2564
    %v2566 = vand.u32 %v71, 4294901760
    %2567 = vmatpush.msra.mxu0 %v2566
    %v2568 = vand.u32 %v63, 4294901760
    %2569 = vmatpush.msra.mxu0 %v2568
    %v2570 = vand.u32 %v55, 4294901760
    %2571 = vmatpush.msra.mxu0 %v2570
    %v2572 = vand.u32 %v47, 4294901760
    %2573 = vmatpush.msra.mxu0 %v2572
    %v2574 = vand.u32 %v42, 4294901760
    %v2575 = vsub.f32 %v42, %v2574
    %v2576 = vand.u32 %v2575, 4294901760
    %2577 = vmatmul.f32.gmra.mxu0 %v2576
    %v2578 = vpop.f32.mrf.mxu0
    %v2579 = vadd.f32 %v2540, %v2578
    %2580 = vdwg.mxu0
    %v2581 = vand.u32 %v167, 4294901760
    %v2582 = vsub.f32 %v167, %v2581
    %v2583 = vand.u32 %v2582, 4294901760
    %2584 = vmatpush.msra.mxu0 %v2583
    %v2585 = vand.u32 %v159, 4294901760
    %v2586 = vsub.f32 %v159, %v2585
    %v2587 = vand.u32 %v2586, 4294901760
    %2588 = vmatpush.msra.mxu0 %v2587
    %v2589 = vand.u32 %v151, 4294901760
    %v2590 = vsub.f32 %v151, %v2589
    %v2591 = vand.u32 %v2590, 4294901760
    %2592 = vmatpush.msra.mxu0 %v2591
    %v2593 = vand.u32 %v143, 4294901760
    %v2594 = vsub.f32 %v143, %v2593
    %v2595 = vand.u32 %v2594, 4294901760
    %2596 = vmatpush.msra.mxu0 %v2595
    %v2597 = vand.u32 %v135, 4294901760
    %v2598 = vsub.f32 %v135, %v2597
    %v2599 = vand.u32 %v2598, 4294901760
    %2600 = vmatpush.msra.mxu0 %v2599
    %v2601 = vand.u32 %v127, 4294901760
    %v2602 = vsub.f32 %v127, %v2601
    %v2603 = vand.u32 %v2602, 4294901760
    %2604 = vmatpush.msra.mxu0 %v2603
    %v2605 = vand.u32 %v119, 4294901760
    %v2606 = vsub.f32 %v119, %v2605
    %v2607 = vand.u32 %v2606, 4294901760
    %2608 = vmatpush.msra.mxu0 %v2607
    %v2609 = vand.u32 %v111, 4294901760
    %v2610 = vsub.f32 %v111, %v2609
    %v2611 = vand.u32 %v2610, 4294901760
    %2612 = vmatpush.msra.mxu0 %v2611
    %v2613 = vand.u32 %v103, 4294901760
    %v2614 = vsub.f32 %v103, %v2613
    %v2615 = vand.u32 %v2614, 4294901760
    %2616 = vmatpush.msra.mxu0 %v2615
    %v2617 = vand.u32 %v95, 4294901760
    %v2618 = vsub.f32 %v95, %v2617
    %v2619 = vand.u32 %v2618, 4294901760
    %2620 = vmatpush.msra.mxu0 %v2619
    %v2621 = vand.u32 %v87, 4294901760
    %v2622 = vsub.f32 %v87, %v2621
    %v2623 = vand.u32 %v2622, 4294901760
    %2624 = vmatpush.msra.mxu0 %v2623
    %v2625 = vand.u32 %v79, 4294901760
    %v2626 = vsub.f32 %v79, %v2625
    %v2627 = vand.u32 %v2626, 4294901760
    %2628 = vmatpush.msra.mxu0 %v2627
    %v2629 = vand.u32 %v71, 4294901760
    %v2630 = vsub.f32 %v71, %v2629
    %v2631 = vand.u32 %v2630, 4294901760
    %2632 = vmatpush.msra.mxu0 %v2631
    %v2633 = vand.u32 %v63, 4294901760
    %v2634 = vsub.f32 %v63, %v2633
    %v2635 = vand.u32 %v2634, 4294901760
    %2636 = vmatpush.msra.mxu0 %v2635
    %v2637 = vand.u32 %v55, 4294901760
    %v2638 = vsub.f32 %v55, %v2637
    %v2639 = vand.u32 %v2638, 4294901760
    %2640 = vmatpush.msra.mxu0 %v2639
    %v2641 = vand.u32 %v47, 4294901760
    %v2642 = vsub.f32 %v47, %v2641
    %v2643 = vand.u32 %v2642, 4294901760
    %2644 = vmatpush.msra.mxu0 %v2643
    %v2645 = vand.u32 %v42, 4294901760
    %2646 = vmatmul.f32.gmra.mxu0 %v2645
    %v2647 = vpop.f32.mrf.mxu0
    %v2648 = vadd.f32 %v2579, %v2647
    %2649 = vdwg.mxu0
    %v2650 = vand.u32 %v167, 4294901760
    %2651 = vmatpush.msra.mxu0 %v2650
    %v2652 = vand.u32 %v159, 4294901760
    %2653 = vmatpush.msra.mxu0 %v2652
    %v2654 = vand.u32 %v151, 4294901760
    %2655 = vmatpush.msra.mxu0 %v2654
    %v2656 = vand.u32 %v143, 4294901760
    %2657 = vmatpush.msra.mxu0 %v2656
    %v2658 = vand.u32 %v135, 4294901760
    %2659 = vmatpush.msra.mxu0 %v2658
    %v2660 = vand.u32 %v127, 4294901760
    %2661 = vmatpush.msra.mxu0 %v2660
    %v2662 = vand.u32 %v119, 4294901760
    %2663 = vmatpush.msra.mxu0 %v2662
    %v2664 = vand.u32 %v111, 4294901760
    %2665 = vmatpush.msra.mxu0 %v2664
    %v2666 = vand.u32 %v103, 4294901760
    %2667 = vmatpush.msra.mxu0 %v2666
    %v2668 = vand.u32 %v95, 4294901760
    %2669 = vmatpush.msra.mxu0 %v2668
    %v2670 = vand.u32 %v87, 4294901760
    %2671 = vmatpush.msra.mxu0 %v2670
    %v2672 = vand.u32 %v79, 4294901760
    %2673 = vmatpush.msra.mxu0 %v2672
    %v2674 = vand.u32 %v71, 4294901760
    %2675 = vmatpush.msra.mxu0 %v2674
    %v2676 = vand.u32 %v63, 4294901760
    %2677 = vmatpush.msra.mxu0 %v2676
    %v2678 = vand.u32 %v55, 4294901760
    %2679 = vmatpush.msra.mxu0 %v2678
    %v2680 = vand.u32 %v47, 4294901760
    %2681 = vmatpush.msra.mxu0 %v2680
    %v2682 = vand.u32 %v42, 4294901760
    %2683 = vmatmul.f32.gmra.mxu0 %v2682
    %v2684 = vpop.f32.mrf.mxu0
    %v2685 = vadd.f32 %v2648, %v2684
    %2686 = vdwg.mxu0
    %v2687 = vand.u32 %v295, 4294901760
    %2688 = vmatpush.msra.mxu0 %v2687
    %v2689 = vand.u32 %v287, 4294901760
    %2690 = vmatpush.msra.mxu0 %v2689
    %v2691 = vand.u32 %v279, 4294901760
    %2692 = vmatpush.msra.mxu0 %v2691
    %v2693 = vand.u32 %v271, 4294901760
    %2694 = vmatpush.msra.mxu0 %v2693
    %v2695 = vand.u32 %v263, 4294901760
    %2696 = vmatpush.msra.mxu0 %v2695
    %v2697 = vand.u32 %v255, 4294901760
    %2698 = vmatpush.msra.mxu0 %v2697
    %v2699 = vand.u32 %v247, 4294901760
    %2700 = vmatpush.msra.mxu0 %v2699
    %v2701 = vand.u32 %v239, 4294901760
    %2702 = vmatpush.msra.mxu0 %v2701
    %v2703 = vand.u32 %v231, 4294901760
    %2704 = vmatpush.msra.mxu0 %v2703
    %v2705 = vand.u32 %v223, 4294901760
    %2706 = vmatpush.msra.mxu0 %v2705
    %v2707 = vand.u32 %v215, 4294901760
    %2708 = vmatpush.msra.mxu0 %v2707
    %v2709 = vand.u32 %v207, 4294901760
    %2710 = vmatpush.msra.mxu0 %v2709
    %v2711 = vand.u32 %v199, 4294901760
    %2712 = vmatpush.msra.mxu0 %v2711
    %v2713 = vand.u32 %v191, 4294901760
    %2714 = vmatpush.msra.mxu0 %v2713
    %v2715 = vand.u32 %v183, 4294901760
    %2716 = vmatpush.msra.mxu0 %v2715
    %v2717 = vand.u32 %v175, 4294901760
    %2718 = vmatpush.msra.mxu0 %v2717
    %v2719 = vand.u32 %v43, 4294901760
    %v2720 = vsub.f32 %v43, %v2719
    %v2721 = vand.u32 %v2720, 4294901760
    %v2722 = vsub.f32 %v2720, %v2721
    %v2723 = vand.u32 %v2722, 4294901760
    %2724 = vmatmul.f32.gmra.mxu0 %v2723
    %v2725 = vpop.f32.mrf.mxu0
    %v2726 = vadd.f32 %v2685, %v2725
    %2727 = vdwg.mxu0
    %v2728 = vand.u32 %v295, 4294901760
    %v2729 = vsub.f32 %v295, %v2728
    %v2730 = vand.u32 %v2729, 4294901760
    %v2731 = vsub.f32 %v2729, %v2730
    %v2732 = vand.u32 %v2731, 4294901760
    %2733 = vmatpush.msra.mxu0 %v2732
    %v2734 = vand.u32 %v287, 4294901760
    %v2735 = vsub.f32 %v287, %v2734
    %v2736 = vand.u32 %v2735, 4294901760
    %v2737 = vsub.f32 %v2735, %v2736
    %v2738 = vand.u32 %v2737, 4294901760
    %2739 = vmatpush.msra.mxu0 %v2738
    %v2740 = vand.u32 %v279, 4294901760
    %v2741 = vsub.f32 %v279, %v2740
    %v2742 = vand.u32 %v2741, 4294901760
    %v2743 = vsub.f32 %v2741, %v2742
    %v2744 = vand.u32 %v2743, 4294901760
    %2745 = vmatpush.msra.mxu0 %v2744
    %v2746 = vand.u32 %v271, 4294901760
    %v2747 = vsub.f32 %v271, %v2746
    %v2748 = vand.u32 %v2747, 4294901760
    %v2749 = vsub.f32 %v2747, %v2748
    %v2750 = vand.u32 %v2749, 4294901760
    %2751 = vmatpush.msra.mxu0 %v2750
    %v2752 = vand.u32 %v263, 4294901760
    %v2753 = vsub.f32 %v263, %v2752
    %v2754 = vand.u32 %v2753, 4294901760
    %v2755 = vsub.f32 %v2753, %v2754
    %v2756 = vand.u32 %v2755, 4294901760
    %2757 = vmatpush.msra.mxu0 %v2756
    %v2758 = vand.u32 %v255, 4294901760
    %v2759 = vsub.f32 %v255, %v2758
    %v2760 = vand.u32 %v2759, 4294901760
    %v2761 = vsub.f32 %v2759, %v2760
    %v2762 = vand.u32 %v2761, 4294901760
    %2763 = vmatpush.msra.mxu0 %v2762
    %v2764 = vand.u32 %v247, 4294901760
    %v2765 = vsub.f32 %v247, %v2764
    %v2766 = vand.u32 %v2765, 4294901760
    %v2767 = vsub.f32 %v2765, %v2766
    %v2768 = vand.u32 %v2767, 4294901760
    %2769 = vmatpush.msra.mxu0 %v2768
    %v2770 = vand.u32 %v239, 4294901760
    %v2771 = vsub.f32 %v239, %v2770
    %v2772 = vand.u32 %v2771, 4294901760
    %v2773 = vsub.f32 %v2771, %v2772
    %v2774 = vand.u32 %v2773, 4294901760
    %2775 = vmatpush.msra.mxu0 %v2774
    %v2776 = vand.u32 %v231, 4294901760
    %v2777 = vsub.f32 %v231, %v2776
    %v2778 = vand.u32 %v2777, 4294901760
    %v2779 = vsub.f32 %v2777, %v2778
    %v2780 = vand.u32 %v2779, 4294901760
    %2781 = vmatpush.msra.mxu0 %v2780
    %v2782 = vand.u32 %v223, 4294901760
    %v2783 = vsub.f32 %v223, %v2782
    %v2784 = vand.u32 %v2783, 4294901760
    %v2785 = vsub.f32 %v2783, %v2784
    %v2786 = vand.u32 %v2785, 4294901760
    %2787 = vmatpush.msra.mxu0 %v2786
    %v2788 = vand.u32 %v215, 4294901760
    %v2789 = vsub.f32 %v215, %v2788
    %v2790 = vand.u32 %v2789, 4294901760
    %v2791 = vsub.f32 %v2789, %v2790
    %v2792 = vand.u32 %v2791, 4294901760
    %2793 = vmatpush.msra.mxu0 %v2792
    %v2794 = vand.u32 %v207, 4294901760
    %v2795 = vsub.f32 %v207, %v2794
    %v2796 = vand.u32 %v2795, 4294901760
    %v2797 = vsub.f32 %v2795, %v2796
    %v2798 = vand.u32 %v2797, 4294901760
    %2799 = vmatpush.msra.mxu0 %v2798
    %v2800 = vand.u32 %v199, 4294901760
    %v2801 = vsub.f32 %v199, %v2800
    %v2802 = vand.u32 %v2801, 4294901760
    %v2803 = vsub.f32 %v2801, %v2802
    %v2804 = vand.u32 %v2803, 4294901760
    %2805 = vmatpush.msra.mxu0 %v2804
    %v2806 = vand.u32 %v191, 4294901760
    %v2807 = vsub.f32 %v191, %v2806
    %v2808 = vand.u32 %v2807, 4294901760
    %v2809 = vsub.f32 %v2807, %v2808
    %v2810 = vand.u32 %v2809, 4294901760
    %2811 = vmatpush.msra.mxu0 %v2810
    %v2812 = vand.u32 %v183, 4294901760
    %v2813 = vsub.f32 %v183, %v2812
    %v2814 = vand.u32 %v2813, 4294901760
    %v2815 = vsub.f32 %v2813, %v2814
    %v2816 = vand.u32 %v2815, 4294901760
    %2817 = vmatpush.msra.mxu0 %v2816
    %v2818 = vand.u32 %v175, 4294901760
    %v2819 = vsub.f32 %v175, %v2818
    %v2820 = vand.u32 %v2819, 4294901760
    %v2821 = vsub.f32 %v2819, %v2820
    %v2822 = vand.u32 %v2821, 4294901760
    %2823 = vmatpush.msra.mxu0 %v2822
    %v2824 = vand.u32 %v43, 4294901760
    %2825 = vmatmul.f32.gmra.mxu0 %v2824
    %v2826 = vpop.f32.mrf.mxu0
    %v2827 = vadd.f32 %v2726, %v2826
    %2828 = vdwg.mxu0
    %v2829 = vand.u32 %v295, 4294901760
    %v2830 = vsub.f32 %v295, %v2829
    %2831 = vmatpush.msra.mxu0 %v2830
    %v2832 = vand.u32 %v287, 4294901760
    %v2833 = vsub.f32 %v287, %v2832
    %2834 = vmatpush.msra.mxu0 %v2833
    %v2835 = vand.u32 %v279, 4294901760
    %v2836 = vsub.f32 %v279, %v2835
    %2837 = vmatpush.msra.mxu0 %v2836
    %v2838 = vand.u32 %v271, 4294901760
    %v2839 = vsub.f32 %v271, %v2838
    %2840 = vmatpush.msra.mxu0 %v2839
    %v2841 = vand.u32 %v263, 4294901760
    %v2842 = vsub.f32 %v263, %v2841
    %2843 = vmatpush.msra.mxu0 %v2842
    %v2844 = vand.u32 %v255, 4294901760
    %v2845 = vsub.f32 %v255, %v2844
    %2846 = vmatpush.msra.mxu0 %v2845
    %v2847 = vand.u32 %v247, 4294901760
    %v2848 = vsub.f32 %v247, %v2847
    %2849 = vmatpush.msra.mxu0 %v2848
    %v2850 = vand.u32 %v239, 4294901760
    %v2851 = vsub.f32 %v239, %v2850
    %2852 = vmatpush.msra.mxu0 %v2851
    %v2853 = vand.u32 %v231, 4294901760
    %v2854 = vsub.f32 %v231, %v2853
    %2855 = vmatpush.msra.mxu0 %v2854
    %v2856 = vand.u32 %v223, 4294901760
    %v2857 = vsub.f32 %v223, %v2856
    %2858 = vmatpush.msra.mxu0 %v2857
    %v2859 = vand.u32 %v215, 4294901760
    %v2860 = vsub.f32 %v215, %v2859
    %2861 = vmatpush.msra.mxu0 %v2860
    %v2862 = vand.u32 %v207, 4294901760
    %v2863 = vsub.f32 %v207, %v2862
    %2864 = vmatpush.msra.mxu0 %v2863
    %v2865 = vand.u32 %v199, 4294901760
    %v2866 = vsub.f32 %v199, %v2865
    %2867 = vmatpush.msra.mxu0 %v2866
    %v2868 = vand.u32 %v191, 4294901760
    %v2869 = vsub.f32 %v191, %v2868
    %2870 = vmatpush.msra.mxu0 %v2869
    %v2871 = vand.u32 %v183, 4294901760
    %v2872 = vsub.f32 %v183, %v2871
    %2873 = vmatpush.msra.mxu0 %v2872
    %v2874 = vand.u32 %v175, 4294901760
    %v2875 = vsub.f32 %v175, %v2874
    %2876 = vmatpush.msra.mxu0 %v2875
    %v2877 = vand.u32 %v43, 4294901760
    %v2878 = vsub.f32 %v43, %v2877
    %2879 = vmatmul.f32.gmra.mxu0 %v2878
    %v2880 = vpop.f32.mrf.mxu0
    %v2881 = vadd.f32 %v2827, %v2880
    %2882 = vdwg.mxu0
    %v2883 = vand.u32 %v295, 4294901760
    %2884 = vmatpush.msra.mxu0 %v2883
    %v2885 = vand.u32 %v287, 4294901760
    %2886 = vmatpush.msra.mxu0 %v2885
    %v2887 = vand.u32 %v279, 4294901760
    %2888 = vmatpush.msra.mxu0 %v2887
    %v2889 = vand.u32 %v271, 4294901760
    %2890 = vmatpush.msra.mxu0 %v2889
    %v2891 = vand.u32 %v263, 4294901760
    %2892 = vmatpush.msra.mxu0 %v2891
    %v2893 = vand.u32 %v255, 4294901760
    %2894 = vmatpush.msra.mxu0 %v2893
    %v2895 = vand.u32 %v247, 4294901760
    %2896 = vmatpush.msra.mxu0 %v2895
    %v2897 = vand.u32 %v239, 4294901760
    %2898 = vmatpush.msra.mxu0 %v2897
    %v2899 = vand.u32 %v231, 4294901760
    %2900 = vmatpush.msra.mxu0 %v2899
    %v2901 = vand.u32 %v223, 4294901760
    %2902 = vmatpush.msra.mxu0 %v2901
    %v2903 = vand.u32 %v215, 4294901760
    %2904 = vmatpush.msra.mxu0 %v2903
    %v2905 = vand.u32 %v207, 4294901760
    %2906 = vmatpush.msra.mxu0 %v2905
    %v2907 = vand.u32 %v199, 4294901760
    %2908 = vmatpush.msra.mxu0 %v2907
    %v2909 = vand.u32 %v191, 4294901760
    %2910 = vmatpush.msra.mxu0 %v2909
    %v2911 = vand.u32 %v183, 4294901760
    %2912 = vmatpush.msra.mxu0 %v2911
    %v2913 = vand.u32 %v175, 4294901760
    %2914 = vmatpush.msra.mxu0 %v2913
    %v2915 = vand.u32 %v43, 4294901760
    %v2916 = vsub.f32 %v43, %v2915
    %v2917 = vand.u32 %v2916, 4294901760
    %2918 = vmatmul.f32.gmra.mxu0 %v2917
    %v2919 = vpop.f32.mrf.mxu0
    %v2920 = vadd.f32 %v2881, %v2919
    %2921 = vdwg.mxu0
    %v2922 = vand.u32 %v295, 4294901760
    %v2923 = vsub.f32 %v295, %v2922
    %v2924 = vand.u32 %v2923, 4294901760
    %2925 = vmatpush.msra.mxu0 %v2924
    %v2926 = vand.u32 %v287, 4294901760
    %v2927 = vsub.f32 %v287, %v2926
    %v2928 = vand.u32 %v2927, 4294901760
    %2929 = vmatpush.msra.mxu0 %v2928
    %v2930 = vand.u32 %v279, 4294901760
    %v2931 = vsub.f32 %v279, %v2930
    %v2932 = vand.u32 %v2931, 4294901760
    %2933 = vmatpush.msra.mxu0 %v2932
    %v2934 = vand.u32 %v271, 4294901760
    %v2935 = vsub.f32 %v271, %v2934
    %v2936 = vand.u32 %v2935, 4294901760
    %2937 = vmatpush.msra.mxu0 %v2936
    %v2938 = vand.u32 %v263, 4294901760
    %v2939 = vsub.f32 %v263, %v2938
    %v2940 = vand.u32 %v2939, 4294901760
    %2941 = vmatpush.msra.mxu0 %v2940
    %v2942 = vand.u32 %v255, 4294901760
    %v2943 = vsub.f32 %v255, %v2942
    %v2944 = vand.u32 %v2943, 4294901760
    %2945 = vmatpush.msra.mxu0 %v2944
    %v2946 = vand.u32 %v247, 4294901760
    %v2947 = vsub.f32 %v247, %v2946
    %v2948 = vand.u32 %v2947, 4294901760
    %2949 = vmatpush.msra.mxu0 %v2948
    %v2950 = vand.u32 %v239, 4294901760
    %v2951 = vsub.f32 %v239, %v2950
    %v2952 = vand.u32 %v2951, 4294901760
    %2953 = vmatpush.msra.mxu0 %v2952
    %v2954 = vand.u32 %v231, 4294901760
    %v2955 = vsub.f32 %v231, %v2954
    %v2956 = vand.u32 %v2955, 4294901760
    %2957 = vmatpush.msra.mxu0 %v2956
    %v2958 = vand.u32 %v223, 4294901760
    %v2959 = vsub.f32 %v223, %v2958
    %v2960 = vand.u32 %v2959, 4294901760
    %2961 = vmatpush.msra.mxu0 %v2960
    %v2962 = vand.u32 %v215, 4294901760
    %v2963 = vsub.f32 %v215, %v2962
    %v2964 = vand.u32 %v2963, 4294901760
    %2965 = vmatpush.msra.mxu0 %v2964
    %v2966 = vand.u32 %v207, 4294901760
    %v2967 = vsub.f32 %v207, %v2966
    %v2968 = vand.u32 %v2967, 4294901760
    %2969 = vmatpush.msra.mxu0 %v2968
    %v2970 = vand.u32 %v199, 4294901760
    %v2971 = vsub.f32 %v199, %v2970
    %v2972 = vand.u32 %v2971, 4294901760
    %2973 = vmatpush.msra.mxu0 %v2972
    %v2974 = vand.u32 %v191, 4294901760
    %v2975 = vsub.f32 %v191, %v2974
    %v2976 = vand.u32 %v2975, 4294901760
    %2977 = vmatpush.msra.mxu0 %v2976
    %v2978 = vand.u32 %v183, 4294901760
    %v2979 = vsub.f32 %v183, %v2978
    %v2980 = vand.u32 %v2979, 4294901760
    %2981 = vmatpush.msra.mxu0 %v2980
    %v2982 = vand.u32 %v175, 4294901760
    %v2983 = vsub.f32 %v175, %v2982
    %v2984 = vand.u32 %v2983, 4294901760
    %2985 = vmatpush.msra.mxu0 %v2984
    %v2986 = vand.u32 %v43, 4294901760
    %2987 = vmatmul.f32.gmra.mxu0 %v2986
    %v2988 = vpop.f32.mrf.mxu0
    %v2989 = vadd.f32 %v2920, %v2988
    %2990 = vdwg.mxu0
    %v2991 = vand.u32 %v295, 4294901760
    %2992 = vmatpush.msra.mxu0 %v2991
    %v2993 = vand.u32 %v287, 4294901760
    %2994 = vmatpush.msra.mxu0 %v2993
    %v2995 = vand.u32 %v279, 4294901760
    %2996 = vmatpush.msra.mxu0 %v2995
    %v2997 = vand.u32 %v271, 4294901760
    %2998 = vmatpush.msra.mxu0 %v2997
    %v2999 = vand.u32 %v263, 4294901760
    %3000 = vmatpush.msra.mxu0 %v2999
    %v3001 = vand.u32 %v255, 4294901760
    %3002 = vmatpush.msra.mxu0 %v3001
    %v3003 = vand.u32 %v247, 4294901760
    %3004 = vmatpush.msra.mxu0 %v3003
    %v3005 = vand.u32 %v239, 4294901760
    %3006 = vmatpush.msra.mxu0 %v3005
    %v3007 = vand.u32 %v231, 4294901760
    %3008 = vmatpush.msra.mxu0 %v3007
    %v3009 = vand.u32 %v223, 4294901760
    %3010 = vmatpush.msra.mxu0 %v3009
    %v3011 = vand.u32 %v215, 4294901760
    %3012 = vmatpush.msra.mxu0 %v3011
    %v3013 = vand.u32 %v207, 4294901760
    %3014 = vmatpush.msra.mxu0 %v3013
    %v3015 = vand.u32 %v199, 4294901760
    %3016 = vmatpush.msra.mxu0 %v3015
    %v3017 = vand.u32 %v191, 4294901760
    %3018 = vmatpush.msra.mxu0 %v3017
    %v3019 = vand.u32 %v183, 4294901760
    %3020 = vmatpush.msra.mxu0 %v3019
    %v3021 = vand.u32 %v175, 4294901760
    %3022 = vmatpush.msra.mxu0 %v3021
    %v3023 = vand.u32 %v43, 4294901760
    %3024 = vmatmul.f32.gmra.mxu0 %v3023
    %v3025 = vpop.f32.mrf.mxu0
    %v3026 = vadd.f32 %v2989, %v3025
    %3027 = vdwg.mxu0
    %v3028 = vand.u32 %v168, 4294901760
    %3029 = vmatpush.msra.mxu0 %v3028
    %v3030 = vand.u32 %v160, 4294901760
    %3031 = vmatpush.msra.mxu0 %v3030
    %v3032 = vand.u32 %v152, 4294901760
    %3033 = vmatpush.msra.mxu0 %v3032
    %v3034 = vand.u32 %v144, 4294901760
    %3035 = vmatpush.msra.mxu0 %v3034
    %v3036 = vand.u32 %v136, 4294901760
    %3037 = vmatpush.msra.mxu0 %v3036
    %v3038 = vand.u32 %v128, 4294901760
    %3039 = vmatpush.msra.mxu0 %v3038
    %v3040 = vand.u32 %v120, 4294901760
    %3041 = vmatpush.msra.mxu0 %v3040
    %v3042 = vand.u32 %v112, 4294901760
    %3043 = vmatpush.msra.mxu0 %v3042
    %v3044 = vand.u32 %v104, 4294901760
    %3045 = vmatpush.msra.mxu0 %v3044
    %v3046 = vand.u32 %v96, 4294901760
    %3047 = vmatpush.msra.mxu0 %v3046
    %v3048 = vand.u32 %v88, 4294901760
    %3049 = vmatpush.msra.mxu0 %v3048
    %v3050 = vand.u32 %v80, 4294901760
    %3051 = vmatpush.msra.mxu0 %v3050
    %v3052 = vand.u32 %v72, 4294901760
    %3053 = vmatpush.msra.mxu0 %v3052
    %v3054 = vand.u32 %v64, 4294901760
    %3055 = vmatpush.msra.mxu0 %v3054
    %v3056 = vand.u32 %v56, 4294901760
    %3057 = vmatpush.msra.mxu0 %v3056
    %v3058 = vand.u32 %v48, 4294901760
    %3059 = vmatpush.msra.mxu0 %v3058
    %v3060 = vand.u32 %v42, 4294901760
    %v3061 = vsub.f32 %v42, %v3060
    %v3062 = vand.u32 %v3061, 4294901760
    %v3063 = vsub.f32 %v3061, %v3062
    %v3064 = vand.u32 %v3063, 4294901760
    %3065 = vmatmul.f32.gmra.mxu0 %v3064
    %v3066 = vpop.f32.mrf.mxu0
    %v3067 = vadd.f32 0.0, %v3066
    %3068 = vdwg.mxu0
    %v3069 = vand.u32 %v168, 4294901760
    %v3070 = vsub.f32 %v168, %v3069
    %v3071 = vand.u32 %v3070, 4294901760
    %v3072 = vsub.f32 %v3070, %v3071
    %v3073 = vand.u32 %v3072, 4294901760
    %3074 = vmatpush.msra.mxu0 %v3073
    %v3075 = vand.u32 %v160, 4294901760
    %v3076 = vsub.f32 %v160, %v3075
    %v3077 = vand.u32 %v3076, 4294901760
    %v3078 = vsub.f32 %v3076, %v3077
    %v3079 = vand.u32 %v3078, 4294901760
    %3080 = vmatpush.msra.mxu0 %v3079
    %v3081 = vand.u32 %v152, 4294901760
    %v3082 = vsub.f32 %v152, %v3081
    %v3083 = vand.u32 %v3082, 4294901760
    %v3084 = vsub.f32 %v3082, %v3083
    %v3085 = vand.u32 %v3084, 4294901760
    %3086 = vmatpush.msra.mxu0 %v3085
    %v3087 = vand.u32 %v144, 4294901760
    %v3088 = vsub.f32 %v144, %v3087
    %v3089 = vand.u32 %v3088, 4294901760
    %v3090 = vsub.f32 %v3088, %v3089
    %v3091 = vand.u32 %v3090, 4294901760
    %3092 = vmatpush.msra.mxu0 %v3091
    %v3093 = vand.u32 %v136, 4294901760
    %v3094 = vsub.f32 %v136, %v3093
    %v3095 = vand.u32 %v3094, 4294901760
    %v3096 = vsub.f32 %v3094, %v3095
    %v3097 = vand.u32 %v3096, 4294901760
    %3098 = vmatpush.msra.mxu0 %v3097
    %v3099 = vand.u32 %v128, 4294901760
    %v3100 = vsub.f32 %v128, %v3099
    %v3101 = vand.u32 %v3100, 4294901760
    %v3102 = vsub.f32 %v3100, %v3101
    %v3103 = vand.u32 %v3102, 4294901760
    %3104 = vmatpush.msra.mxu0 %v3103
    %v3105 = vand.u32 %v120, 4294901760
    %v3106 = vsub.f32 %v120, %v3105
    %v3107 = vand.u32 %v3106, 4294901760
    %v3108 = vsub.f32 %v3106, %v3107
    %v3109 = vand.u32 %v3108, 4294901760
    %3110 = vmatpush.msra.mxu0 %v3109
    %v3111 = vand.u32 %v112, 4294901760
    %v3112 = vsub.f32 %v112, %v3111
    %v3113 = vand.u32 %v3112, 4294901760
    %v3114 = vsub.f32 %v3112, %v3113
    %v3115 = vand.u32 %v3114, 4294901760
    %3116 = vmatpush.msra.mxu0 %v3115
    %v3117 = vand.u32 %v104, 4294901760
    %v3118 = vsub.f32 %v104, %v3117
    %v3119 = vand.u32 %v3118, 4294901760
    %v3120 = vsub.f32 %v3118, %v3119
    %v3121 = vand.u32 %v3120, 4294901760
    %3122 = vmatpush.msra.mxu0 %v3121
    %v3123 = vand.u32 %v96, 4294901760
    %v3124 = vsub.f32 %v96, %v3123
    %v3125 = vand.u32 %v3124, 4294901760
    %v3126 = vsub.f32 %v3124, %v3125
    %v3127 = vand.u32 %v3126, 4294901760
    %3128 = vmatpush.msra.mxu0 %v3127
    %v3129 = vand.u32 %v88, 4294901760
    %v3130 = vsub.f32 %v88, %v3129
    %v3131 = vand.u32 %v3130, 4294901760
    %v3132 = vsub.f32 %v3130, %v3131
    %v3133 = vand.u32 %v3132, 4294901760
    %3134 = vmatpush.msra.mxu0 %v3133
    %v3135 = vand.u32 %v80, 4294901760
    %v3136 = vsub.f32 %v80, %v3135
    %v3137 = vand.u32 %v3136, 4294901760
    %v3138 = vsub.f32 %v3136, %v3137
    %v3139 = vand.u32 %v3138, 4294901760
    %3140 = vmatpush.msra.mxu0 %v3139
    %v3141 = vand.u32 %v72, 4294901760
    %v3142 = vsub.f32 %v72, %v3141
    %v3143 = vand.u32 %v3142, 4294901760
    %v3144 = vsub.f32 %v3142, %v3143
    %v3145 = vand.u32 %v3144, 4294901760
    %3146 = vmatpush.msra.mxu0 %v3145
    %v3147 = vand.u32 %v64, 4294901760
    %v3148 = vsub.f32 %v64, %v3147
    %v3149 = vand.u32 %v3148, 4294901760
    %v3150 = vsub.f32 %v3148, %v3149
    %v3151 = vand.u32 %v3150, 4294901760
    %3152 = vmatpush.msra.mxu0 %v3151
    %v3153 = vand.u32 %v56, 4294901760
    %v3154 = vsub.f32 %v56, %v3153
    %v3155 = vand.u32 %v3154, 4294901760
    %v3156 = vsub.f32 %v3154, %v3155
    %v3157 = vand.u32 %v3156, 4294901760
    %3158 = vmatpush.msra.mxu0 %v3157
    %v3159 = vand.u32 %v48, 4294901760
    %v3160 = vsub.f32 %v48, %v3159
    %v3161 = vand.u32 %v3160, 4294901760
    %v3162 = vsub.f32 %v3160, %v3161
    %v3163 = vand.u32 %v3162, 4294901760
    %3164 = vmatpush.msra.mxu0 %v3163
    %v3165 = vand.u32 %v42, 4294901760
    %3166 = vmatmul.f32.gmra.mxu0 %v3165
    %v3167 = vpop.f32.mrf.mxu0
    %v3168 = vadd.f32 %v3067, %v3167
    %3169 = vdwg.mxu0
    %v3170 = vand.u32 %v168, 4294901760
    %v3171 = vsub.f32 %v168, %v3170
    %3172 = vmatpush.msra.mxu0 %v3171
    %v3173 = vand.u32 %v160, 4294901760
    %v3174 = vsub.f32 %v160, %v3173
    %3175 = vmatpush.msra.mxu0 %v3174
    %v3176 = vand.u32 %v152, 4294901760
    %v3177 = vsub.f32 %v152, %v3176
    %3178 = vmatpush.msra.mxu0 %v3177
    %v3179 = vand.u32 %v144, 4294901760
    %v3180 = vsub.f32 %v144, %v3179
    %3181 = vmatpush.msra.mxu0 %v3180
    %v3182 = vand.u32 %v136, 4294901760
    %v3183 = vsub.f32 %v136, %v3182
    %3184 = vmatpush.msra.mxu0 %v3183
    %v3185 = vand.u32 %v128, 4294901760
    %v3186 = vsub.f32 %v128, %v3185
    %3187 = vmatpush.msra.mxu0 %v3186
    %v3188 = vand.u32 %v120, 4294901760
    %v3189 = vsub.f32 %v120, %v3188
    %3190 = vmatpush.msra.mxu0 %v3189
    %v3191 = vand.u32 %v112, 4294901760
    %v3192 = vsub.f32 %v112, %v3191
    %3193 = vmatpush.msra.mxu0 %v3192
    %v3194 = vand.u32 %v104, 4294901760
    %v3195 = vsub.f32 %v104, %v3194
    %3196 = vmatpush.msra.mxu0 %v3195
    %v3197 = vand.u32 %v96, 4294901760
    %v3198 = vsub.f32 %v96, %v3197
    %3199 = vmatpush.msra.mxu0 %v3198
    %v3200 = vand.u32 %v88, 4294901760
    %v3201 = vsub.f32 %v88, %v3200
    %3202 = vmatpush.msra.mxu0 %v3201
    %v3203 = vand.u32 %v80, 4294901760
    %v3204 = vsub.f32 %v80, %v3203
    %3205 = vmatpush.msra.mxu0 %v3204
    %v3206 = vand.u32 %v72, 4294901760
    %v3207 = vsub.f32 %v72, %v3206
    %3208 = vmatpush.msra.mxu0 %v3207
    %v3209 = vand.u32 %v64, 4294901760
    %v3210 = vsub.f32 %v64, %v3209
    %3211 = vmatpush.msra.mxu0 %v3210
    %v3212 = vand.u32 %v56, 4294901760
    %v3213 = vsub.f32 %v56, %v3212
    %3214 = vmatpush.msra.mxu0 %v3213
    %v3215 = vand.u32 %v48, 4294901760
    %v3216 = vsub.f32 %v48, %v3215
    %3217 = vmatpush.msra.mxu0 %v3216
    %v3218 = vand.u32 %v42, 4294901760
    %v3219 = vsub.f32 %v42, %v3218
    %3220 = vmatmul.f32.gmra.mxu0 %v3219
    %v3221 = vpop.f32.mrf.mxu0
    %v3222 = vadd.f32 %v3168, %v3221
    %3223 = vdwg.mxu0
    %v3224 = vand.u32 %v168, 4294901760
    %3225 = vmatpush.msra.mxu0 %v3224
    %v3226 = vand.u32 %v160, 4294901760
    %3227 = vmatpush.msra.mxu0 %v3226
    %v3228 = vand.u32 %v152, 4294901760
    %3229 = vmatpush.msra.mxu0 %v3228
    %v3230 = vand.u32 %v144, 4294901760
    %3231 = vmatpush.msra.mxu0 %v3230
    %v3232 = vand.u32 %v136, 4294901760
    %3233 = vmatpush.msra.mxu0 %v3232
    %v3234 = vand.u32 %v128, 4294901760
    %3235 = vmatpush.msra.mxu0 %v3234
    %v3236 = vand.u32 %v120, 4294901760
    %3237 = vmatpush.msra.mxu0 %v3236
    %v3238 = vand.u32 %v112, 4294901760
    %3239 = vmatpush.msra.mxu0 %v3238
    %v3240 = vand.u32 %v104, 4294901760
    %3241 = vmatpush.msra.mxu0 %v3240
    %v3242 = vand.u32 %v96, 4294901760
    %3243 = vmatpush.msra.mxu0 %v3242
    %v3244 = vand.u32 %v88, 4294901760
    %3245 = vmatpush.msra.mxu0 %v3244
    %v3246 = vand.u32 %v80, 4294901760
    %3247 = vmatpush.msra.mxu0 %v3246
    %v3248 = vand.u32 %v72, 4294901760
    %3249 = vmatpush.msra.mxu0 %v3248
    %v3250 = vand.u32 %v64, 4294901760
    %3251 = vmatpush.msra.mxu0 %v3250
    %v3252 = vand.u32 %v56, 4294901760
    %3253 = vmatpush.msra.mxu0 %v3252
    %v3254 = vand.u32 %v48, 4294901760
    %3255 = vmatpush.msra.mxu0 %v3254
    %v3256 = vand.u32 %v42, 4294901760
    %v3257 = vsub.f32 %v42, %v3256
    %v3258 = vand.u32 %v3257, 4294901760
    %3259 = vmatmul.f32.gmra.mxu0 %v3258
    %v3260 = vpop.f32.mrf.mxu0
    %v3261 = vadd.f32 %v3222, %v3260
    %3262 = vdwg.mxu0
    %v3263 = vand.u32 %v168, 4294901760
    %v3264 = vsub.f32 %v168, %v3263
    %v3265 = vand.u32 %v3264, 4294901760
    %3266 = vmatpush.msra.mxu0 %v3265
    %v3267 = vand.u32 %v160, 4294901760
    %v3268 = vsub.f32 %v160, %v3267
    %v3269 = vand.u32 %v3268, 4294901760
    %3270 = vmatpush.msra.mxu0 %v3269
    %v3271 = vand.u32 %v152, 4294901760
    %v3272 = vsub.f32 %v152, %v3271
    %v3273 = vand.u32 %v3272, 4294901760
    %3274 = vmatpush.msra.mxu0 %v3273
    %v3275 = vand.u32 %v144, 4294901760
    %v3276 = vsub.f32 %v144, %v3275
    %v3277 = vand.u32 %v3276, 4294901760
    %3278 = vmatpush.msra.mxu0 %v3277
    %v3279 = vand.u32 %v136, 4294901760
    %v3280 = vsub.f32 %v136, %v3279
    %v3281 = vand.u32 %v3280, 4294901760
    %3282 = vmatpush.msra.mxu0 %v3281
    %v3283 = vand.u32 %v128, 4294901760
    %v3284 = vsub.f32 %v128, %v3283
    %v3285 = vand.u32 %v3284, 4294901760
    %3286 = vmatpush.msra.mxu0 %v3285
    %v3287 = vand.u32 %v120, 4294901760
    %v3288 = vsub.f32 %v120, %v3287
    %v3289 = vand.u32 %v3288, 4294901760
    %3290 = vmatpush.msra.mxu0 %v3289
    %v3291 = vand.u32 %v112, 4294901760
    %v3292 = vsub.f32 %v112, %v3291
    %v3293 = vand.u32 %v3292, 4294901760
    %3294 = vmatpush.msra.mxu0 %v3293
    %v3295 = vand.u32 %v104, 4294901760
    %v3296 = vsub.f32 %v104, %v3295
    %v3297 = vand.u32 %v3296, 4294901760
    %3298 = vmatpush.msra.mxu0 %v3297
    %v3299 = vand.u32 %v96, 4294901760
    %v3300 = vsub.f32 %v96, %v3299
    %v3301 = vand.u32 %v3300, 4294901760
    %3302 = vmatpush.msra.mxu0 %v3301
    %v3303 = vand.u32 %v88, 4294901760
    %v3304 = vsub.f32 %v88, %v3303
    %v3305 = vand.u32 %v3304, 4294901760
    %3306 = vmatpush.msra.mxu0 %v3305
    %v3307 = vand.u32 %v80, 4294901760
    %v3308 = vsub.f32 %v80, %v3307
    %v3309 = vand.u32 %v3308, 4294901760
    %3310 = vmatpush.msra.mxu0 %v3309
    %v3311 = vand.u32 %v72, 4294901760
    %v3312 = vsub.f32 %v72, %v3311
    %v3313 = vand.u32 %v3312, 4294901760
    %3314 = vmatpush.msra.mxu0 %v3313
    %v3315 = vand.u32 %v64, 4294901760
    %v3316 = vsub.f32 %v64, %v3315
    %v3317 = vand.u32 %v3316, 4294901760
    %3318 = vmatpush.msra.mxu0 %v3317
    %v3319 = vand.u32 %v56, 4294901760
    %v3320 = vsub.f32 %v56, %v3319
    %v3321 = vand.u32 %v3320, 4294901760
    %3322 = vmatpush.msra.mxu0 %v3321
    %v3323 = vand.u32 %v48, 4294901760
    %v3324 = vsub.f32 %v48, %v3323
    %v3325 = vand.u32 %v3324, 4294901760
    %3326 = vmatpush.msra.mxu0 %v3325
    %v3327 = vand.u32 %v42, 4294901760
    %3328 = vmatmul.f32.gmra.mxu0 %v3327
    %v3329 = vpop.f32.mrf.mxu0
    %v3330 = vadd.f32 %v3261, %v3329
    %3331 = vdwg.mxu0
    %v3332 = vand.u32 %v168, 4294901760
    %3333 = vmatpush.msra.mxu0 %v3332
    %v3334 = vand.u32 %v160, 4294901760
    %3335 = vmatpush.msra.mxu0 %v3334
    %v3336 = vand.u32 %v152, 4294901760
    %3337 = vmatpush.msra.mxu0 %v3336
    %v3338 = vand.u32 %v144, 4294901760
    %3339 = vmatpush.msra.mxu0 %v3338
    %v3340 = vand.u32 %v136, 4294901760
    %3341 = vmatpush.msra.mxu0 %v3340
    %v3342 = vand.u32 %v128, 4294901760
    %3343 = vmatpush.msra.mxu0 %v3342
    %v3344 = vand.u32 %v120, 4294901760
    %3345 = vmatpush.msra.mxu0 %v3344
    %v3346 = vand.u32 %v112, 4294901760
    %3347 = vmatpush.msra.mxu0 %v3346
    %v3348 = vand.u32 %v104, 4294901760
    %3349 = vmatpush.msra.mxu0 %v3348
    %v3350 = vand.u32 %v96, 4294901760
    %3351 = vmatpush.msra.mxu0 %v3350
    %v3352 = vand.u32 %v88, 4294901760
    %3353 = vmatpush.msra.mxu0 %v3352
    %v3354 = vand.u32 %v80, 4294901760
    %3355 = vmatpush.msra.mxu0 %v3354
    %v3356 = vand.u32 %v72, 4294901760
    %3357 = vmatpush.msra.mxu0 %v3356
    %v3358 = vand.u32 %v64, 4294901760
    %3359 = vmatpush.msra.mxu0 %v3358
    %v3360 = vand.u32 %v56, 4294901760
    %3361 = vmatpush.msra.mxu0 %v3360
    %v3362 = vand.u32 %v48, 4294901760
    %3363 = vmatpush.msra.mxu0 %v3362
    %v3364 = vand.u32 %v42, 4294901760
    %3365 = vmatmul.f32.gmra.mxu0 %v3364
    %v3366 = vpop.f32.mrf.mxu0
    %v3367 = vadd.f32 %v3330, %v3366
    %3368 = vdwg.mxu0
    %v3369 = vand.u32 %v296, 4294901760
    %3370 = vmatpush.msra.mxu0 %v3369
    %v3371 = vand.u32 %v288, 4294901760
    %3372 = vmatpush.msra.mxu0 %v3371
    %v3373 = vand.u32 %v280, 4294901760
    %3374 = vmatpush.msra.mxu0 %v3373
    %v3375 = vand.u32 %v272, 4294901760
    %3376 = vmatpush.msra.mxu0 %v3375
    %v3377 = vand.u32 %v264, 4294901760
    %3378 = vmatpush.msra.mxu0 %v3377
    %v3379 = vand.u32 %v256, 4294901760
    %3380 = vmatpush.msra.mxu0 %v3379
    %v3381 = vand.u32 %v248, 4294901760
    %3382 = vmatpush.msra.mxu0 %v3381
    %v3383 = vand.u32 %v240, 4294901760
    %3384 = vmatpush.msra.mxu0 %v3383
    %v3385 = vand.u32 %v232, 4294901760
    %3386 = vmatpush.msra.mxu0 %v3385
    %v3387 = vand.u32 %v224, 4294901760
    %3388 = vmatpush.msra.mxu0 %v3387
    %v3389 = vand.u32 %v216, 4294901760
    %3390 = vmatpush.msra.mxu0 %v3389
    %v3391 = vand.u32 %v208, 4294901760
    %3392 = vmatpush.msra.mxu0 %v3391
    %v3393 = vand.u32 %v200, 4294901760
    %3394 = vmatpush.msra.mxu0 %v3393
    %v3395 = vand.u32 %v192, 4294901760
    %3396 = vmatpush.msra.mxu0 %v3395
    %v3397 = vand.u32 %v184, 4294901760
    %3398 = vmatpush.msra.mxu0 %v3397
    %v3399 = vand.u32 %v176, 4294901760
    %3400 = vmatpush.msra.mxu0 %v3399
    %v3401 = vand.u32 %v43, 4294901760
    %v3402 = vsub.f32 %v43, %v3401
    %v3403 = vand.u32 %v3402, 4294901760
    %v3404 = vsub.f32 %v3402, %v3403
    %v3405 = vand.u32 %v3404, 4294901760
    %3406 = vmatmul.f32.gmra.mxu0 %v3405
    %v3407 = vpop.f32.mrf.mxu0
    %v3408 = vadd.f32 %v3367, %v3407
    %3409 = vdwg.mxu0
    %v3410 = vand.u32 %v296, 4294901760
    %v3411 = vsub.f32 %v296, %v3410
    %v3412 = vand.u32 %v3411, 4294901760
    %v3413 = vsub.f32 %v3411, %v3412
    %v3414 = vand.u32 %v3413, 4294901760
    %3415 = vmatpush.msra.mxu0 %v3414
    %v3416 = vand.u32 %v288, 4294901760
    %v3417 = vsub.f32 %v288, %v3416
    %v3418 = vand.u32 %v3417, 4294901760
    %v3419 = vsub.f32 %v3417, %v3418
    %v3420 = vand.u32 %v3419, 4294901760
    %3421 = vmatpush.msra.mxu0 %v3420
    %v3422 = vand.u32 %v280, 4294901760
    %v3423 = vsub.f32 %v280, %v3422
    %v3424 = vand.u32 %v3423, 4294901760
    %v3425 = vsub.f32 %v3423, %v3424
    %v3426 = vand.u32 %v3425, 4294901760
    %3427 = vmatpush.msra.mxu0 %v3426
    %v3428 = vand.u32 %v272, 4294901760
    %v3429 = vsub.f32 %v272, %v3428
    %v3430 = vand.u32 %v3429, 4294901760
    %v3431 = vsub.f32 %v3429, %v3430
    %v3432 = vand.u32 %v3431, 4294901760
    %3433 = vmatpush.msra.mxu0 %v3432
    %v3434 = vand.u32 %v264, 4294901760
    %v3435 = vsub.f32 %v264, %v3434
    %v3436 = vand.u32 %v3435, 4294901760
    %v3437 = vsub.f32 %v3435, %v3436
    %v3438 = vand.u32 %v3437, 4294901760
    %3439 = vmatpush.msra.mxu0 %v3438
    %v3440 = vand.u32 %v256, 4294901760
    %v3441 = vsub.f32 %v256, %v3440
    %v3442 = vand.u32 %v3441, 4294901760
    %v3443 = vsub.f32 %v3441, %v3442
    %v3444 = vand.u32 %v3443, 4294901760
    %3445 = vmatpush.msra.mxu0 %v3444
    %v3446 = vand.u32 %v248, 4294901760
    %v3447 = vsub.f32 %v248, %v3446
    %v3448 = vand.u32 %v3447, 4294901760
    %v3449 = vsub.f32 %v3447, %v3448
    %v3450 = vand.u32 %v3449, 4294901760
    %3451 = vmatpush.msra.mxu0 %v3450
    %v3452 = vand.u32 %v240, 4294901760
    %v3453 = vsub.f32 %v240, %v3452
    %v3454 = vand.u32 %v3453, 4294901760
    %v3455 = vsub.f32 %v3453, %v3454
    %v3456 = vand.u32 %v3455, 4294901760
    %3457 = vmatpush.msra.mxu0 %v3456
    %v3458 = vand.u32 %v232, 4294901760
    %v3459 = vsub.f32 %v232, %v3458
    %v3460 = vand.u32 %v3459, 4294901760
    %v3461 = vsub.f32 %v3459, %v3460
    %v3462 = vand.u32 %v3461, 4294901760
    %3463 = vmatpush.msra.mxu0 %v3462
    %v3464 = vand.u32 %v224, 4294901760
    %v3465 = vsub.f32 %v224, %v3464
    %v3466 = vand.u32 %v3465, 4294901760
    %v3467 = vsub.f32 %v3465, %v3466
    %v3468 = vand.u32 %v3467, 4294901760
    %3469 = vmatpush.msra.mxu0 %v3468
    %v3470 = vand.u32 %v216, 4294901760
    %v3471 = vsub.f32 %v216, %v3470
    %v3472 = vand.u32 %v3471, 4294901760
    %v3473 = vsub.f32 %v3471, %v3472
    %v3474 = vand.u32 %v3473, 4294901760
    %3475 = vmatpush.msra.mxu0 %v3474
    %v3476 = vand.u32 %v208, 4294901760
    %v3477 = vsub.f32 %v208, %v3476
    %v3478 = vand.u32 %v3477, 4294901760
    %v3479 = vsub.f32 %v3477, %v3478
    %v3480 = vand.u32 %v3479, 4294901760
    %3481 = vmatpush.msra.mxu0 %v3480
    %v3482 = vand.u32 %v200, 4294901760
    %v3483 = vsub.f32 %v200, %v3482
    %v3484 = vand.u32 %v3483, 4294901760
    %v3485 = vsub.f32 %v3483, %v3484
    %v3486 = vand.u32 %v3485, 4294901760
    %3487 = vmatpush.msra.mxu0 %v3486
    %v3488 = vand.u32 %v192, 4294901760
    %v3489 = vsub.f32 %v192, %v3488
    %v3490 = vand.u32 %v3489, 4294901760
    %v3491 = vsub.f32 %v3489, %v3490
    %v3492 = vand.u32 %v3491, 4294901760
    %3493 = vmatpush.msra.mxu0 %v3492
    %v3494 = vand.u32 %v184, 4294901760
    %v3495 = vsub.f32 %v184, %v3494
    %v3496 = vand.u32 %v3495, 4294901760
    %v3497 = vsub.f32 %v3495, %v3496
    %v3498 = vand.u32 %v3497, 4294901760
    %3499 = vmatpush.msra.mxu0 %v3498
    %v3500 = vand.u32 %v176, 4294901760
    %v3501 = vsub.f32 %v176, %v3500
    %v3502 = vand.u32 %v3501, 4294901760
    %v3503 = vsub.f32 %v3501, %v3502
    %v3504 = vand.u32 %v3503, 4294901760
    %3505 = vmatpush.msra.mxu0 %v3504
    %v3506 = vand.u32 %v43, 4294901760
    %3507 = vmatmul.f32.gmra.mxu0 %v3506
    %v3508 = vpop.f32.mrf.mxu0
    %v3509 = vadd.f32 %v3408, %v3508
    %3510 = vdwg.mxu0
    %v3511 = vand.u32 %v296, 4294901760
    %v3512 = vsub.f32 %v296, %v3511
    %3513 = vmatpush.msra.mxu0 %v3512
    %v3514 = vand.u32 %v288, 4294901760
    %v3515 = vsub.f32 %v288, %v3514
    %3516 = vmatpush.msra.mxu0 %v3515
    %v3517 = vand.u32 %v280, 4294901760
    %v3518 = vsub.f32 %v280, %v3517
    %3519 = vmatpush.msra.mxu0 %v3518
    %v3520 = vand.u32 %v272, 4294901760
    %v3521 = vsub.f32 %v272, %v3520
    %3522 = vmatpush.msra.mxu0 %v3521
    %v3523 = vand.u32 %v264, 4294901760
    %v3524 = vsub.f32 %v264, %v3523
    %3525 = vmatpush.msra.mxu0 %v3524
    %v3526 = vand.u32 %v256, 4294901760
    %v3527 = vsub.f32 %v256, %v3526
    %3528 = vmatpush.msra.mxu0 %v3527
    %v3529 = vand.u32 %v248, 4294901760
    %v3530 = vsub.f32 %v248, %v3529
    %3531 = vmatpush.msra.mxu0 %v3530
    %v3532 = vand.u32 %v240, 4294901760
    %v3533 = vsub.f32 %v240, %v3532
    %3534 = vmatpush.msra.mxu0 %v3533
    %v3535 = vand.u32 %v232, 4294901760
    %v3536 = vsub.f32 %v232, %v3535
    %3537 = vmatpush.msra.mxu0 %v3536
    %v3538 = vand.u32 %v224, 4294901760
    %v3539 = vsub.f32 %v224, %v3538
    %3540 = vmatpush.msra.mxu0 %v3539
    %v3541 = vand.u32 %v216, 4294901760
    %v3542 = vsub.f32 %v216, %v3541
    %3543 = vmatpush.msra.mxu0 %v3542
    %v3544 = vand.u32 %v208, 4294901760
    %v3545 = vsub.f32 %v208, %v3544
    %3546 = vmatpush.msra.mxu0 %v3545
    %v3547 = vand.u32 %v200, 4294901760
    %v3548 = vsub.f32 %v200, %v3547
    %3549 = vmatpush.msra.mxu0 %v3548
    %v3550 = vand.u32 %v192, 4294901760
    %v3551 = vsub.f32 %v192, %v3550
    %3552 = vmatpush.msra.mxu0 %v3551
    %v3553 = vand.u32 %v184, 4294901760
    %v3554 = vsub.f32 %v184, %v3553
    %3555 = vmatpush.msra.mxu0 %v3554
    %v3556 = vand.u32 %v176, 4294901760
    %v3557 = vsub.f32 %v176, %v3556
    %3558 = vmatpush.msra.mxu0 %v3557
    %v3559 = vand.u32 %v43, 4294901760
    %v3560 = vsub.f32 %v43, %v3559
    %3561 = vmatmul.f32.gmra.mxu0 %v3560
    %v3562 = vpop.f32.mrf.mxu0
    %v3563 = vadd.f32 %v3509, %v3562
    %3564 = vdwg.mxu0
    %v3565 = vand.u32 %v296, 4294901760
    %3566 = vmatpush.msra.mxu0 %v3565
    %v3567 = vand.u32 %v288, 4294901760
    %3568 = vmatpush.msra.mxu0 %v3567
    %v3569 = vand.u32 %v280, 4294901760
    %3570 = vmatpush.msra.mxu0 %v3569
    %v3571 = vand.u32 %v272, 4294901760
    %3572 = vmatpush.msra.mxu0 %v3571
    %v3573 = vand.u32 %v264, 4294901760
    %3574 = vmatpush.msra.mxu0 %v3573
    %v3575 = vand.u32 %v256, 4294901760
    %3576 = vmatpush.msra.mxu0 %v3575
    %v3577 = vand.u32 %v248, 4294901760
    %3578 = vmatpush.msra.mxu0 %v3577
    %v3579 = vand.u32 %v240, 4294901760
    %3580 = vmatpush.msra.mxu0 %v3579
    %v3581 = vand.u32 %v232, 4294901760
    %3582 = vmatpush.msra.mxu0 %v3581
    %v3583 = vand.u32 %v224, 4294901760
    %3584 = vmatpush.msra.mxu0 %v3583
    %v3585 = vand.u32 %v216, 4294901760
    %3586 = vmatpush.msra.mxu0 %v3585
    %v3587 = vand.u32 %v208, 4294901760
    %3588 = vmatpush.msra.mxu0 %v3587
    %v3589 = vand.u32 %v200, 4294901760
    %3590 = vmatpush.msra.mxu0 %v3589
    %v3591 = vand.u32 %v192, 4294901760
    %3592 = vmatpush.msra.mxu0 %v3591
    %v3593 = vand.u32 %v184, 4294901760
    %3594 = vmatpush.msra.mxu0 %v3593
    %v3595 = vand.u32 %v176, 4294901760
    %3596 = vmatpush.msra.mxu0 %v3595
    %v3597 = vand.u32 %v43, 4294901760
    %v3598 = vsub.f32 %v43, %v3597
    %v3599 = vand.u32 %v3598, 4294901760
    %3600 = vmatmul.f32.gmra.mxu0 %v3599
    %v3601 = vpop.f32.mrf.mxu0
    %v3602 = vadd.f32 %v3563, %v3601
    %3603 = vdwg.mxu0
    %v3604 = vand.u32 %v296, 4294901760
    %v3605 = vsub.f32 %v296, %v3604
    %v3606 = vand.u32 %v3605, 4294901760
    %3607 = vmatpush.msra.mxu0 %v3606
    %v3608 = vand.u32 %v288, 4294901760
    %v3609 = vsub.f32 %v288, %v3608
    %v3610 = vand.u32 %v3609, 4294901760
    %3611 = vmatpush.msra.mxu0 %v3610
    %v3612 = vand.u32 %v280, 4294901760
    %v3613 = vsub.f32 %v280, %v3612
    %v3614 = vand.u32 %v3613, 4294901760
    %3615 = vmatpush.msra.mxu0 %v3614
    %v3616 = vand.u32 %v272, 4294901760
    %v3617 = vsub.f32 %v272, %v3616
    %v3618 = vand.u32 %v3617, 4294901760
    %3619 = vmatpush.msra.mxu0 %v3618
    %v3620 = vand.u32 %v264, 4294901760
    %v3621 = vsub.f32 %v264, %v3620
    %v3622 = vand.u32 %v3621, 4294901760
    %3623 = vmatpush.msra.mxu0 %v3622
    %v3624 = vand.u32 %v256, 4294901760
    %v3625 = vsub.f32 %v256, %v3624
    %v3626 = vand.u32 %v3625, 4294901760
    %3627 = vmatpush.msra.mxu0 %v3626
    %v3628 = vand.u32 %v248, 4294901760
    %v3629 = vsub.f32 %v248, %v3628
    %v3630 = vand.u32 %v3629, 4294901760
    %3631 = vmatpush.msra.mxu0 %v3630
    %v3632 = vand.u32 %v240, 4294901760
    %v3633 = vsub.f32 %v240, %v3632
    %v3634 = vand.u32 %v3633, 4294901760
    %3635 = vmatpush.msra.mxu0 %v3634
    %v3636 = vand.u32 %v232, 4294901760
    %v3637 = vsub.f32 %v232, %v3636
    %v3638 = vand.u32 %v3637, 4294901760
    %3639 = vmatpush.msra.mxu0 %v3638
    %v3640 = vand.u32 %v224, 4294901760
    %v3641 = vsub.f32 %v224, %v3640
    %v3642 = vand.u32 %v3641, 4294901760
    %3643 = vmatpush.msra.mxu0 %v3642
    %v3644 = vand.u32 %v216, 4294901760
    %v3645 = vsub.f32 %v216, %v3644
    %v3646 = vand.u32 %v3645, 4294901760
    %3647 = vmatpush.msra.mxu0 %v3646
    %v3648 = vand.u32 %v208, 4294901760
    %v3649 = vsub.f32 %v208, %v3648
    %v3650 = vand.u32 %v3649, 4294901760
    %3651 = vmatpush.msra.mxu0 %v3650
    %v3652 = vand.u32 %v200, 4294901760
    %v3653 = vsub.f32 %v200, %v3652
    %v3654 = vand.u32 %v3653, 4294901760
    %3655 = vmatpush.msra.mxu0 %v3654
    %v3656 = vand.u32 %v192, 4294901760
    %v3657 = vsub.f32 %v192, %v3656
    %v3658 = vand.u32 %v3657, 4294901760
    %3659 = vmatpush.msra.mxu0 %v3658
    %v3660 = vand.u32 %v184, 4294901760
    %v3661 = vsub.f32 %v184, %v3660
    %v3662 = vand.u32 %v3661, 4294901760
    %3663 = vmatpush.msra.mxu0 %v3662
    %v3664 = vand.u32 %v176, 4294901760
    %v3665 = vsub.f32 %v176, %v3664
    %v3666 = vand.u32 %v3665, 4294901760
    %3667 = vmatpush.msra.mxu0 %v3666
    %v3668 = vand.u32 %v43, 4294901760
    %3669 = vmatmul.f32.gmra.mxu0 %v3668
    %v3670 = vpop.f32.mrf.mxu0
    %v3671 = vadd.f32 %v3602, %v3670
    %3672 = vdwg.mxu0
    %v3673 = vand.u32 %v296, 4294901760
    %3674 = vmatpush.msra.mxu0 %v3673
    %v3675 = vand.u32 %v288, 4294901760
    %3676 = vmatpush.msra.mxu0 %v3675
    %v3677 = vand.u32 %v280, 4294901760
    %3678 = vmatpush.msra.mxu0 %v3677
    %v3679 = vand.u32 %v272, 4294901760
    %3680 = vmatpush.msra.mxu0 %v3679
    %v3681 = vand.u32 %v264, 4294901760
    %3682 = vmatpush.msra.mxu0 %v3681
    %v3683 = vand.u32 %v256, 4294901760
    %3684 = vmatpush.msra.mxu0 %v3683
    %v3685 = vand.u32 %v248, 4294901760
    %3686 = vmatpush.msra.mxu0 %v3685
    %v3687 = vand.u32 %v240, 4294901760
    %3688 = vmatpush.msra.mxu0 %v3687
    %v3689 = vand.u32 %v232, 4294901760
    %3690 = vmatpush.msra.mxu0 %v3689
    %v3691 = vand.u32 %v224, 4294901760
    %3692 = vmatpush.msra.mxu0 %v3691
    %v3693 = vand.u32 %v216, 4294901760
    %3694 = vmatpush.msra.mxu0 %v3693
    %v3695 = vand.u32 %v208, 4294901760
    %3696 = vmatpush.msra.mxu0 %v3695
    %v3697 = vand.u32 %v200, 4294901760
    %3698 = vmatpush.msra.mxu0 %v3697
    %v3699 = vand.u32 %v192, 4294901760
    %3700 = vmatpush.msra.mxu0 %v3699
    %v3701 = vand.u32 %v184, 4294901760
    %3702 = vmatpush.msra.mxu0 %v3701
    %v3703 = vand.u32 %v176, 4294901760
    %3704 = vmatpush.msra.mxu0 %v3703
    %v3705 = vand.u32 %v43, 4294901760
    %3706 = vmatmul.f32.gmra.mxu0 %v3705
    %v3707 = vpop.f32.mrf.mxu0
    %v3708 = vadd.f32 %v3671, %v3707
    %3709 = vdwg.mxu0
    %v3710 = vand.u32 %v169, 4294901760
    %3711 = vmatpush.msra.mxu0 %v3710
    %v3712 = vand.u32 %v161, 4294901760
    %3713 = vmatpush.msra.mxu0 %v3712
    %v3714 = vand.u32 %v153, 4294901760
    %3715 = vmatpush.msra.mxu0 %v3714
    %v3716 = vand.u32 %v145, 4294901760
    %3717 = vmatpush.msra.mxu0 %v3716
    %v3718 = vand.u32 %v137, 4294901760
    %3719 = vmatpush.msra.mxu0 %v3718
    %v3720 = vand.u32 %v129, 4294901760
    %3721 = vmatpush.msra.mxu0 %v3720
    %v3722 = vand.u32 %v121, 4294901760
    %3723 = vmatpush.msra.mxu0 %v3722
    %v3724 = vand.u32 %v113, 4294901760
    %3725 = vmatpush.msra.mxu0 %v3724
    %v3726 = vand.u32 %v105, 4294901760
    %3727 = vmatpush.msra.mxu0 %v3726
    %v3728 = vand.u32 %v97, 4294901760
    %3729 = vmatpush.msra.mxu0 %v3728
    %v3730 = vand.u32 %v89, 4294901760
    %3731 = vmatpush.msra.mxu0 %v3730
    %v3732 = vand.u32 %v81, 4294901760
    %3733 = vmatpush.msra.mxu0 %v3732
    %v3734 = vand.u32 %v73, 4294901760
    %3735 = vmatpush.msra.mxu0 %v3734
    %v3736 = vand.u32 %v65, 4294901760
    %3737 = vmatpush.msra.mxu0 %v3736
    %v3738 = vand.u32 %v57, 4294901760
    %3739 = vmatpush.msra.mxu0 %v3738
    %v3740 = vand.u32 %v49, 4294901760
    %3741 = vmatpush.msra.mxu0 %v3740
    %v3742 = vand.u32 %v42, 4294901760
    %v3743 = vsub.f32 %v42, %v3742
    %v3744 = vand.u32 %v3743, 4294901760
    %v3745 = vsub.f32 %v3743, %v3744
    %v3746 = vand.u32 %v3745, 4294901760
    %3747 = vmatmul.f32.gmra.mxu0 %v3746
    %v3748 = vpop.f32.mrf.mxu0
    %v3749 = vadd.f32 0.0, %v3748
    %3750 = vdwg.mxu0
    %v3751 = vand.u32 %v169, 4294901760
    %v3752 = vsub.f32 %v169, %v3751
    %v3753 = vand.u32 %v3752, 4294901760
    %v3754 = vsub.f32 %v3752, %v3753
    %v3755 = vand.u32 %v3754, 4294901760
    %3756 = vmatpush.msra.mxu0 %v3755
    %v3757 = vand.u32 %v161, 4294901760
    %v3758 = vsub.f32 %v161, %v3757
    %v3759 = vand.u32 %v3758, 4294901760
    %v3760 = vsub.f32 %v3758, %v3759
    %v3761 = vand.u32 %v3760, 4294901760
    %3762 = vmatpush.msra.mxu0 %v3761
    %v3763 = vand.u32 %v153, 4294901760
    %v3764 = vsub.f32 %v153, %v3763
    %v3765 = vand.u32 %v3764, 4294901760
    %v3766 = vsub.f32 %v3764, %v3765
    %v3767 = vand.u32 %v3766, 4294901760
    %3768 = vmatpush.msra.mxu0 %v3767
    %v3769 = vand.u32 %v145, 4294901760
    %v3770 = vsub.f32 %v145, %v3769
    %v3771 = vand.u32 %v3770, 4294901760
    %v3772 = vsub.f32 %v3770, %v3771
    %v3773 = vand.u32 %v3772, 4294901760
    %3774 = vmatpush.msra.mxu0 %v3773
    %v3775 = vand.u32 %v137, 4294901760
    %v3776 = vsub.f32 %v137, %v3775
    %v3777 = vand.u32 %v3776, 4294901760
    %v3778 = vsub.f32 %v3776, %v3777
    %v3779 = vand.u32 %v3778, 4294901760
    %3780 = vmatpush.msra.mxu0 %v3779
    %v3781 = vand.u32 %v129, 4294901760
    %v3782 = vsub.f32 %v129, %v3781
    %v3783 = vand.u32 %v3782, 4294901760
    %v3784 = vsub.f32 %v3782, %v3783
    %v3785 = vand.u32 %v3784, 4294901760
    %3786 = vmatpush.msra.mxu0 %v3785
    %v3787 = vand.u32 %v121, 4294901760
    %v3788 = vsub.f32 %v121, %v3787
    %v3789 = vand.u32 %v3788, 4294901760
    %v3790 = vsub.f32 %v3788, %v3789
    %v3791 = vand.u32 %v3790, 4294901760
    %3792 = vmatpush.msra.mxu0 %v3791
    %v3793 = vand.u32 %v113, 4294901760
    %v3794 = vsub.f32 %v113, %v3793
    %v3795 = vand.u32 %v3794, 4294901760
    %v3796 = vsub.f32 %v3794, %v3795
    %v3797 = vand.u32 %v3796, 4294901760
    %3798 = vmatpush.msra.mxu0 %v3797
    %v3799 = vand.u32 %v105, 4294901760
    %v3800 = vsub.f32 %v105, %v3799
    %v3801 = vand.u32 %v3800, 4294901760
    %v3802 = vsub.f32 %v3800, %v3801
    %v3803 = vand.u32 %v3802, 4294901760
    %3804 = vmatpush.msra.mxu0 %v3803
    %v3805 = vand.u32 %v97, 4294901760
    %v3806 = vsub.f32 %v97, %v3805
    %v3807 = vand.u32 %v3806, 4294901760
    %v3808 = vsub.f32 %v3806, %v3807
    %v3809 = vand.u32 %v3808, 4294901760
    %3810 = vmatpush.msra.mxu0 %v3809
    %v3811 = vand.u32 %v89, 4294901760
    %v3812 = vsub.f32 %v89, %v3811
    %v3813 = vand.u32 %v3812, 4294901760
    %v3814 = vsub.f32 %v3812, %v3813
    %v3815 = vand.u32 %v3814, 4294901760
    %3816 = vmatpush.msra.mxu0 %v3815
    %v3817 = vand.u32 %v81, 4294901760
    %v3818 = vsub.f32 %v81, %v3817
    %v3819 = vand.u32 %v3818, 4294901760
    %v3820 = vsub.f32 %v3818, %v3819
    %v3821 = vand.u32 %v3820, 4294901760
    %3822 = vmatpush.msra.mxu0 %v3821
    %v3823 = vand.u32 %v73, 4294901760
    %v3824 = vsub.f32 %v73, %v3823
    %v3825 = vand.u32 %v3824, 4294901760
    %v3826 = vsub.f32 %v3824, %v3825
    %v3827 = vand.u32 %v3826, 4294901760
    %3828 = vmatpush.msra.mxu0 %v3827
    %v3829 = vand.u32 %v65, 4294901760
    %v3830 = vsub.f32 %v65, %v3829
    %v3831 = vand.u32 %v3830, 4294901760
    %v3832 = vsub.f32 %v3830, %v3831
    %v3833 = vand.u32 %v3832, 4294901760
    %3834 = vmatpush.msra.mxu0 %v3833
    %v3835 = vand.u32 %v57, 4294901760
    %v3836 = vsub.f32 %v57, %v3835
    %v3837 = vand.u32 %v3836, 4294901760
    %v3838 = vsub.f32 %v3836, %v3837
    %v3839 = vand.u32 %v3838, 4294901760
    %3840 = vmatpush.msra.mxu0 %v3839
    %v3841 = vand.u32 %v49, 4294901760
    %v3842 = vsub.f32 %v49, %v3841
    %v3843 = vand.u32 %v3842, 4294901760
    %v3844 = vsub.f32 %v3842, %v3843
    %v3845 = vand.u32 %v3844, 4294901760
    %3846 = vmatpush.msra.mxu0 %v3845
    %v3847 = vand.u32 %v42, 4294901760
    %3848 = vmatmul.f32.gmra.mxu0 %v3847
    %v3849 = vpop.f32.mrf.mxu0
    %v3850 = vadd.f32 %v3749, %v3849
    %3851 = vdwg.mxu0
    %v3852 = vand.u32 %v169, 4294901760
    %v3853 = vsub.f32 %v169, %v3852
    %3854 = vmatpush.msra.mxu0 %v3853
    %v3855 = vand.u32 %v161, 4294901760
    %v3856 = vsub.f32 %v161, %v3855
    %3857 = vmatpush.msra.mxu0 %v3856
    %v3858 = vand.u32 %v153, 4294901760
    %v3859 = vsub.f32 %v153, %v3858
    %3860 = vmatpush.msra.mxu0 %v3859
    %v3861 = vand.u32 %v145, 4294901760
    %v3862 = vsub.f32 %v145, %v3861
    %3863 = vmatpush.msra.mxu0 %v3862
    %v3864 = vand.u32 %v137, 4294901760
    %v3865 = vsub.f32 %v137, %v3864
    %3866 = vmatpush.msra.mxu0 %v3865
    %v3867 = vand.u32 %v129, 4294901760
    %v3868 = vsub.f32 %v129, %v3867
    %3869 = vmatpush.msra.mxu0 %v3868
    %v3870 = vand.u32 %v121, 4294901760
    %v3871 = vsub.f32 %v121, %v3870
    %3872 = vmatpush.msra.mxu0 %v3871
    %v3873 = vand.u32 %v113, 4294901760
    %v3874 = vsub.f32 %v113, %v3873
    %3875 = vmatpush.msra.mxu0 %v3874
    %v3876 = vand.u32 %v105, 4294901760
    %v3877 = vsub.f32 %v105, %v3876
    %3878 = vmatpush.msra.mxu0 %v3877
    %v3879 = vand.u32 %v97, 4294901760
    %v3880 = vsub.f32 %v97, %v3879
    %3881 = vmatpush.msra.mxu0 %v3880
    %v3882 = vand.u32 %v89, 4294901760
    %v3883 = vsub.f32 %v89, %v3882
    %3884 = vmatpush.msra.mxu0 %v3883
    %v3885 = vand.u32 %v81, 4294901760
    %v3886 = vsub.f32 %v81, %v3885
    %3887 = vmatpush.msra.mxu0 %v3886
    %v3888 = vand.u32 %v73, 4294901760
    %v3889 = vsub.f32 %v73, %v3888
    %3890 = vmatpush.msra.mxu0 %v3889
    %v3891 = vand.u32 %v65, 4294901760
    %v3892 = vsub.f32 %v65, %v3891
    %3893 = vmatpush.msra.mxu0 %v3892
    %v3894 = vand.u32 %v57, 4294901760
    %v3895 = vsub.f32 %v57, %v3894
    %3896 = vmatpush.msra.mxu0 %v3895
    %v3897 = vand.u32 %v49, 4294901760
    %v3898 = vsub.f32 %v49, %v3897
    %3899 = vmatpush.msra.mxu0 %v3898
    %v3900 = vand.u32 %v42, 4294901760
    %v3901 = vsub.f32 %v42, %v3900
    %3902 = vmatmul.f32.gmra.mxu0 %v3901
    %v3903 = vpop.f32.mrf.mxu0
    %v3904 = vadd.f32 %v3850, %v3903
    %3905 = vdwg.mxu0
    %v3906 = vand.u32 %v169, 4294901760
    %3907 = vmatpush.msra.mxu0 %v3906
    %v3908 = vand.u32 %v161, 4294901760
    %3909 = vmatpush.msra.mxu0 %v3908
    %v3910 = vand.u32 %v153, 4294901760
    %3911 = vmatpush.msra.mxu0 %v3910
    %v3912 = vand.u32 %v145, 4294901760
    %3913 = vmatpush.msra.mxu0 %v3912
    %v3914 = vand.u32 %v137, 4294901760
    %3915 = vmatpush.msra.mxu0 %v3914
    %v3916 = vand.u32 %v129, 4294901760
    %3917 = vmatpush.msra.mxu0 %v3916
    %v3918 = vand.u32 %v121, 4294901760
    %3919 = vmatpush.msra.mxu0 %v3918
    %v3920 = vand.u32 %v113, 4294901760
    %3921 = vmatpush.msra.mxu0 %v3920
    %v3922 = vand.u32 %v105, 4294901760
    %3923 = vmatpush.msra.mxu0 %v3922
    %v3924 = vand.u32 %v97, 4294901760
    %3925 = vmatpush.msra.mxu0 %v3924
    %v3926 = vand.u32 %v89, 4294901760
    %3927 = vmatpush.msra.mxu0 %v3926
    %v3928 = vand.u32 %v81, 4294901760
    %3929 = vmatpush.msra.mxu0 %v3928
    %v3930 = vand.u32 %v73, 4294901760
    %3931 = vmatpush.msra.mxu0 %v3930
    %v3932 = vand.u32 %v65, 4294901760
    %3933 = vmatpush.msra.mxu0 %v3932
    %v3934 = vand.u32 %v57, 4294901760
    %3935 = vmatpush.msra.mxu0 %v3934
    %v3936 = vand.u32 %v49, 4294901760
    %3937 = vmatpush.msra.mxu0 %v3936
    %v3938 = vand.u32 %v42, 4294901760
    %v3939 = vsub.f32 %v42, %v3938
    %v3940 = vand.u32 %v3939, 4294901760
    %3941 = vmatmul.f32.gmra.mxu0 %v3940
    %v3942 = vpop.f32.mrf.mxu0
    %v3943 = vadd.f32 %v3904, %v3942
    %3944 = vdwg.mxu0
    %v3945 = vand.u32 %v169, 4294901760
    %v3946 = vsub.f32 %v169, %v3945
    %v3947 = vand.u32 %v3946, 4294901760
    %3948 = vmatpush.msra.mxu0 %v3947
    %v3949 = vand.u32 %v161, 4294901760
    %v3950 = vsub.f32 %v161, %v3949
    %v3951 = vand.u32 %v3950, 4294901760
    %3952 = vmatpush.msra.mxu0 %v3951
    %v3953 = vand.u32 %v153, 4294901760
    %v3954 = vsub.f32 %v153, %v3953
    %v3955 = vand.u32 %v3954, 4294901760
    %3956 = vmatpush.msra.mxu0 %v3955
    %v3957 = vand.u32 %v145, 4294901760
    %v3958 = vsub.f32 %v145, %v3957
    %v3959 = vand.u32 %v3958, 4294901760
    %3960 = vmatpush.msra.mxu0 %v3959
    %v3961 = vand.u32 %v137, 4294901760
    %v3962 = vsub.f32 %v137, %v3961
    %v3963 = vand.u32 %v3962, 4294901760
    %3964 = vmatpush.msra.mxu0 %v3963
    %v3965 = vand.u32 %v129, 4294901760
    %v3966 = vsub.f32 %v129, %v3965
    %v3967 = vand.u32 %v3966, 4294901760
    %3968 = vmatpush.msra.mxu0 %v3967
    %v3969 = vand.u32 %v121, 4294901760
    %v3970 = vsub.f32 %v121, %v3969
    %v3971 = vand.u32 %v3970, 4294901760
    %3972 = vmatpush.msra.mxu0 %v3971
    %v3973 = vand.u32 %v113, 4294901760
    %v3974 = vsub.f32 %v113, %v3973
    %v3975 = vand.u32 %v3974, 4294901760
    %3976 = vmatpush.msra.mxu0 %v3975
    %v3977 = vand.u32 %v105, 4294901760
    %v3978 = vsub.f32 %v105, %v3977
    %v3979 = vand.u32 %v3978, 4294901760
    %3980 = vmatpush.msra.mxu0 %v3979
    %v3981 = vand.u32 %v97, 4294901760
    %v3982 = vsub.f32 %v97, %v3981
    %v3983 = vand.u32 %v3982, 4294901760
    %3984 = vmatpush.msra.mxu0 %v3983
    %v3985 = vand.u32 %v89, 4294901760
    %v3986 = vsub.f32 %v89, %v3985
    %v3987 = vand.u32 %v3986, 4294901760
    %3988 = vmatpush.msra.mxu0 %v3987
    %v3989 = vand.u32 %v81, 4294901760
    %v3990 = vsub.f32 %v81, %v3989
    %v3991 = vand.u32 %v3990, 4294901760
    %3992 = vmatpush.msra.mxu0 %v3991
    %v3993 = vand.u32 %v73, 4294901760
    %v3994 = vsub.f32 %v73, %v3993
    %v3995 = vand.u32 %v3994, 4294901760
    %3996 = vmatpush.msra.mxu0 %v3995
    %v3997 = vand.u32 %v65, 4294901760
    %v3998 = vsub.f32 %v65, %v3997
    %v3999 = vand.u32 %v3998, 4294901760
    %4000 = vmatpush.msra.mxu0 %v3999
    %v4001 = vand.u32 %v57, 4294901760
    %v4002 = vsub.f32 %v57, %v4001
    %v4003 = vand.u32 %v4002, 4294901760
    %4004 = vmatpush.msra.mxu0 %v4003
    %v4005 = vand.u32 %v49, 4294901760
    %v4006 = vsub.f32 %v49, %v4005
    %v4007 = vand.u32 %v4006, 4294901760
    %4008 = vmatpush.msra.mxu0 %v4007
    %v4009 = vand.u32 %v42, 4294901760
    %4010 = vmatmul.f32.gmra.mxu0 %v4009
    %v4011 = vpop.f32.mrf.mxu0
    %v4012 = vadd.f32 %v3943, %v4011
    %4013 = vdwg.mxu0
    %v4014 = vand.u32 %v169, 4294901760
    %4015 = vmatpush.msra.mxu0 %v4014
    %v4016 = vand.u32 %v161, 4294901760
    %4017 = vmatpush.msra.mxu0 %v4016
    %v4018 = vand.u32 %v153, 4294901760
    %4019 = vmatpush.msra.mxu0 %v4018
    %v4020 = vand.u32 %v145, 4294901760
    %4021 = vmatpush.msra.mxu0 %v4020
    %v4022 = vand.u32 %v137, 4294901760
    %4023 = vmatpush.msra.mxu0 %v4022
    %v4024 = vand.u32 %v129, 4294901760
    %4025 = vmatpush.msra.mxu0 %v4024
    %v4026 = vand.u32 %v121, 4294901760
    %4027 = vmatpush.msra.mxu0 %v4026
    %v4028 = vand.u32 %v113, 4294901760
    %4029 = vmatpush.msra.mxu0 %v4028
    %v4030 = vand.u32 %v105, 4294901760
    %4031 = vmatpush.msra.mxu0 %v4030
    %v4032 = vand.u32 %v97, 4294901760
    %4033 = vmatpush.msra.mxu0 %v4032
    %v4034 = vand.u32 %v89, 4294901760
    %4035 = vmatpush.msra.mxu0 %v4034
    %v4036 = vand.u32 %v81, 4294901760
    %4037 = vmatpush.msra.mxu0 %v4036
    %v4038 = vand.u32 %v73, 4294901760
    %4039 = vmatpush.msra.mxu0 %v4038
    %v4040 = vand.u32 %v65, 4294901760
    %4041 = vmatpush.msra.mxu0 %v4040
    %v4042 = vand.u32 %v57, 4294901760
    %4043 = vmatpush.msra.mxu0 %v4042
    %v4044 = vand.u32 %v49, 4294901760
    %4045 = vmatpush.msra.mxu0 %v4044
    %v4046 = vand.u32 %v42, 4294901760
    %4047 = vmatmul.f32.gmra.mxu0 %v4046
    %v4048 = vpop.f32.mrf.mxu0
    %v4049 = vadd.f32 %v4012, %v4048
    %4050 = vdwg.mxu0
    %v4051 = vand.u32 %v297, 4294901760
    %4052 = vmatpush.msra.mxu0 %v4051
    %v4053 = vand.u32 %v289, 4294901760
    %4054 = vmatpush.msra.mxu0 %v4053
    %v4055 = vand.u32 %v281, 4294901760
    %4056 = vmatpush.msra.mxu0 %v4055
    %v4057 = vand.u32 %v273, 4294901760
    %4058 = vmatpush.msra.mxu0 %v4057
    %v4059 = vand.u32 %v265, 4294901760
    %4060 = vmatpush.msra.mxu0 %v4059
    %v4061 = vand.u32 %v257, 4294901760
    %4062 = vmatpush.msra.mxu0 %v4061
    %v4063 = vand.u32 %v249, 4294901760
    %4064 = vmatpush.msra.mxu0 %v4063
    %v4065 = vand.u32 %v241, 4294901760
    %4066 = vmatpush.msra.mxu0 %v4065
    %v4067 = vand.u32 %v233, 4294901760
    %4068 = vmatpush.msra.mxu0 %v4067
    %v4069 = vand.u32 %v225, 4294901760
    %4070 = vmatpush.msra.mxu0 %v4069
    %v4071 = vand.u32 %v217, 4294901760
    %4072 = vmatpush.msra.mxu0 %v4071
    %v4073 = vand.u32 %v209, 4294901760
    %4074 = vmatpush.msra.mxu0 %v4073
    %v4075 = vand.u32 %v201, 4294901760
    %4076 = vmatpush.msra.mxu0 %v4075
    %v4077 = vand.u32 %v193, 4294901760
    %4078 = vmatpush.msra.mxu0 %v4077
    %v4079 = vand.u32 %v185, 4294901760
    %4080 = vmatpush.msra.mxu0 %v4079
    %v4081 = vand.u32 %v177, 4294901760
    %4082 = vmatpush.msra.mxu0 %v4081
    %v4083 = vand.u32 %v43, 4294901760
    %v4084 = vsub.f32 %v43, %v4083
    %v4085 = vand.u32 %v4084, 4294901760
    %v4086 = vsub.f32 %v4084, %v4085
    %v4087 = vand.u32 %v4086, 4294901760
    %4088 = vmatmul.f32.gmra.mxu0 %v4087
    %v4089 = vpop.f32.mrf.mxu0
    %v4090 = vadd.f32 %v4049, %v4089
    %4091 = vdwg.mxu0
    %v4092 = vand.u32 %v297, 4294901760
    %v4093 = vsub.f32 %v297, %v4092
    %v4094 = vand.u32 %v4093, 4294901760
    %v4095 = vsub.f32 %v4093, %v4094
    %v4096 = vand.u32 %v4095, 4294901760
    %4097 = vmatpush.msra.mxu0 %v4096
    %v4098 = vand.u32 %v289, 4294901760
    %v4099 = vsub.f32 %v289, %v4098
    %v4100 = vand.u32 %v4099, 4294901760
    %v4101 = vsub.f32 %v4099, %v4100
    %v4102 = vand.u32 %v4101, 4294901760
    %4103 = vmatpush.msra.mxu0 %v4102
    %v4104 = vand.u32 %v281, 4294901760
    %v4105 = vsub.f32 %v281, %v4104
    %v4106 = vand.u32 %v4105, 4294901760
    %v4107 = vsub.f32 %v4105, %v4106
    %v4108 = vand.u32 %v4107, 4294901760
    %4109 = vmatpush.msra.mxu0 %v4108
    %v4110 = vand.u32 %v273, 4294901760
    %v4111 = vsub.f32 %v273, %v4110
    %v4112 = vand.u32 %v4111, 4294901760
    %v4113 = vsub.f32 %v4111, %v4112
    %v4114 = vand.u32 %v4113, 4294901760
    %4115 = vmatpush.msra.mxu0 %v4114
    %v4116 = vand.u32 %v265, 4294901760
    %v4117 = vsub.f32 %v265, %v4116
    %v4118 = vand.u32 %v4117, 4294901760
    %v4119 = vsub.f32 %v4117, %v4118
    %v4120 = vand.u32 %v4119, 4294901760
    %4121 = vmatpush.msra.mxu0 %v4120
    %v4122 = vand.u32 %v257, 4294901760
    %v4123 = vsub.f32 %v257, %v4122
    %v4124 = vand.u32 %v4123, 4294901760
    %v4125 = vsub.f32 %v4123, %v4124
    %v4126 = vand.u32 %v4125, 4294901760
    %4127 = vmatpush.msra.mxu0 %v4126
    %v4128 = vand.u32 %v249, 4294901760
    %v4129 = vsub.f32 %v249, %v4128
    %v4130 = vand.u32 %v4129, 4294901760
    %v4131 = vsub.f32 %v4129, %v4130
    %v4132 = vand.u32 %v4131, 4294901760
    %4133 = vmatpush.msra.mxu0 %v4132
    %v4134 = vand.u32 %v241, 4294901760
    %v4135 = vsub.f32 %v241, %v4134
    %v4136 = vand.u32 %v4135, 4294901760
    %v4137 = vsub.f32 %v4135, %v4136
    %v4138 = vand.u32 %v4137, 4294901760
    %4139 = vmatpush.msra.mxu0 %v4138
    %v4140 = vand.u32 %v233, 4294901760
    %v4141 = vsub.f32 %v233, %v4140
    %v4142 = vand.u32 %v4141, 4294901760
    %v4143 = vsub.f32 %v4141, %v4142
    %v4144 = vand.u32 %v4143, 4294901760
    %4145 = vmatpush.msra.mxu0 %v4144
    %v4146 = vand.u32 %v225, 4294901760
    %v4147 = vsub.f32 %v225, %v4146
    %v4148 = vand.u32 %v4147, 4294901760
    %v4149 = vsub.f32 %v4147, %v4148
    %v4150 = vand.u32 %v4149, 4294901760
    %4151 = vmatpush.msra.mxu0 %v4150
    %v4152 = vand.u32 %v217, 4294901760
    %v4153 = vsub.f32 %v217, %v4152
    %v4154 = vand.u32 %v4153, 4294901760
    %v4155 = vsub.f32 %v4153, %v4154
    %v4156 = vand.u32 %v4155, 4294901760
    %4157 = vmatpush.msra.mxu0 %v4156
    %v4158 = vand.u32 %v209, 4294901760
    %v4159 = vsub.f32 %v209, %v4158
    %v4160 = vand.u32 %v4159, 4294901760
    %v4161 = vsub.f32 %v4159, %v4160
    %v4162 = vand.u32 %v4161, 4294901760
    %4163 = vmatpush.msra.mxu0 %v4162
    %v4164 = vand.u32 %v201, 4294901760
    %v4165 = vsub.f32 %v201, %v4164
    %v4166 = vand.u32 %v4165, 4294901760
    %v4167 = vsub.f32 %v4165, %v4166
    %v4168 = vand.u32 %v4167, 4294901760
    %4169 = vmatpush.msra.mxu0 %v4168
    %v4170 = vand.u32 %v193, 4294901760
    %v4171 = vsub.f32 %v193, %v4170
    %v4172 = vand.u32 %v4171, 4294901760
    %v4173 = vsub.f32 %v4171, %v4172
    %v4174 = vand.u32 %v4173, 4294901760
    %4175 = vmatpush.msra.mxu0 %v4174
    %v4176 = vand.u32 %v185, 4294901760
    %v4177 = vsub.f32 %v185, %v4176
    %v4178 = vand.u32 %v4177, 4294901760
    %v4179 = vsub.f32 %v4177, %v4178
    %v4180 = vand.u32 %v4179, 4294901760
    %4181 = vmatpush.msra.mxu0 %v4180
    %v4182 = vand.u32 %v177, 4294901760
    %v4183 = vsub.f32 %v177, %v4182
    %v4184 = vand.u32 %v4183, 4294901760
    %v4185 = vsub.f32 %v4183, %v4184
    %v4186 = vand.u32 %v4185, 4294901760
    %4187 = vmatpush.msra.mxu0 %v4186
    %v4188 = vand.u32 %v43, 4294901760
    %4189 = vmatmul.f32.gmra.mxu0 %v4188
    %v4190 = vpop.f32.mrf.mxu0
    %v4191 = vadd.f32 %v4090, %v4190
    %4192 = vdwg.mxu0
    %v4193 = vand.u32 %v297, 4294901760
    %v4194 = vsub.f32 %v297, %v4193
    %4195 = vmatpush.msra.mxu0 %v4194
    %v4196 = vand.u32 %v289, 4294901760
    %v4197 = vsub.f32 %v289, %v4196
    %4198 = vmatpush.msra.mxu0 %v4197
    %v4199 = vand.u32 %v281, 4294901760
    %v4200 = vsub.f32 %v281, %v4199
    %4201 = vmatpush.msra.mxu0 %v4200
    %v4202 = vand.u32 %v273, 4294901760
    %v4203 = vsub.f32 %v273, %v4202
    %4204 = vmatpush.msra.mxu0 %v4203
    %v4205 = vand.u32 %v265, 4294901760
    %v4206 = vsub.f32 %v265, %v4205
    %4207 = vmatpush.msra.mxu0 %v4206
    %v4208 = vand.u32 %v257, 4294901760
    %v4209 = vsub.f32 %v257, %v4208
    %4210 = vmatpush.msra.mxu0 %v4209
    %v4211 = vand.u32 %v249, 4294901760
    %v4212 = vsub.f32 %v249, %v4211
    %4213 = vmatpush.msra.mxu0 %v4212
    %v4214 = vand.u32 %v241, 4294901760
    %v4215 = vsub.f32 %v241, %v4214
    %4216 = vmatpush.msra.mxu0 %v4215
    %v4217 = vand.u32 %v233, 4294901760
    %v4218 = vsub.f32 %v233, %v4217
    %4219 = vmatpush.msra.mxu0 %v4218
    %v4220 = vand.u32 %v225, 4294901760
    %v4221 = vsub.f32 %v225, %v4220
    %4222 = vmatpush.msra.mxu0 %v4221
    %v4223 = vand.u32 %v217, 4294901760
    %v4224 = vsub.f32 %v217, %v4223
    %4225 = vmatpush.msra.mxu0 %v4224
    %v4226 = vand.u32 %v209, 4294901760
    %v4227 = vsub.f32 %v209, %v4226
    %4228 = vmatpush.msra.mxu0 %v4227
    %v4229 = vand.u32 %v201, 4294901760
    %v4230 = vsub.f32 %v201, %v4229
    %4231 = vmatpush.msra.mxu0 %v4230
    %v4232 = vand.u32 %v193, 4294901760
    %v4233 = vsub.f32 %v193, %v4232
    %4234 = vmatpush.msra.mxu0 %v4233
    %v4235 = vand.u32 %v185, 4294901760
    %v4236 = vsub.f32 %v185, %v4235
    %4237 = vmatpush.msra.mxu0 %v4236
    %v4238 = vand.u32 %v177, 4294901760
    %v4239 = vsub.f32 %v177, %v4238
    %4240 = vmatpush.msra.mxu0 %v4239
    %v4241 = vand.u32 %v43, 4294901760
    %v4242 = vsub.f32 %v43, %v4241
    %4243 = vmatmul.f32.gmra.mxu0 %v4242
    %v4244 = vpop.f32.mrf.mxu0
    %v4245 = vadd.f32 %v4191, %v4244
    %4246 = vdwg.mxu0
    %v4247 = vand.u32 %v297, 4294901760
    %4248 = vmatpush.msra.mxu0 %v4247
    %v4249 = vand.u32 %v289, 4294901760
    %4250 = vmatpush.msra.mxu0 %v4249
    %v4251 = vand.u32 %v281, 4294901760
    %4252 = vmatpush.msra.mxu0 %v4251
    %v4253 = vand.u32 %v273, 4294901760
    %4254 = vmatpush.msra.mxu0 %v4253
    %v4255 = vand.u32 %v265, 4294901760
    %4256 = vmatpush.msra.mxu0 %v4255
    %v4257 = vand.u32 %v257, 4294901760
    %4258 = vmatpush.msra.mxu0 %v4257
    %v4259 = vand.u32 %v249, 4294901760
    %4260 = vmatpush.msra.mxu0 %v4259
    %v4261 = vand.u32 %v241, 4294901760
    %4262 = vmatpush.msra.mxu0 %v4261
    %v4263 = vand.u32 %v233, 4294901760
    %4264 = vmatpush.msra.mxu0 %v4263
    %v4265 = vand.u32 %v225, 4294901760
    %4266 = vmatpush.msra.mxu0 %v4265
    %v4267 = vand.u32 %v217, 4294901760
    %4268 = vmatpush.msra.mxu0 %v4267
    %v4269 = vand.u32 %v209, 4294901760
    %4270 = vmatpush.msra.mxu0 %v4269
    %v4271 = vand.u32 %v201, 4294901760
    %4272 = vmatpush.msra.mxu0 %v4271
    %v4273 = vand.u32 %v193, 4294901760
    %4274 = vmatpush.msra.mxu0 %v4273
    %v4275 = vand.u32 %v185, 4294901760
    %4276 = vmatpush.msra.mxu0 %v4275
    %v4277 = vand.u32 %v177, 4294901760
    %4278 = vmatpush.msra.mxu0 %v4277
    %v4279 = vand.u32 %v43, 4294901760
    %v4280 = vsub.f32 %v43, %v4279
    %v4281 = vand.u32 %v4280, 4294901760
    %4282 = vmatmul.f32.gmra.mxu0 %v4281
    %v4283 = vpop.f32.mrf.mxu0
    %v4284 = vadd.f32 %v4245, %v4283
    %4285 = vdwg.mxu0
    %v4286 = vand.u32 %v297, 4294901760
    %v4287 = vsub.f32 %v297, %v4286
    %v4288 = vand.u32 %v4287, 4294901760
    %4289 = vmatpush.msra.mxu0 %v4288
    %v4290 = vand.u32 %v289, 4294901760
    %v4291 = vsub.f32 %v289, %v4290
    %v4292 = vand.u32 %v4291, 4294901760
    %4293 = vmatpush.msra.mxu0 %v4292
    %v4294 = vand.u32 %v281, 4294901760
    %v4295 = vsub.f32 %v281, %v4294
    %v4296 = vand.u32 %v4295, 4294901760
    %4297 = vmatpush.msra.mxu0 %v4296
    %v4298 = vand.u32 %v273, 4294901760
    %v4299 = vsub.f32 %v273, %v4298
    %v4300 = vand.u32 %v4299, 4294901760
    %4301 = vmatpush.msra.mxu0 %v4300
    %v4302 = vand.u32 %v265, 4294901760
    %v4303 = vsub.f32 %v265, %v4302
    %v4304 = vand.u32 %v4303, 4294901760
    %4305 = vmatpush.msra.mxu0 %v4304
    %v4306 = vand.u32 %v257, 4294901760
    %v4307 = vsub.f32 %v257, %v4306
    %v4308 = vand.u32 %v4307, 4294901760
    %4309 = vmatpush.msra.mxu0 %v4308
    %v4310 = vand.u32 %v249, 4294901760
    %v4311 = vsub.f32 %v249, %v4310
    %v4312 = vand.u32 %v4311, 4294901760
    %4313 = vmatpush.msra.mxu0 %v4312
    %v4314 = vand.u32 %v241, 4294901760
    %v4315 = vsub.f32 %v241, %v4314
    %v4316 = vand.u32 %v4315, 4294901760
    %4317 = vmatpush.msra.mxu0 %v4316
    %v4318 = vand.u32 %v233, 4294901760
    %v4319 = vsub.f32 %v233, %v4318
    %v4320 = vand.u32 %v4319, 4294901760
    %4321 = vmatpush.msra.mxu0 %v4320
    %v4322 = vand.u32 %v225, 4294901760
    %v4323 = vsub.f32 %v225, %v4322
    %v4324 = vand.u32 %v4323, 4294901760
    %4325 = vmatpush.msra.mxu0 %v4324
    %v4326 = vand.u32 %v217, 4294901760
    %v4327 = vsub.f32 %v217, %v4326
    %v4328 = vand.u32 %v4327, 4294901760
    %4329 = vmatpush.msra.mxu0 %v4328
    %v4330 = vand.u32 %v209, 4294901760
    %v4331 = vsub.f32 %v209, %v4330
    %v4332 = vand.u32 %v4331, 4294901760
    %4333 = vmatpush.msra.mxu0 %v4332
    %v4334 = vand.u32 %v201, 4294901760
    %v4335 = vsub.f32 %v201, %v4334
    %v4336 = vand.u32 %v4335, 4294901760
    %4337 = vmatpush.msra.mxu0 %v4336
    %v4338 = vand.u32 %v193, 4294901760
    %v4339 = vsub.f32 %v193, %v4338
    %v4340 = vand.u32 %v4339, 4294901760
    %4341 = vmatpush.msra.mxu0 %v4340
    %v4342 = vand.u32 %v185, 4294901760
    %v4343 = vsub.f32 %v185, %v4342
    %v4344 = vand.u32 %v4343, 4294901760
    %4345 = vmatpush.msra.mxu0 %v4344
    %v4346 = vand.u32 %v177, 4294901760
    %v4347 = vsub.f32 %v177, %v4346
    %v4348 = vand.u32 %v4347, 4294901760
    %4349 = vmatpush.msra.mxu0 %v4348
    %v4350 = vand.u32 %v43, 4294901760
    %4351 = vmatmul.f32.gmra.mxu0 %v4350
    %v4352 = vpop.f32.mrf.mxu0
    %v4353 = vadd.f32 %v4284, %v4352
    %4354 = vdwg.mxu0
    %v4355 = vand.u32 %v297, 4294901760
    %4356 = vmatpush.msra.mxu0 %v4355
    %v4357 = vand.u32 %v289, 4294901760
    %4358 = vmatpush.msra.mxu0 %v4357
    %v4359 = vand.u32 %v281, 4294901760
    %4360 = vmatpush.msra.mxu0 %v4359
    %v4361 = vand.u32 %v273, 4294901760
    %4362 = vmatpush.msra.mxu0 %v4361
    %v4363 = vand.u32 %v265, 4294901760
    %4364 = vmatpush.msra.mxu0 %v4363
    %v4365 = vand.u32 %v257, 4294901760
    %4366 = vmatpush.msra.mxu0 %v4365
    %v4367 = vand.u32 %v249, 4294901760
    %4368 = vmatpush.msra.mxu0 %v4367
    %v4369 = vand.u32 %v241, 4294901760
    %4370 = vmatpush.msra.mxu0 %v4369
    %v4371 = vand.u32 %v233, 4294901760
    %4372 = vmatpush.msra.mxu0 %v4371
    %v4373 = vand.u32 %v225, 4294901760
    %4374 = vmatpush.msra.mxu0 %v4373
    %v4375 = vand.u32 %v217, 4294901760
    %4376 = vmatpush.msra.mxu0 %v4375
    %v4377 = vand.u32 %v209, 4294901760
    %4378 = vmatpush.msra.mxu0 %v4377
    %v4379 = vand.u32 %v201, 4294901760
    %4380 = vmatpush.msra.mxu0 %v4379
    %v4381 = vand.u32 %v193, 4294901760
    %4382 = vmatpush.msra.mxu0 %v4381
    %v4383 = vand.u32 %v185, 4294901760
    %4384 = vmatpush.msra.mxu0 %v4383
    %v4385 = vand.u32 %v177, 4294901760
    %4386 = vmatpush.msra.mxu0 %v4385
    %v4387 = vand.u32 %v43, 4294901760
    %4388 = vmatmul.f32.gmra.mxu0 %v4387
    %v4389 = vpop.f32.mrf.mxu0
    %v4390 = vadd.f32 %v4353, %v4389
    %4391 = vdwg.mxu0
    %v4392 = vand.u32 %v170, 4294901760
    %4393 = vmatpush.msra.mxu0 %v4392
    %v4394 = vand.u32 %v162, 4294901760
    %4395 = vmatpush.msra.mxu0 %v4394
    %v4396 = vand.u32 %v154, 4294901760
    %4397 = vmatpush.msra.mxu0 %v4396
    %v4398 = vand.u32 %v146, 4294901760
    %4399 = vmatpush.msra.mxu0 %v4398
    %v4400 = vand.u32 %v138, 4294901760
    %4401 = vmatpush.msra.mxu0 %v4400
    %v4402 = vand.u32 %v130, 4294901760
    %4403 = vmatpush.msra.mxu0 %v4402
    %v4404 = vand.u32 %v122, 4294901760
    %4405 = vmatpush.msra.mxu0 %v4404
    %v4406 = vand.u32 %v114, 4294901760
    %4407 = vmatpush.msra.mxu0 %v4406
    %v4408 = vand.u32 %v106, 4294901760
    %4409 = vmatpush.msra.mxu0 %v4408
    %v4410 = vand.u32 %v98, 4294901760
    %4411 = vmatpush.msra.mxu0 %v4410
    %v4412 = vand.u32 %v90, 4294901760
    %4413 = vmatpush.msra.mxu0 %v4412
    %v4414 = vand.u32 %v82, 4294901760
    %4415 = vmatpush.msra.mxu0 %v4414
    %v4416 = vand.u32 %v74, 4294901760
    %4417 = vmatpush.msra.mxu0 %v4416
    %v4418 = vand.u32 %v66, 4294901760
    %4419 = vmatpush.msra.mxu0 %v4418
    %v4420 = vand.u32 %v58, 4294901760
    %4421 = vmatpush.msra.mxu0 %v4420
    %v4422 = vand.u32 %v50, 4294901760
    %4423 = vmatpush.msra.mxu0 %v4422
    %v4424 = vand.u32 %v42, 4294901760
    %v4425 = vsub.f32 %v42, %v4424
    %v4426 = vand.u32 %v4425, 4294901760
    %v4427 = vsub.f32 %v4425, %v4426
    %v4428 = vand.u32 %v4427, 4294901760
    %4429 = vmatmul.f32.gmra.mxu0 %v4428
    %v4430 = vpop.f32.mrf.mxu0
    %v4431 = vadd.f32 0.0, %v4430
    %4432 = vdwg.mxu0
    %v4433 = vand.u32 %v170, 4294901760
    %v4434 = vsub.f32 %v170, %v4433
    %v4435 = vand.u32 %v4434, 4294901760
    %v4436 = vsub.f32 %v4434, %v4435
    %v4437 = vand.u32 %v4436, 4294901760
    %4438 = vmatpush.msra.mxu0 %v4437
    %v4439 = vand.u32 %v162, 4294901760
    %v4440 = vsub.f32 %v162, %v4439
    %v4441 = vand.u32 %v4440, 4294901760
    %v4442 = vsub.f32 %v4440, %v4441
    %v4443 = vand.u32 %v4442, 4294901760
    %4444 = vmatpush.msra.mxu0 %v4443
    %v4445 = vand.u32 %v154, 4294901760
    %v4446 = vsub.f32 %v154, %v4445
    %v4447 = vand.u32 %v4446, 4294901760
    %v4448 = vsub.f32 %v4446, %v4447
    %v4449 = vand.u32 %v4448, 4294901760
    %4450 = vmatpush.msra.mxu0 %v4449
    %v4451 = vand.u32 %v146, 4294901760
    %v4452 = vsub.f32 %v146, %v4451
    %v4453 = vand.u32 %v4452, 4294901760
    %v4454 = vsub.f32 %v4452, %v4453
    %v4455 = vand.u32 %v4454, 4294901760
    %4456 = vmatpush.msra.mxu0 %v4455
    %v4457 = vand.u32 %v138, 4294901760
    %v4458 = vsub.f32 %v138, %v4457
    %v4459 = vand.u32 %v4458, 4294901760
    %v4460 = vsub.f32 %v4458, %v4459
    %v4461 = vand.u32 %v4460, 4294901760
    %4462 = vmatpush.msra.mxu0 %v4461
    %v4463 = vand.u32 %v130, 4294901760
    %v4464 = vsub.f32 %v130, %v4463
    %v4465 = vand.u32 %v4464, 4294901760
    %v4466 = vsub.f32 %v4464, %v4465
    %v4467 = vand.u32 %v4466, 4294901760
    %4468 = vmatpush.msra.mxu0 %v4467
    %v4469 = vand.u32 %v122, 4294901760
    %v4470 = vsub.f32 %v122, %v4469
    %v4471 = vand.u32 %v4470, 4294901760
    %v4472 = vsub.f32 %v4470, %v4471
    %v4473 = vand.u32 %v4472, 4294901760
    %4474 = vmatpush.msra.mxu0 %v4473
    %v4475 = vand.u32 %v114, 4294901760
    %v4476 = vsub.f32 %v114, %v4475
    %v4477 = vand.u32 %v4476, 4294901760
    %v4478 = vsub.f32 %v4476, %v4477
    %v4479 = vand.u32 %v4478, 4294901760
    %4480 = vmatpush.msra.mxu0 %v4479
    %v4481 = vand.u32 %v106, 4294901760
    %v4482 = vsub.f32 %v106, %v4481
    %v4483 = vand.u32 %v4482, 4294901760
    %v4484 = vsub.f32 %v4482, %v4483
    %v4485 = vand.u32 %v4484, 4294901760
    %4486 = vmatpush.msra.mxu0 %v4485
    %v4487 = vand.u32 %v98, 4294901760
    %v4488 = vsub.f32 %v98, %v4487
    %v4489 = vand.u32 %v4488, 4294901760
    %v4490 = vsub.f32 %v4488, %v4489
    %v4491 = vand.u32 %v4490, 4294901760
    %4492 = vmatpush.msra.mxu0 %v4491
    %v4493 = vand.u32 %v90, 4294901760
    %v4494 = vsub.f32 %v90, %v4493
    %v4495 = vand.u32 %v4494, 4294901760
    %v4496 = vsub.f32 %v4494, %v4495
    %v4497 = vand.u32 %v4496, 4294901760
    %4498 = vmatpush.msra.mxu0 %v4497
    %v4499 = vand.u32 %v82, 4294901760
    %v4500 = vsub.f32 %v82, %v4499
    %v4501 = vand.u32 %v4500, 4294901760
    %v4502 = vsub.f32 %v4500, %v4501
    %v4503 = vand.u32 %v4502, 4294901760
    %4504 = vmatpush.msra.mxu0 %v4503
    %v4505 = vand.u32 %v74, 4294901760
    %v4506 = vsub.f32 %v74, %v4505
    %v4507 = vand.u32 %v4506, 4294901760
    %v4508 = vsub.f32 %v4506, %v4507
    %v4509 = vand.u32 %v4508, 4294901760
    %4510 = vmatpush.msra.mxu0 %v4509
    %v4511 = vand.u32 %v66, 4294901760
    %v4512 = vsub.f32 %v66, %v4511
    %v4513 = vand.u32 %v4512, 4294901760
    %v4514 = vsub.f32 %v4512, %v4513
    %v4515 = vand.u32 %v4514, 4294901760
    %4516 = vmatpush.msra.mxu0 %v4515
    %v4517 = vand.u32 %v58, 4294901760
    %v4518 = vsub.f32 %v58, %v4517
    %v4519 = vand.u32 %v4518, 4294901760
    %v4520 = vsub.f32 %v4518, %v4519
    %v4521 = vand.u32 %v4520, 4294901760
    %4522 = vmatpush.msra.mxu0 %v4521
    %v4523 = vand.u32 %v50, 4294901760
    %v4524 = vsub.f32 %v50, %v4523
    %v4525 = vand.u32 %v4524, 4294901760
    %v4526 = vsub.f32 %v4524, %v4525
    %v4527 = vand.u32 %v4526, 4294901760
    %4528 = vmatpush.msra.mxu0 %v4527
    %v4529 = vand.u32 %v42, 4294901760
    %4530 = vmatmul.f32.gmra.mxu0 %v4529
    %v4531 = vpop.f32.mrf.mxu0
    %v4532 = vadd.f32 %v4431, %v4531
    %4533 = vdwg.mxu0
    %v4534 = vand.u32 %v170, 4294901760
    %v4535 = vsub.f32 %v170, %v4534
    %4536 = vmatpush.msra.mxu0 %v4535
    %v4537 = vand.u32 %v162, 4294901760
    %v4538 = vsub.f32 %v162, %v4537
    %4539 = vmatpush.msra.mxu0 %v4538
    %v4540 = vand.u32 %v154, 4294901760
    %v4541 = vsub.f32 %v154, %v4540
    %4542 = vmatpush.msra.mxu0 %v4541
    %v4543 = vand.u32 %v146, 4294901760
    %v4544 = vsub.f32 %v146, %v4543
    %4545 = vmatpush.msra.mxu0 %v4544
    %v4546 = vand.u32 %v138, 4294901760
    %v4547 = vsub.f32 %v138, %v4546
    %4548 = vmatpush.msra.mxu0 %v4547
    %v4549 = vand.u32 %v130, 4294901760
    %v4550 = vsub.f32 %v130, %v4549
    %4551 = vmatpush.msra.mxu0 %v4550
    %v4552 = vand.u32 %v122, 4294901760
    %v4553 = vsub.f32 %v122, %v4552
    %4554 = vmatpush.msra.mxu0 %v4553
    %v4555 = vand.u32 %v114, 4294901760
    %v4556 = vsub.f32 %v114, %v4555
    %4557 = vmatpush.msra.mxu0 %v4556
    %v4558 = vand.u32 %v106, 4294901760
    %v4559 = vsub.f32 %v106, %v4558
    %4560 = vmatpush.msra.mxu0 %v4559
    %v4561 = vand.u32 %v98, 4294901760
    %v4562 = vsub.f32 %v98, %v4561
    %4563 = vmatpush.msra.mxu0 %v4562
    %v4564 = vand.u32 %v90, 4294901760
    %v4565 = vsub.f32 %v90, %v4564
    %4566 = vmatpush.msra.mxu0 %v4565
    %v4567 = vand.u32 %v82, 4294901760
    %v4568 = vsub.f32 %v82, %v4567
    %4569 = vmatpush.msra.mxu0 %v4568
    %v4570 = vand.u32 %v74, 4294901760
    %v4571 = vsub.f32 %v74, %v4570
    %4572 = vmatpush.msra.mxu0 %v4571
    %v4573 = vand.u32 %v66, 4294901760
    %v4574 = vsub.f32 %v66, %v4573
    %4575 = vmatpush.msra.mxu0 %v4574
    %v4576 = vand.u32 %v58, 4294901760
    %v4577 = vsub.f32 %v58, %v4576
    %4578 = vmatpush.msra.mxu0 %v4577
    %v4579 = vand.u32 %v50, 4294901760
    %v4580 = vsub.f32 %v50, %v4579
    %4581 = vmatpush.msra.mxu0 %v4580
    %v4582 = vand.u32 %v42, 4294901760
    %v4583 = vsub.f32 %v42, %v4582
    %4584 = vmatmul.f32.gmra.mxu0 %v4583
    %v4585 = vpop.f32.mrf.mxu0
    %v4586 = vadd.f32 %v4532, %v4585
    %4587 = vdwg.mxu0
    %v4588 = vand.u32 %v170, 4294901760
    %4589 = vmatpush.msra.mxu0 %v4588
    %v4590 = vand.u32 %v162, 4294901760
    %4591 = vmatpush.msra.mxu0 %v4590
    %v4592 = vand.u32 %v154, 4294901760
    %4593 = vmatpush.msra.mxu0 %v4592
    %v4594 = vand.u32 %v146, 4294901760
    %4595 = vmatpush.msra.mxu0 %v4594
    %v4596 = vand.u32 %v138, 4294901760
    %4597 = vmatpush.msra.mxu0 %v4596
    %v4598 = vand.u32 %v130, 4294901760
    %4599 = vmatpush.msra.mxu0 %v4598
    %v4600 = vand.u32 %v122, 4294901760
    %4601 = vmatpush.msra.mxu0 %v4600
    %v4602 = vand.u32 %v114, 4294901760
    %4603 = vmatpush.msra.mxu0 %v4602
    %v4604 = vand.u32 %v106, 4294901760
    %4605 = vmatpush.msra.mxu0 %v4604
    %v4606 = vand.u32 %v98, 4294901760
    %4607 = vmatpush.msra.mxu0 %v4606
    %v4608 = vand.u32 %v90, 4294901760
    %4609 = vmatpush.msra.mxu0 %v4608
    %v4610 = vand.u32 %v82, 4294901760
    %4611 = vmatpush.msra.mxu0 %v4610
    %v4612 = vand.u32 %v74, 4294901760
    %4613 = vmatpush.msra.mxu0 %v4612
    %v4614 = vand.u32 %v66, 4294901760
    %4615 = vmatpush.msra.mxu0 %v4614
    %v4616 = vand.u32 %v58, 4294901760
    %4617 = vmatpush.msra.mxu0 %v4616
    %v4618 = vand.u32 %v50, 4294901760
    %4619 = vmatpush.msra.mxu0 %v4618
    %v4620 = vand.u32 %v42, 4294901760
    %v4621 = vsub.f32 %v42, %v4620
    %v4622 = vand.u32 %v4621, 4294901760
    %4623 = vmatmul.f32.gmra.mxu0 %v4622
    %v4624 = vpop.f32.mrf.mxu0
    %v4625 = vadd.f32 %v4586, %v4624
    %4626 = vdwg.mxu0
    %v4627 = vand.u32 %v170, 4294901760
    %v4628 = vsub.f32 %v170, %v4627
    %v4629 = vand.u32 %v4628, 4294901760
    %4630 = vmatpush.msra.mxu0 %v4629
    %v4631 = vand.u32 %v162, 4294901760
    %v4632 = vsub.f32 %v162, %v4631
    %v4633 = vand.u32 %v4632, 4294901760
    %4634 = vmatpush.msra.mxu0 %v4633
    %v4635 = vand.u32 %v154, 4294901760
    %v4636 = vsub.f32 %v154, %v4635
    %v4637 = vand.u32 %v4636, 4294901760
    %4638 = vmatpush.msra.mxu0 %v4637
    %v4639 = vand.u32 %v146, 4294901760
    %v4640 = vsub.f32 %v146, %v4639
    %v4641 = vand.u32 %v4640, 4294901760
    %4642 = vmatpush.msra.mxu0 %v4641
    %v4643 = vand.u32 %v138, 4294901760
    %v4644 = vsub.f32 %v138, %v4643
    %v4645 = vand.u32 %v4644, 4294901760
    %4646 = vmatpush.msra.mxu0 %v4645
    %v4647 = vand.u32 %v130, 4294901760
    %v4648 = vsub.f32 %v130, %v4647
    %v4649 = vand.u32 %v4648, 4294901760
    %4650 = vmatpush.msra.mxu0 %v4649
    %v4651 = vand.u32 %v122, 4294901760
    %v4652 = vsub.f32 %v122, %v4651
    %v4653 = vand.u32 %v4652, 4294901760
    %4654 = vmatpush.msra.mxu0 %v4653
    %v4655 = vand.u32 %v114, 4294901760
    %v4656 = vsub.f32 %v114, %v4655
    %v4657 = vand.u32 %v4656, 4294901760
    %4658 = vmatpush.msra.mxu0 %v4657
    %v4659 = vand.u32 %v106, 4294901760
    %v4660 = vsub.f32 %v106, %v4659
    %v4661 = vand.u32 %v4660, 4294901760
    %4662 = vmatpush.msra.mxu0 %v4661
    %v4663 = vand.u32 %v98, 4294901760
    %v4664 = vsub.f32 %v98, %v4663
    %v4665 = vand.u32 %v4664, 4294901760
    %4666 = vmatpush.msra.mxu0 %v4665
    %v4667 = vand.u32 %v90, 4294901760
    %v4668 = vsub.f32 %v90, %v4667
    %v4669 = vand.u32 %v4668, 4294901760
    %4670 = vmatpush.msra.mxu0 %v4669
    %v4671 = vand.u32 %v82, 4294901760
    %v4672 = vsub.f32 %v82, %v4671
    %v4673 = vand.u32 %v4672, 4294901760
    %4674 = vmatpush.msra.mxu0 %v4673
    %v4675 = vand.u32 %v74, 4294901760
    %v4676 = vsub.f32 %v74, %v4675
    %v4677 = vand.u32 %v4676, 4294901760
    %4678 = vmatpush.msra.mxu0 %v4677
    %v4679 = vand.u32 %v66, 4294901760
    %v4680 = vsub.f32 %v66, %v4679
    %v4681 = vand.u32 %v4680, 4294901760
    %4682 = vmatpush.msra.mxu0 %v4681
    %v4683 = vand.u32 %v58, 4294901760
    %v4684 = vsub.f32 %v58, %v4683
    %v4685 = vand.u32 %v4684, 4294901760
    %4686 = vmatpush.msra.mxu0 %v4685
    %v4687 = vand.u32 %v50, 4294901760
    %v4688 = vsub.f32 %v50, %v4687
    %v4689 = vand.u32 %v4688, 4294901760
    %4690 = vmatpush.msra.mxu0 %v4689
    %v4691 = vand.u32 %v42, 4294901760
    %4692 = vmatmul.f32.gmra.mxu0 %v4691
    %v4693 = vpop.f32.mrf.mxu0
    %v4694 = vadd.f32 %v4625, %v4693
    %4695 = vdwg.mxu0
    %v4696 = vand.u32 %v170, 4294901760
    %4697 = vmatpush.msra.mxu0 %v4696
    %v4698 = vand.u32 %v162, 4294901760
    %4699 = vmatpush.msra.mxu0 %v4698
    %v4700 = vand.u32 %v154, 4294901760
    %4701 = vmatpush.msra.mxu0 %v4700
    %v4702 = vand.u32 %v146, 4294901760
    %4703 = vmatpush.msra.mxu0 %v4702
    %v4704 = vand.u32 %v138, 4294901760
    %4705 = vmatpush.msra.mxu0 %v4704
    %v4706 = vand.u32 %v130, 4294901760
    %4707 = vmatpush.msra.mxu0 %v4706
    %v4708 = vand.u32 %v122, 4294901760
    %4709 = vmatpush.msra.mxu0 %v4708
    %v4710 = vand.u32 %v114, 4294901760
    %4711 = vmatpush.msra.mxu0 %v4710
    %v4712 = vand.u32 %v106, 4294901760
    %4713 = vmatpush.msra.mxu0 %v4712
    %v4714 = vand.u32 %v98, 4294901760
    %4715 = vmatpush.msra.mxu0 %v4714
    %v4716 = vand.u32 %v90, 4294901760
    %4717 = vmatpush.msra.mxu0 %v4716
    %v4718 = vand.u32 %v82, 4294901760
    %4719 = vmatpush.msra.mxu0 %v4718
    %v4720 = vand.u32 %v74, 4294901760
    %4721 = vmatpush.msra.mxu0 %v4720
    %v4722 = vand.u32 %v66, 4294901760
    %4723 = vmatpush.msra.mxu0 %v4722
    %v4724 = vand.u32 %v58, 4294901760
    %4725 = vmatpush.msra.mxu0 %v4724
    %v4726 = vand.u32 %v50, 4294901760
    %4727 = vmatpush.msra.mxu0 %v4726
    %v4728 = vand.u32 %v42, 4294901760
    %4729 = vmatmul.f32.gmra.mxu0 %v4728
    %v4730 = vpop.f32.mrf.mxu0
    %v4731 = vadd.f32 %v4694, %v4730
    %4732 = vdwg.mxu0
    %v4733 = vand.u32 %v298, 4294901760
    %4734 = vmatpush.msra.mxu0 %v4733
    %v4735 = vand.u32 %v290, 4294901760
    %4736 = vmatpush.msra.mxu0 %v4735
    %v4737 = vand.u32 %v282, 4294901760
    %4738 = vmatpush.msra.mxu0 %v4737
    %v4739 = vand.u32 %v274, 4294901760
    %4740 = vmatpush.msra.mxu0 %v4739
    %v4741 = vand.u32 %v266, 4294901760
    %4742 = vmatpush.msra.mxu0 %v4741
    %v4743 = vand.u32 %v258, 4294901760
    %4744 = vmatpush.msra.mxu0 %v4743
    %v4745 = vand.u32 %v250, 4294901760
    %4746 = vmatpush.msra.mxu0 %v4745
    %v4747 = vand.u32 %v242, 4294901760
    %4748 = vmatpush.msra.mxu0 %v4747
    %v4749 = vand.u32 %v234, 4294901760
    %4750 = vmatpush.msra.mxu0 %v4749
    %v4751 = vand.u32 %v226, 4294901760
    %4752 = vmatpush.msra.mxu0 %v4751
    %v4753 = vand.u32 %v218, 4294901760
    %4754 = vmatpush.msra.mxu0 %v4753
    %v4755 = vand.u32 %v210, 4294901760
    %4756 = vmatpush.msra.mxu0 %v4755
    %v4757 = vand.u32 %v202, 4294901760
    %4758 = vmatpush.msra.mxu0 %v4757
    %v4759 = vand.u32 %v194, 4294901760
    %4760 = vmatpush.msra.mxu0 %v4759
    %v4761 = vand.u32 %v186, 4294901760
    %4762 = vmatpush.msra.mxu0 %v4761
    %v4763 = vand.u32 %v178, 4294901760
    %4764 = vmatpush.msra.mxu0 %v4763
    %v4765 = vand.u32 %v43, 4294901760
    %v4766 = vsub.f32 %v43, %v4765
    %v4767 = vand.u32 %v4766, 4294901760
    %v4768 = vsub.f32 %v4766, %v4767
    %v4769 = vand.u32 %v4768, 4294901760
    %4770 = vmatmul.f32.gmra.mxu0 %v4769
    %v4771 = vpop.f32.mrf.mxu0
    %v4772 = vadd.f32 %v4731, %v4771
    %4773 = vdwg.mxu0
    %v4774 = vand.u32 %v298, 4294901760
    %v4775 = vsub.f32 %v298, %v4774
    %v4776 = vand.u32 %v4775, 4294901760
    %v4777 = vsub.f32 %v4775, %v4776
    %v4778 = vand.u32 %v4777, 4294901760
    %4779 = vmatpush.msra.mxu0 %v4778
    %v4780 = vand.u32 %v290, 4294901760
    %v4781 = vsub.f32 %v290, %v4780
    %v4782 = vand.u32 %v4781, 4294901760
    %v4783 = vsub.f32 %v4781, %v4782
    %v4784 = vand.u32 %v4783, 4294901760
    %4785 = vmatpush.msra.mxu0 %v4784
    %v4786 = vand.u32 %v282, 4294901760
    %v4787 = vsub.f32 %v282, %v4786
    %v4788 = vand.u32 %v4787, 4294901760
    %v4789 = vsub.f32 %v4787, %v4788
    %v4790 = vand.u32 %v4789, 4294901760
    %4791 = vmatpush.msra.mxu0 %v4790
    %v4792 = vand.u32 %v274, 4294901760
    %v4793 = vsub.f32 %v274, %v4792
    %v4794 = vand.u32 %v4793, 4294901760
    %v4795 = vsub.f32 %v4793, %v4794
    %v4796 = vand.u32 %v4795, 4294901760
    %4797 = vmatpush.msra.mxu0 %v4796
    %v4798 = vand.u32 %v266, 4294901760
    %v4799 = vsub.f32 %v266, %v4798
    %v4800 = vand.u32 %v4799, 4294901760
    %v4801 = vsub.f32 %v4799, %v4800
    %v4802 = vand.u32 %v4801, 4294901760
    %4803 = vmatpush.msra.mxu0 %v4802
    %v4804 = vand.u32 %v258, 4294901760
    %v4805 = vsub.f32 %v258, %v4804
    %v4806 = vand.u32 %v4805, 4294901760
    %v4807 = vsub.f32 %v4805, %v4806
    %v4808 = vand.u32 %v4807, 4294901760
    %4809 = vmatpush.msra.mxu0 %v4808
    %v4810 = vand.u32 %v250, 4294901760
    %v4811 = vsub.f32 %v250, %v4810
    %v4812 = vand.u32 %v4811, 4294901760
    %v4813 = vsub.f32 %v4811, %v4812
    %v4814 = vand.u32 %v4813, 4294901760
    %4815 = vmatpush.msra.mxu0 %v4814
    %v4816 = vand.u32 %v242, 4294901760
    %v4817 = vsub.f32 %v242, %v4816
    %v4818 = vand.u32 %v4817, 4294901760
    %v4819 = vsub.f32 %v4817, %v4818
    %v4820 = vand.u32 %v4819, 4294901760
    %4821 = vmatpush.msra.mxu0 %v4820
    %v4822 = vand.u32 %v234, 4294901760
    %v4823 = vsub.f32 %v234, %v4822
    %v4824 = vand.u32 %v4823, 4294901760
    %v4825 = vsub.f32 %v4823, %v4824
    %v4826 = vand.u32 %v4825, 4294901760
    %4827 = vmatpush.msra.mxu0 %v4826
    %v4828 = vand.u32 %v226, 4294901760
    %v4829 = vsub.f32 %v226, %v4828
    %v4830 = vand.u32 %v4829, 4294901760
    %v4831 = vsub.f32 %v4829, %v4830
    %v4832 = vand.u32 %v4831, 4294901760
    %4833 = vmatpush.msra.mxu0 %v4832
    %v4834 = vand.u32 %v218, 4294901760
    %v4835 = vsub.f32 %v218, %v4834
    %v4836 = vand.u32 %v4835, 4294901760
    %v4837 = vsub.f32 %v4835, %v4836
    %v4838 = vand.u32 %v4837, 4294901760
    %4839 = vmatpush.msra.mxu0 %v4838
    %v4840 = vand.u32 %v210, 4294901760
    %v4841 = vsub.f32 %v210, %v4840
    %v4842 = vand.u32 %v4841, 4294901760
    %v4843 = vsub.f32 %v4841, %v4842
    %v4844 = vand.u32 %v4843, 4294901760
    %4845 = vmatpush.msra.mxu0 %v4844
    %v4846 = vand.u32 %v202, 4294901760
    %v4847 = vsub.f32 %v202, %v4846
    %v4848 = vand.u32 %v4847, 4294901760
    %v4849 = vsub.f32 %v4847, %v4848
    %v4850 = vand.u32 %v4849, 4294901760
    %4851 = vmatpush.msra.mxu0 %v4850
    %v4852 = vand.u32 %v194, 4294901760
    %v4853 = vsub.f32 %v194, %v4852
    %v4854 = vand.u32 %v4853, 4294901760
    %v4855 = vsub.f32 %v4853, %v4854
    %v4856 = vand.u32 %v4855, 4294901760
    %4857 = vmatpush.msra.mxu0 %v4856
    %v4858 = vand.u32 %v186, 4294901760
    %v4859 = vsub.f32 %v186, %v4858
    %v4860 = vand.u32 %v4859, 4294901760
    %v4861 = vsub.f32 %v4859, %v4860
    %v4862 = vand.u32 %v4861, 4294901760
    %4863 = vmatpush.msra.mxu0 %v4862
    %v4864 = vand.u32 %v178, 4294901760
    %v4865 = vsub.f32 %v178, %v4864
    %v4866 = vand.u32 %v4865, 4294901760
    %v4867 = vsub.f32 %v4865, %v4866
    %v4868 = vand.u32 %v4867, 4294901760
    %4869 = vmatpush.msra.mxu0 %v4868
    %v4870 = vand.u32 %v43, 4294901760
    %4871 = vmatmul.f32.gmra.mxu0 %v4870
    %v4872 = vpop.f32.mrf.mxu0
    %v4873 = vadd.f32 %v4772, %v4872
    %4874 = vdwg.mxu0
    %v4875 = vand.u32 %v298, 4294901760
    %v4876 = vsub.f32 %v298, %v4875
    %4877 = vmatpush.msra.mxu0 %v4876
    %v4878 = vand.u32 %v290, 4294901760
    %v4879 = vsub.f32 %v290, %v4878
    %4880 = vmatpush.msra.mxu0 %v4879
    %v4881 = vand.u32 %v282, 4294901760
    %v4882 = vsub.f32 %v282, %v4881
    %4883 = vmatpush.msra.mxu0 %v4882
    %v4884 = vand.u32 %v274, 4294901760
    %v4885 = vsub.f32 %v274, %v4884
    %4886 = vmatpush.msra.mxu0 %v4885
    %v4887 = vand.u32 %v266, 4294901760
    %v4888 = vsub.f32 %v266, %v4887
    %4889 = vmatpush.msra.mxu0 %v4888
    %v4890 = vand.u32 %v258, 4294901760
    %v4891 = vsub.f32 %v258, %v4890
    %4892 = vmatpush.msra.mxu0 %v4891
    %v4893 = vand.u32 %v250, 4294901760
    %v4894 = vsub.f32 %v250, %v4893
    %4895 = vmatpush.msra.mxu0 %v4894
    %v4896 = vand.u32 %v242, 4294901760
    %v4897 = vsub.f32 %v242, %v4896
    %4898 = vmatpush.msra.mxu0 %v4897
    %v4899 = vand.u32 %v234, 4294901760
    %v4900 = vsub.f32 %v234, %v4899
    %4901 = vmatpush.msra.mxu0 %v4900
    %v4902 = vand.u32 %v226, 4294901760
    %v4903 = vsub.f32 %v226, %v4902
    %4904 = vmatpush.msra.mxu0 %v4903
    %v4905 = vand.u32 %v218, 4294901760
    %v4906 = vsub.f32 %v218, %v4905
    %4907 = vmatpush.msra.mxu0 %v4906
    %v4908 = vand.u32 %v210, 4294901760
    %v4909 = vsub.f32 %v210, %v4908
    %4910 = vmatpush.msra.mxu0 %v4909
    %v4911 = vand.u32 %v202, 4294901760
    %v4912 = vsub.f32 %v202, %v4911
    %4913 = vmatpush.msra.mxu0 %v4912
    %v4914 = vand.u32 %v194, 4294901760
    %v4915 = vsub.f32 %v194, %v4914
    %4916 = vmatpush.msra.mxu0 %v4915
    %v4917 = vand.u32 %v186, 4294901760
    %v4918 = vsub.f32 %v186, %v4917
    %4919 = vmatpush.msra.mxu0 %v4918
    %v4920 = vand.u32 %v178, 4294901760
    %v4921 = vsub.f32 %v178, %v4920
    %4922 = vmatpush.msra.mxu0 %v4921
    %v4923 = vand.u32 %v43, 4294901760
    %v4924 = vsub.f32 %v43, %v4923
    %4925 = vmatmul.f32.gmra.mxu0 %v4924
    %v4926 = vpop.f32.mrf.mxu0
    %v4927 = vadd.f32 %v4873, %v4926
    %4928 = vdwg.mxu0
    %v4929 = vand.u32 %v298, 4294901760
    %4930 = vmatpush.msra.mxu0 %v4929
    %v4931 = vand.u32 %v290, 4294901760
    %4932 = vmatpush.msra.mxu0 %v4931
    %v4933 = vand.u32 %v282, 4294901760
    %4934 = vmatpush.msra.mxu0 %v4933
    %v4935 = vand.u32 %v274, 4294901760
    %4936 = vmatpush.msra.mxu0 %v4935
    %v4937 = vand.u32 %v266, 4294901760
    %4938 = vmatpush.msra.mxu0 %v4937
    %v4939 = vand.u32 %v258, 4294901760
    %4940 = vmatpush.msra.mxu0 %v4939
    %v4941 = vand.u32 %v250, 4294901760
    %4942 = vmatpush.msra.mxu0 %v4941
    %v4943 = vand.u32 %v242, 4294901760
    %4944 = vmatpush.msra.mxu0 %v4943
    %v4945 = vand.u32 %v234, 4294901760
    %4946 = vmatpush.msra.mxu0 %v4945
    %v4947 = vand.u32 %v226, 4294901760
    %4948 = vmatpush.msra.mxu0 %v4947
    %v4949 = vand.u32 %v218, 4294901760
    %4950 = vmatpush.msra.mxu0 %v4949
    %v4951 = vand.u32 %v210, 4294901760
    %4952 = vmatpush.msra.mxu0 %v4951
    %v4953 = vand.u32 %v202, 4294901760
    %4954 = vmatpush.msra.mxu0 %v4953
    %v4955 = vand.u32 %v194, 4294901760
    %4956 = vmatpush.msra.mxu0 %v4955
    %v4957 = vand.u32 %v186, 4294901760
    %4958 = vmatpush.msra.mxu0 %v4957
    %v4959 = vand.u32 %v178, 4294901760
    %4960 = vmatpush.msra.mxu0 %v4959
    %v4961 = vand.u32 %v43, 4294901760
    %v4962 = vsub.f32 %v43, %v4961
    %v4963 = vand.u32 %v4962, 4294901760
    %4964 = vmatmul.f32.gmra.mxu0 %v4963
    %v4965 = vpop.f32.mrf.mxu0
    %v4966 = vadd.f32 %v4927, %v4965
    %4967 = vdwg.mxu0
    %v4968 = vand.u32 %v298, 4294901760
    %v4969 = vsub.f32 %v298, %v4968
    %v4970 = vand.u32 %v4969, 4294901760
    %4971 = vmatpush.msra.mxu0 %v4970
    %v4972 = vand.u32 %v290, 4294901760
    %v4973 = vsub.f32 %v290, %v4972
    %v4974 = vand.u32 %v4973, 4294901760
    %4975 = vmatpush.msra.mxu0 %v4974
    %v4976 = vand.u32 %v282, 4294901760
    %v4977 = vsub.f32 %v282, %v4976
    %v4978 = vand.u32 %v4977, 4294901760
    %4979 = vmatpush.msra.mxu0 %v4978
    %v4980 = vand.u32 %v274, 4294901760
    %v4981 = vsub.f32 %v274, %v4980
    %v4982 = vand.u32 %v4981, 4294901760
    %4983 = vmatpush.msra.mxu0 %v4982
    %v4984 = vand.u32 %v266, 4294901760
    %v4985 = vsub.f32 %v266, %v4984
    %v4986 = vand.u32 %v4985, 4294901760
    %4987 = vmatpush.msra.mxu0 %v4986
    %v4988 = vand.u32 %v258, 4294901760
    %v4989 = vsub.f32 %v258, %v4988
    %v4990 = vand.u32 %v4989, 4294901760
    %4991 = vmatpush.msra.mxu0 %v4990
    %v4992 = vand.u32 %v250, 4294901760
    %v4993 = vsub.f32 %v250, %v4992
    %v4994 = vand.u32 %v4993, 4294901760
    %4995 = vmatpush.msra.mxu0 %v4994
    %v4996 = vand.u32 %v242, 4294901760
    %v4997 = vsub.f32 %v242, %v4996
    %v4998 = vand.u32 %v4997, 4294901760
    %4999 = vmatpush.msra.mxu0 %v4998
    %v5000 = vand.u32 %v234, 4294901760
    %v5001 = vsub.f32 %v234, %v5000
    %v5002 = vand.u32 %v5001, 4294901760
    %5003 = vmatpush.msra.mxu0 %v5002
    %v5004 = vand.u32 %v226, 4294901760
    %v5005 = vsub.f32 %v226, %v5004
    %v5006 = vand.u32 %v5005, 4294901760
    %5007 = vmatpush.msra.mxu0 %v5006
    %v5008 = vand.u32 %v218, 4294901760
    %v5009 = vsub.f32 %v218, %v5008
    %v5010 = vand.u32 %v5009, 4294901760
    %5011 = vmatpush.msra.mxu0 %v5010
    %v5012 = vand.u32 %v210, 4294901760
    %v5013 = vsub.f32 %v210, %v5012
    %v5014 = vand.u32 %v5013, 4294901760
    %5015 = vmatpush.msra.mxu0 %v5014
    %v5016 = vand.u32 %v202, 4294901760
    %v5017 = vsub.f32 %v202, %v5016
    %v5018 = vand.u32 %v5017, 4294901760
    %5019 = vmatpush.msra.mxu0 %v5018
    %v5020 = vand.u32 %v194, 4294901760
    %v5021 = vsub.f32 %v194, %v5020
    %v5022 = vand.u32 %v5021, 4294901760
    %5023 = vmatpush.msra.mxu0 %v5022
    %v5024 = vand.u32 %v186, 4294901760
    %v5025 = vsub.f32 %v186, %v5024
    %v5026 = vand.u32 %v5025, 4294901760
    %5027 = vmatpush.msra.mxu0 %v5026
    %v5028 = vand.u32 %v178, 4294901760
    %v5029 = vsub.f32 %v178, %v5028
    %v5030 = vand.u32 %v5029, 4294901760
    %5031 = vmatpush.msra.mxu0 %v5030
    %v5032 = vand.u32 %v43, 4294901760
    %5033 = vmatmul.f32.gmra.mxu0 %v5032
    %v5034 = vpop.f32.mrf.mxu0
    %v5035 = vadd.f32 %v4966, %v5034
    %5036 = vdwg.mxu0
    %v5037 = vand.u32 %v298, 4294901760
    %5038 = vmatpush.msra.mxu0 %v5037
    %v5039 = vand.u32 %v290, 4294901760
    %5040 = vmatpush.msra.mxu0 %v5039
    %v5041 = vand.u32 %v282, 4294901760
    %5042 = vmatpush.msra.mxu0 %v5041
    %v5043 = vand.u32 %v274, 4294901760
    %5044 = vmatpush.msra.mxu0 %v5043
    %v5045 = vand.u32 %v266, 4294901760
    %5046 = vmatpush.msra.mxu0 %v5045
    %v5047 = vand.u32 %v258, 4294901760
    %5048 = vmatpush.msra.mxu0 %v5047
    %v5049 = vand.u32 %v250, 4294901760
    %5050 = vmatpush.msra.mxu0 %v5049
    %v5051 = vand.u32 %v242, 4294901760
    %5052 = vmatpush.msra.mxu0 %v5051
    %v5053 = vand.u32 %v234, 4294901760
    %5054 = vmatpush.msra.mxu0 %v5053
    %v5055 = vand.u32 %v226, 4294901760
    %5056 = vmatpush.msra.mxu0 %v5055
    %v5057 = vand.u32 %v218, 4294901760
    %5058 = vmatpush.msra.mxu0 %v5057
    %v5059 = vand.u32 %v210, 4294901760
    %5060 = vmatpush.msra.mxu0 %v5059
    %v5061 = vand.u32 %v202, 4294901760
    %5062 = vmatpush.msra.mxu0 %v5061
    %v5063 = vand.u32 %v194, 4294901760
    %5064 = vmatpush.msra.mxu0 %v5063
    %v5065 = vand.u32 %v186, 4294901760
    %5066 = vmatpush.msra.mxu0 %v5065
    %v5067 = vand.u32 %v178, 4294901760
    %5068 = vmatpush.msra.mxu0 %v5067
    %v5069 = vand.u32 %v43, 4294901760
    %5070 = vmatmul.f32.gmra.mxu0 %v5069
    %v5071 = vpop.f32.mrf.mxu0
    %v5072 = vadd.f32 %v5035, %v5071
    %5073 = vdwg.mxu0
    %v5074 = vand.u32 %v171, 4294901760
    %5075 = vmatpush.msra.mxu0 %v5074
    %v5076 = vand.u32 %v163, 4294901760
    %5077 = vmatpush.msra.mxu0 %v5076
    %v5078 = vand.u32 %v155, 4294901760
    %5079 = vmatpush.msra.mxu0 %v5078
    %v5080 = vand.u32 %v147, 4294901760
    %5081 = vmatpush.msra.mxu0 %v5080
    %v5082 = vand.u32 %v139, 4294901760
    %5083 = vmatpush.msra.mxu0 %v5082
    %v5084 = vand.u32 %v131, 4294901760
    %5085 = vmatpush.msra.mxu0 %v5084
    %v5086 = vand.u32 %v123, 4294901760
    %5087 = vmatpush.msra.mxu0 %v5086
    %v5088 = vand.u32 %v115, 4294901760
    %5089 = vmatpush.msra.mxu0 %v5088
    %v5090 = vand.u32 %v107, 4294901760
    %5091 = vmatpush.msra.mxu0 %v5090
    %v5092 = vand.u32 %v99, 4294901760
    %5093 = vmatpush.msra.mxu0 %v5092
    %v5094 = vand.u32 %v91, 4294901760
    %5095 = vmatpush.msra.mxu0 %v5094
    %v5096 = vand.u32 %v83, 4294901760
    %5097 = vmatpush.msra.mxu0 %v5096
    %v5098 = vand.u32 %v75, 4294901760
    %5099 = vmatpush.msra.mxu0 %v5098
    %v5100 = vand.u32 %v67, 4294901760
    %5101 = vmatpush.msra.mxu0 %v5100
    %v5102 = vand.u32 %v59, 4294901760
    %5103 = vmatpush.msra.mxu0 %v5102
    %v5104 = vand.u32 %v51, 4294901760
    %5105 = vmatpush.msra.mxu0 %v5104
    %v5106 = vand.u32 %v42, 4294901760
    %v5107 = vsub.f32 %v42, %v5106
    %v5108 = vand.u32 %v5107, 4294901760
    %v5109 = vsub.f32 %v5107, %v5108
    %v5110 = vand.u32 %v5109, 4294901760
    %5111 = vmatmul.f32.gmra.mxu0 %v5110
    %v5112 = vpop.f32.mrf.mxu0
    %v5113 = vadd.f32 0.0, %v5112
    %5114 = vdwg.mxu0
    %v5115 = vand.u32 %v171, 4294901760
    %v5116 = vsub.f32 %v171, %v5115
    %v5117 = vand.u32 %v5116, 4294901760
    %v5118 = vsub.f32 %v5116, %v5117
    %v5119 = vand.u32 %v5118, 4294901760
    %5120 = vmatpush.msra.mxu0 %v5119
    %v5121 = vand.u32 %v163, 4294901760
    %v5122 = vsub.f32 %v163, %v5121
    %v5123 = vand.u32 %v5122, 4294901760
    %v5124 = vsub.f32 %v5122, %v5123
    %v5125 = vand.u32 %v5124, 4294901760
    %5126 = vmatpush.msra.mxu0 %v5125
    %v5127 = vand.u32 %v155, 4294901760
    %v5128 = vsub.f32 %v155, %v5127
    %v5129 = vand.u32 %v5128, 4294901760
    %v5130 = vsub.f32 %v5128, %v5129
    %v5131 = vand.u32 %v5130, 4294901760
    %5132 = vmatpush.msra.mxu0 %v5131
    %v5133 = vand.u32 %v147, 4294901760
    %v5134 = vsub.f32 %v147, %v5133
    %v5135 = vand.u32 %v5134, 4294901760
    %v5136 = vsub.f32 %v5134, %v5135
    %v5137 = vand.u32 %v5136, 4294901760
    %5138 = vmatpush.msra.mxu0 %v5137
    %v5139 = vand.u32 %v139, 4294901760
    %v5140 = vsub.f32 %v139, %v5139
    %v5141 = vand.u32 %v5140, 4294901760
    %v5142 = vsub.f32 %v5140, %v5141
    %v5143 = vand.u32 %v5142, 4294901760
    %5144 = vmatpush.msra.mxu0 %v5143
    %v5145 = vand.u32 %v131, 4294901760
    %v5146 = vsub.f32 %v131, %v5145
    %v5147 = vand.u32 %v5146, 4294901760
    %v5148 = vsub.f32 %v5146, %v5147
    %v5149 = vand.u32 %v5148, 4294901760
    %5150 = vmatpush.msra.mxu0 %v5149
    %v5151 = vand.u32 %v123, 4294901760
    %v5152 = vsub.f32 %v123, %v5151
    %v5153 = vand.u32 %v5152, 4294901760
    %v5154 = vsub.f32 %v5152, %v5153
    %v5155 = vand.u32 %v5154, 4294901760
    %5156 = vmatpush.msra.mxu0 %v5155
    %v5157 = vand.u32 %v115, 4294901760
    %v5158 = vsub.f32 %v115, %v5157
    %v5159 = vand.u32 %v5158, 4294901760
    %v5160 = vsub.f32 %v5158, %v5159
    %v5161 = vand.u32 %v5160, 4294901760
    %5162 = vmatpush.msra.mxu0 %v5161
    %v5163 = vand.u32 %v107, 4294901760
    %v5164 = vsub.f32 %v107, %v5163
    %v5165 = vand.u32 %v5164, 4294901760
    %v5166 = vsub.f32 %v5164, %v5165
    %v5167 = vand.u32 %v5166, 4294901760
    %5168 = vmatpush.msra.mxu0 %v5167
    %v5169 = vand.u32 %v99, 4294901760
    %v5170 = vsub.f32 %v99, %v5169
    %v5171 = vand.u32 %v5170, 4294901760
    %v5172 = vsub.f32 %v5170, %v5171
    %v5173 = vand.u32 %v5172, 4294901760
    %5174 = vmatpush.msra.mxu0 %v5173
    %v5175 = vand.u32 %v91, 4294901760
    %v5176 = vsub.f32 %v91, %v5175
    %v5177 = vand.u32 %v5176, 4294901760
    %v5178 = vsub.f32 %v5176, %v5177
    %v5179 = vand.u32 %v5178, 4294901760
    %5180 = vmatpush.msra.mxu0 %v5179
    %v5181 = vand.u32 %v83, 4294901760
    %v5182 = vsub.f32 %v83, %v5181
    %v5183 = vand.u32 %v5182, 4294901760
    %v5184 = vsub.f32 %v5182, %v5183
    %v5185 = vand.u32 %v5184, 4294901760
    %5186 = vmatpush.msra.mxu0 %v5185
    %v5187 = vand.u32 %v75, 4294901760
    %v5188 = vsub.f32 %v75, %v5187
    %v5189 = vand.u32 %v5188, 4294901760
    %v5190 = vsub.f32 %v5188, %v5189
    %v5191 = vand.u32 %v5190, 4294901760
    %5192 = vmatpush.msra.mxu0 %v5191
    %v5193 = vand.u32 %v67, 4294901760
    %v5194 = vsub.f32 %v67, %v5193
    %v5195 = vand.u32 %v5194, 4294901760
    %v5196 = vsub.f32 %v5194, %v5195
    %v5197 = vand.u32 %v5196, 4294901760
    %5198 = vmatpush.msra.mxu0 %v5197
    %v5199 = vand.u32 %v59, 4294901760
    %v5200 = vsub.f32 %v59, %v5199
    %v5201 = vand.u32 %v5200, 4294901760
    %v5202 = vsub.f32 %v5200, %v5201
    %v5203 = vand.u32 %v5202, 4294901760
    %5204 = vmatpush.msra.mxu0 %v5203
    %v5205 = vand.u32 %v51, 4294901760
    %v5206 = vsub.f32 %v51, %v5205
    %v5207 = vand.u32 %v5206, 4294901760
    %v5208 = vsub.f32 %v5206, %v5207
    %v5209 = vand.u32 %v5208, 4294901760
    %5210 = vmatpush.msra.mxu0 %v5209
    %v5211 = vand.u32 %v42, 4294901760
    %5212 = vmatmul.f32.gmra.mxu0 %v5211
    %v5213 = vpop.f32.mrf.mxu0
    %v5214 = vadd.f32 %v5113, %v5213
    %5215 = vdwg.mxu0
    %v5216 = vand.u32 %v171, 4294901760
    %v5217 = vsub.f32 %v171, %v5216
    %5218 = vmatpush.msra.mxu0 %v5217
    %v5219 = vand.u32 %v163, 4294901760
    %v5220 = vsub.f32 %v163, %v5219
    %5221 = vmatpush.msra.mxu0 %v5220
    %v5222 = vand.u32 %v155, 4294901760
    %v5223 = vsub.f32 %v155, %v5222
    %5224 = vmatpush.msra.mxu0 %v5223
    %v5225 = vand.u32 %v147, 4294901760
    %v5226 = vsub.f32 %v147, %v5225
    %5227 = vmatpush.msra.mxu0 %v5226
    %v5228 = vand.u32 %v139, 4294901760
    %v5229 = vsub.f32 %v139, %v5228
    %5230 = vmatpush.msra.mxu0 %v5229
    %v5231 = vand.u32 %v131, 4294901760
    %v5232 = vsub.f32 %v131, %v5231
    %5233 = vmatpush.msra.mxu0 %v5232
    %v5234 = vand.u32 %v123, 4294901760
    %v5235 = vsub.f32 %v123, %v5234
    %5236 = vmatpush.msra.mxu0 %v5235
    %v5237 = vand.u32 %v115, 4294901760
    %v5238 = vsub.f32 %v115, %v5237
    %5239 = vmatpush.msra.mxu0 %v5238
    %v5240 = vand.u32 %v107, 4294901760
    %v5241 = vsub.f32 %v107, %v5240
    %5242 = vmatpush.msra.mxu0 %v5241
    %v5243 = vand.u32 %v99, 4294901760
    %v5244 = vsub.f32 %v99, %v5243
    %5245 = vmatpush.msra.mxu0 %v5244
    %v5246 = vand.u32 %v91, 4294901760
    %v5247 = vsub.f32 %v91, %v5246
    %5248 = vmatpush.msra.mxu0 %v5247
    %v5249 = vand.u32 %v83, 4294901760
    %v5250 = vsub.f32 %v83, %v5249
    %5251 = vmatpush.msra.mxu0 %v5250
    %v5252 = vand.u32 %v75, 4294901760
    %v5253 = vsub.f32 %v75, %v5252
    %5254 = vmatpush.msra.mxu0 %v5253
    %v5255 = vand.u32 %v67, 4294901760
    %v5256 = vsub.f32 %v67, %v5255
    %5257 = vmatpush.msra.mxu0 %v5256
    %v5258 = vand.u32 %v59, 4294901760
    %v5259 = vsub.f32 %v59, %v5258
    %5260 = vmatpush.msra.mxu0 %v5259
    %v5261 = vand.u32 %v51, 4294901760
    %v5262 = vsub.f32 %v51, %v5261
    %5263 = vmatpush.msra.mxu0 %v5262
    %v5264 = vand.u32 %v42, 4294901760
    %v5265 = vsub.f32 %v42, %v5264
    %5266 = vmatmul.f32.gmra.mxu0 %v5265
    %v5267 = vpop.f32.mrf.mxu0
    %v5268 = vadd.f32 %v5214, %v5267
    %5269 = vdwg.mxu0
    %v5270 = vand.u32 %v171, 4294901760
    %5271 = vmatpush.msra.mxu0 %v5270
    %v5272 = vand.u32 %v163, 4294901760
    %5273 = vmatpush.msra.mxu0 %v5272
    %v5274 = vand.u32 %v155, 4294901760
    %5275 = vmatpush.msra.mxu0 %v5274
    %v5276 = vand.u32 %v147, 4294901760
    %5277 = vmatpush.msra.mxu0 %v5276
    %v5278 = vand.u32 %v139, 4294901760
    %5279 = vmatpush.msra.mxu0 %v5278
    %v5280 = vand.u32 %v131, 4294901760
    %5281 = vmatpush.msra.mxu0 %v5280
    %v5282 = vand.u32 %v123, 4294901760
    %5283 = vmatpush.msra.mxu0 %v5282
    %v5284 = vand.u32 %v115, 4294901760
    %5285 = vmatpush.msra.mxu0 %v5284
    %v5286 = vand.u32 %v107, 4294901760
    %5287 = vmatpush.msra.mxu0 %v5286
    %v5288 = vand.u32 %v99, 4294901760
    %5289 = vmatpush.msra.mxu0 %v5288
    %v5290 = vand.u32 %v91, 4294901760
    %5291 = vmatpush.msra.mxu0 %v5290
    %v5292 = vand.u32 %v83, 4294901760
    %5293 = vmatpush.msra.mxu0 %v5292
    %v5294 = vand.u32 %v75, 4294901760
    %5295 = vmatpush.msra.mxu0 %v5294
    %v5296 = vand.u32 %v67, 4294901760
    %5297 = vmatpush.msra.mxu0 %v5296
    %v5298 = vand.u32 %v59, 4294901760
    %5299 = vmatpush.msra.mxu0 %v5298
    %v5300 = vand.u32 %v51, 4294901760
    %5301 = vmatpush.msra.mxu0 %v5300
    %v5302 = vand.u32 %v42, 4294901760
    %v5303 = vsub.f32 %v42, %v5302
    %v5304 = vand.u32 %v5303, 4294901760
    %5305 = vmatmul.f32.gmra.mxu0 %v5304
    %v5306 = vpop.f32.mrf.mxu0
    %v5307 = vadd.f32 %v5268, %v5306
    %5308 = vdwg.mxu0
    %v5309 = vand.u32 %v171, 4294901760
    %v5310 = vsub.f32 %v171, %v5309
    %v5311 = vand.u32 %v5310, 4294901760
    %5312 = vmatpush.msra.mxu0 %v5311
    %v5313 = vand.u32 %v163, 4294901760
    %v5314 = vsub.f32 %v163, %v5313
    %v5315 = vand.u32 %v5314, 4294901760
    %5316 = vmatpush.msra.mxu0 %v5315
    %v5317 = vand.u32 %v155, 4294901760
    %v5318 = vsub.f32 %v155, %v5317
    %v5319 = vand.u32 %v5318, 4294901760
    %5320 = vmatpush.msra.mxu0 %v5319
    %v5321 = vand.u32 %v147, 4294901760
    %v5322 = vsub.f32 %v147, %v5321
    %v5323 = vand.u32 %v5322, 4294901760
    %5324 = vmatpush.msra.mxu0 %v5323
    %v5325 = vand.u32 %v139, 4294901760
    %v5326 = vsub.f32 %v139, %v5325
    %v5327 = vand.u32 %v5326, 4294901760
    %5328 = vmatpush.msra.mxu0 %v5327
    %v5329 = vand.u32 %v131, 4294901760
    %v5330 = vsub.f32 %v131, %v5329
    %v5331 = vand.u32 %v5330, 4294901760
    %5332 = vmatpush.msra.mxu0 %v5331
    %v5333 = vand.u32 %v123, 4294901760
    %v5334 = vsub.f32 %v123, %v5333
    %v5335 = vand.u32 %v5334, 4294901760
    %5336 = vmatpush.msra.mxu0 %v5335
    %v5337 = vand.u32 %v115, 4294901760
    %v5338 = vsub.f32 %v115, %v5337
    %v5339 = vand.u32 %v5338, 4294901760
    %5340 = vmatpush.msra.mxu0 %v5339
    %v5341 = vand.u32 %v107, 4294901760
    %v5342 = vsub.f32 %v107, %v5341
    %v5343 = vand.u32 %v5342, 4294901760
    %5344 = vmatpush.msra.mxu0 %v5343
    %v5345 = vand.u32 %v99, 4294901760
    %v5346 = vsub.f32 %v99, %v5345
    %v5347 = vand.u32 %v5346, 4294901760
    %5348 = vmatpush.msra.mxu0 %v5347
    %v5349 = vand.u32 %v91, 4294901760
    %v5350 = vsub.f32 %v91, %v5349
    %v5351 = vand.u32 %v5350, 4294901760
    %5352 = vmatpush.msra.mxu0 %v5351
    %v5353 = vand.u32 %v83, 4294901760
    %v5354 = vsub.f32 %v83, %v5353
    %v5355 = vand.u32 %v5354, 4294901760
    %5356 = vmatpush.msra.mxu0 %v5355
    %v5357 = vand.u32 %v75, 4294901760
    %v5358 = vsub.f32 %v75, %v5357
    %v5359 = vand.u32 %v5358, 4294901760
    %5360 = vmatpush.msra.mxu0 %v5359
    %v5361 = vand.u32 %v67, 4294901760
    %v5362 = vsub.f32 %v67, %v5361
    %v5363 = vand.u32 %v5362, 4294901760
    %5364 = vmatpush.msra.mxu0 %v5363
    %v5365 = vand.u32 %v59, 4294901760
    %v5366 = vsub.f32 %v59, %v5365
    %v5367 = vand.u32 %v5366, 4294901760
    %5368 = vmatpush.msra.mxu0 %v5367
    %v5369 = vand.u32 %v51, 4294901760
    %v5370 = vsub.f32 %v51, %v5369
    %v5371 = vand.u32 %v5370, 4294901760
    %5372 = vmatpush.msra.mxu0 %v5371
    %v5373 = vand.u32 %v42, 4294901760
    %5374 = vmatmul.f32.gmra.mxu0 %v5373
    %v5375 = vpop.f32.mrf.mxu0
    %v5376 = vadd.f32 %v5307, %v5375
    %5377 = vdwg.mxu0
    %v5378 = vand.u32 %v171, 4294901760
    %5379 = vmatpush.msra.mxu0 %v5378
    %v5380 = vand.u32 %v163, 4294901760
    %5381 = vmatpush.msra.mxu0 %v5380
    %v5382 = vand.u32 %v155, 4294901760
    %5383 = vmatpush.msra.mxu0 %v5382
    %v5384 = vand.u32 %v147, 4294901760
    %5385 = vmatpush.msra.mxu0 %v5384
    %v5386 = vand.u32 %v139, 4294901760
    %5387 = vmatpush.msra.mxu0 %v5386
    %v5388 = vand.u32 %v131, 4294901760
    %5389 = vmatpush.msra.mxu0 %v5388
    %v5390 = vand.u32 %v123, 4294901760
    %5391 = vmatpush.msra.mxu0 %v5390
    %v5392 = vand.u32 %v115, 4294901760
    %5393 = vmatpush.msra.mxu0 %v5392
    %v5394 = vand.u32 %v107, 4294901760
    %5395 = vmatpush.msra.mxu0 %v5394
    %v5396 = vand.u32 %v99, 4294901760
    %5397 = vmatpush.msra.mxu0 %v5396
    %v5398 = vand.u32 %v91, 4294901760
    %5399 = vmatpush.msra.mxu0 %v5398
    %v5400 = vand.u32 %v83, 4294901760
    %5401 = vmatpush.msra.mxu0 %v5400
    %v5402 = vand.u32 %v75, 4294901760
    %5403 = vmatpush.msra.mxu0 %v5402
    %v5404 = vand.u32 %v67, 4294901760
    %5405 = vmatpush.msra.mxu0 %v5404
    %v5406 = vand.u32 %v59, 4294901760
    %5407 = vmatpush.msra.mxu0 %v5406
    %v5408 = vand.u32 %v51, 4294901760
    %5409 = vmatpush.msra.mxu0 %v5408
    %v5410 = vand.u32 %v42, 4294901760
    %5411 = vmatmul.f32.gmra.mxu0 %v5410
    %v5412 = vpop.f32.mrf.mxu0
    %v5413 = vadd.f32 %v5376, %v5412
    %5414 = vdwg.mxu0
    %v5415 = vand.u32 %v299, 4294901760
    %5416 = vmatpush.msra.mxu0 %v5415
    %v5417 = vand.u32 %v291, 4294901760
    %5418 = vmatpush.msra.mxu0 %v5417
    %v5419 = vand.u32 %v283, 4294901760
    %5420 = vmatpush.msra.mxu0 %v5419
    %v5421 = vand.u32 %v275, 4294901760
    %5422 = vmatpush.msra.mxu0 %v5421
    %v5423 = vand.u32 %v267, 4294901760
    %5424 = vmatpush.msra.mxu0 %v5423
    %v5425 = vand.u32 %v259, 4294901760
    %5426 = vmatpush.msra.mxu0 %v5425
    %v5427 = vand.u32 %v251, 4294901760
    %5428 = vmatpush.msra.mxu0 %v5427
    %v5429 = vand.u32 %v243, 4294901760
    %5430 = vmatpush.msra.mxu0 %v5429
    %v5431 = vand.u32 %v235, 4294901760
    %5432 = vmatpush.msra.mxu0 %v5431
    %v5433 = vand.u32 %v227, 4294901760
    %5434 = vmatpush.msra.mxu0 %v5433
    %v5435 = vand.u32 %v219, 4294901760
    %5436 = vmatpush.msra.mxu0 %v5435
    %v5437 = vand.u32 %v211, 4294901760
    %5438 = vmatpush.msra.mxu0 %v5437
    %v5439 = vand.u32 %v203, 4294901760
    %5440 = vmatpush.msra.mxu0 %v5439
    %v5441 = vand.u32 %v195, 4294901760
    %5442 = vmatpush.msra.mxu0 %v5441
    %v5443 = vand.u32 %v187, 4294901760
    %5444 = vmatpush.msra.mxu0 %v5443
    %v5445 = vand.u32 %v179, 4294901760
    %5446 = vmatpush.msra.mxu0 %v5445
    %v5447 = vand.u32 %v43, 4294901760
    %v5448 = vsub.f32 %v43, %v5447
    %v5449 = vand.u32 %v5448, 4294901760
    %v5450 = vsub.f32 %v5448, %v5449
    %v5451 = vand.u32 %v5450, 4294901760
    %5452 = vmatmul.f32.gmra.mxu0 %v5451
    %v5453 = vpop.f32.mrf.mxu0
    %v5454 = vadd.f32 %v5413, %v5453
    %5455 = vdwg.mxu0
    %v5456 = vand.u32 %v299, 4294901760
    %v5457 = vsub.f32 %v299, %v5456
    %v5458 = vand.u32 %v5457, 4294901760
    %v5459 = vsub.f32 %v5457, %v5458
    %v5460 = vand.u32 %v5459, 4294901760
    %5461 = vmatpush.msra.mxu0 %v5460
    %v5462 = vand.u32 %v291, 4294901760
    %v5463 = vsub.f32 %v291, %v5462
    %v5464 = vand.u32 %v5463, 4294901760
    %v5465 = vsub.f32 %v5463, %v5464
    %v5466 = vand.u32 %v5465, 4294901760
    %5467 = vmatpush.msra.mxu0 %v5466
    %v5468 = vand.u32 %v283, 4294901760
    %v5469 = vsub.f32 %v283, %v5468
    %v5470 = vand.u32 %v5469, 4294901760
    %v5471 = vsub.f32 %v5469, %v5470
    %v5472 = vand.u32 %v5471, 4294901760
    %5473 = vmatpush.msra.mxu0 %v5472
    %v5474 = vand.u32 %v275, 4294901760
    %v5475 = vsub.f32 %v275, %v5474
    %v5476 = vand.u32 %v5475, 4294901760
    %v5477 = vsub.f32 %v5475, %v5476
    %v5478 = vand.u32 %v5477, 4294901760
    %5479 = vmatpush.msra.mxu0 %v5478
    %v5480 = vand.u32 %v267, 4294901760
    %v5481 = vsub.f32 %v267, %v5480
    %v5482 = vand.u32 %v5481, 4294901760
    %v5483 = vsub.f32 %v5481, %v5482
    %v5484 = vand.u32 %v5483, 4294901760
    %5485 = vmatpush.msra.mxu0 %v5484
    %v5486 = vand.u32 %v259, 4294901760
    %v5487 = vsub.f32 %v259, %v5486
    %v5488 = vand.u32 %v5487, 4294901760
    %v5489 = vsub.f32 %v5487, %v5488
    %v5490 = vand.u32 %v5489, 4294901760
    %5491 = vmatpush.msra.mxu0 %v5490
    %v5492 = vand.u32 %v251, 4294901760
    %v5493 = vsub.f32 %v251, %v5492
    %v5494 = vand.u32 %v5493, 4294901760
    %v5495 = vsub.f32 %v5493, %v5494
    %v5496 = vand.u32 %v5495, 4294901760
    %5497 = vmatpush.msra.mxu0 %v5496
    %v5498 = vand.u32 %v243, 4294901760
    %v5499 = vsub.f32 %v243, %v5498
    %v5500 = vand.u32 %v5499, 4294901760
    %v5501 = vsub.f32 %v5499, %v5500
    %v5502 = vand.u32 %v5501, 4294901760
    %5503 = vmatpush.msra.mxu0 %v5502
    %v5504 = vand.u32 %v235, 4294901760
    %v5505 = vsub.f32 %v235, %v5504
    %v5506 = vand.u32 %v5505, 4294901760
    %v5507 = vsub.f32 %v5505, %v5506
    %v5508 = vand.u32 %v5507, 4294901760
    %5509 = vmatpush.msra.mxu0 %v5508
    %v5510 = vand.u32 %v227, 4294901760
    %v5511 = vsub.f32 %v227, %v5510
    %v5512 = vand.u32 %v5511, 4294901760
    %v5513 = vsub.f32 %v5511, %v5512
    %v5514 = vand.u32 %v5513, 4294901760
    %5515 = vmatpush.msra.mxu0 %v5514
    %v5516 = vand.u32 %v219, 4294901760
    %v5517 = vsub.f32 %v219, %v5516
    %v5518 = vand.u32 %v5517, 4294901760
    %v5519 = vsub.f32 %v5517, %v5518
    %v5520 = vand.u32 %v5519, 4294901760
    %5521 = vmatpush.msra.mxu0 %v5520
    %v5522 = vand.u32 %v211, 4294901760
    %v5523 = vsub.f32 %v211, %v5522
    %v5524 = vand.u32 %v5523, 4294901760
    %v5525 = vsub.f32 %v5523, %v5524
    %v5526 = vand.u32 %v5525, 4294901760
    %5527 = vmatpush.msra.mxu0 %v5526
    %v5528 = vand.u32 %v203, 4294901760
    %v5529 = vsub.f32 %v203, %v5528
    %v5530 = vand.u32 %v5529, 4294901760
    %v5531 = vsub.f32 %v5529, %v5530
    %v5532 = vand.u32 %v5531, 4294901760
    %5533 = vmatpush.msra.mxu0 %v5532
    %v5534 = vand.u32 %v195, 4294901760
    %v5535 = vsub.f32 %v195, %v5534
    %v5536 = vand.u32 %v5535, 4294901760
    %v5537 = vsub.f32 %v5535, %v5536
    %v5538 = vand.u32 %v5537, 4294901760
    %5539 = vmatpush.msra.mxu0 %v5538
    %v5540 = vand.u32 %v187, 4294901760
    %v5541 = vsub.f32 %v187, %v5540
    %v5542 = vand.u32 %v5541, 4294901760
    %v5543 = vsub.f32 %v5541, %v5542
    %v5544 = vand.u32 %v5543, 4294901760
    %5545 = vmatpush.msra.mxu0 %v5544
    %v5546 = vand.u32 %v179, 4294901760
    %v5547 = vsub.f32 %v179, %v5546
    %v5548 = vand.u32 %v5547, 4294901760
    %v5549 = vsub.f32 %v5547, %v5548
    %v5550 = vand.u32 %v5549, 4294901760
    %5551 = vmatpush.msra.mxu0 %v5550
    %v5552 = vand.u32 %v43, 4294901760
    %5553 = vmatmul.f32.gmra.mxu0 %v5552
    %v5554 = vpop.f32.mrf.mxu0
    %v5555 = vadd.f32 %v5454, %v5554
    %5556 = vdwg.mxu0
    %v5557 = vand.u32 %v299, 4294901760
    %v5558 = vsub.f32 %v299, %v5557
    %5559 = vmatpush.msra.mxu0 %v5558
    %v5560 = vand.u32 %v291, 4294901760
    %v5561 = vsub.f32 %v291, %v5560
    %5562 = vmatpush.msra.mxu0 %v5561
    %v5563 = vand.u32 %v283, 4294901760
    %v5564 = vsub.f32 %v283, %v5563
    %5565 = vmatpush.msra.mxu0 %v5564
    %v5566 = vand.u32 %v275, 4294901760
    %v5567 = vsub.f32 %v275, %v5566
    %5568 = vmatpush.msra.mxu0 %v5567
    %v5569 = vand.u32 %v267, 4294901760
    %v5570 = vsub.f32 %v267, %v5569
    %5571 = vmatpush.msra.mxu0 %v5570
    %v5572 = vand.u32 %v259, 4294901760
    %v5573 = vsub.f32 %v259, %v5572
    %5574 = vmatpush.msra.mxu0 %v5573
    %v5575 = vand.u32 %v251, 4294901760
    %v5576 = vsub.f32 %v251, %v5575
    %5577 = vmatpush.msra.mxu0 %v5576
    %v5578 = vand.u32 %v243, 4294901760
    %v5579 = vsub.f32 %v243, %v5578
    %5580 = vmatpush.msra.mxu0 %v5579
    %v5581 = vand.u32 %v235, 4294901760
    %v5582 = vsub.f32 %v235, %v5581
    %5583 = vmatpush.msra.mxu0 %v5582
    %v5584 = vand.u32 %v227, 4294901760
    %v5585 = vsub.f32 %v227, %v5584
    %5586 = vmatpush.msra.mxu0 %v5585
    %v5587 = vand.u32 %v219, 4294901760
    %v5588 = vsub.f32 %v219, %v5587
    %5589 = vmatpush.msra.mxu0 %v5588
    %v5590 = vand.u32 %v211, 4294901760
    %v5591 = vsub.f32 %v211, %v5590
    %5592 = vmatpush.msra.mxu0 %v5591
    %v5593 = vand.u32 %v203, 4294901760
    %v5594 = vsub.f32 %v203, %v5593
    %5595 = vmatpush.msra.mxu0 %v5594
    %v5596 = vand.u32 %v195, 4294901760
    %v5597 = vsub.f32 %v195, %v5596
    %5598 = vmatpush.msra.mxu0 %v5597
    %v5599 = vand.u32 %v187, 4294901760
    %v5600 = vsub.f32 %v187, %v5599
    %5601 = vmatpush.msra.mxu0 %v5600
    %v5602 = vand.u32 %v179, 4294901760
    %v5603 = vsub.f32 %v179, %v5602
    %5604 = vmatpush.msra.mxu0 %v5603
    %v5605 = vand.u32 %v43, 4294901760
    %v5606 = vsub.f32 %v43, %v5605
    %5607 = vmatmul.f32.gmra.mxu0 %v5606
    %v5608 = vpop.f32.mrf.mxu0
    %v5609 = vadd.f32 %v5555, %v5608
    %5610 = vdwg.mxu0
    %v5611 = vand.u32 %v299, 4294901760
    %5612 = vmatpush.msra.mxu0 %v5611
    %v5613 = vand.u32 %v291, 4294901760
    %5614 = vmatpush.msra.mxu0 %v5613
    %v5615 = vand.u32 %v283, 4294901760
    %5616 = vmatpush.msra.mxu0 %v5615
    %v5617 = vand.u32 %v275, 4294901760
    %5618 = vmatpush.msra.mxu0 %v5617
    %v5619 = vand.u32 %v267, 4294901760
    %5620 = vmatpush.msra.mxu0 %v5619
    %v5621 = vand.u32 %v259, 4294901760
    %5622 = vmatpush.msra.mxu0 %v5621
    %v5623 = vand.u32 %v251, 4294901760
    %5624 = vmatpush.msra.mxu0 %v5623
    %v5625 = vand.u32 %v243, 4294901760
    %5626 = vmatpush.msra.mxu0 %v5625
    %v5627 = vand.u32 %v235, 4294901760
    %5628 = vmatpush.msra.mxu0 %v5627
    %v5629 = vand.u32 %v227, 4294901760
    %5630 = vmatpush.msra.mxu0 %v5629
    %v5631 = vand.u32 %v219, 4294901760
    %5632 = vmatpush.msra.mxu0 %v5631
    %v5633 = vand.u32 %v211, 4294901760
    %5634 = vmatpush.msra.mxu0 %v5633
    %v5635 = vand.u32 %v203, 4294901760
    %5636 = vmatpush.msra.mxu0 %v5635
    %v5637 = vand.u32 %v195, 4294901760
    %5638 = vmatpush.msra.mxu0 %v5637
    %v5639 = vand.u32 %v187, 4294901760
    %5640 = vmatpush.msra.mxu0 %v5639
    %v5641 = vand.u32 %v179, 4294901760
    %5642 = vmatpush.msra.mxu0 %v5641
    %v5643 = vand.u32 %v43, 4294901760
    %v5644 = vsub.f32 %v43, %v5643
    %v5645 = vand.u32 %v5644, 4294901760
    %5646 = vmatmul.f32.gmra.mxu0 %v5645
    %v5647 = vpop.f32.mrf.mxu0
    %v5648 = vadd.f32 %v5609, %v5647
    %5649 = vdwg.mxu0
    %v5650 = vand.u32 %v299, 4294901760
    %v5651 = vsub.f32 %v299, %v5650
    %v5652 = vand.u32 %v5651, 4294901760
    %5653 = vmatpush.msra.mxu0 %v5652
    %v5654 = vand.u32 %v291, 4294901760
    %v5655 = vsub.f32 %v291, %v5654
    %v5656 = vand.u32 %v5655, 4294901760
    %5657 = vmatpush.msra.mxu0 %v5656
    %v5658 = vand.u32 %v283, 4294901760
    %v5659 = vsub.f32 %v283, %v5658
    %v5660 = vand.u32 %v5659, 4294901760
    %5661 = vmatpush.msra.mxu0 %v5660
    %v5662 = vand.u32 %v275, 4294901760
    %v5663 = vsub.f32 %v275, %v5662
    %v5664 = vand.u32 %v5663, 4294901760
    %5665 = vmatpush.msra.mxu0 %v5664
    %v5666 = vand.u32 %v267, 4294901760
    %v5667 = vsub.f32 %v267, %v5666
    %v5668 = vand.u32 %v5667, 4294901760
    %5669 = vmatpush.msra.mxu0 %v5668
    %v5670 = vand.u32 %v259, 4294901760
    %v5671 = vsub.f32 %v259, %v5670
    %v5672 = vand.u32 %v5671, 4294901760
    %5673 = vmatpush.msra.mxu0 %v5672
    %v5674 = vand.u32 %v251, 4294901760
    %v5675 = vsub.f32 %v251, %v5674
    %v5676 = vand.u32 %v5675, 4294901760
    %5677 = vmatpush.msra.mxu0 %v5676
    %v5678 = vand.u32 %v243, 4294901760
    %v5679 = vsub.f32 %v243, %v5678
    %v5680 = vand.u32 %v5679, 4294901760
    %5681 = vmatpush.msra.mxu0 %v5680
    %v5682 = vand.u32 %v235, 4294901760
    %v5683 = vsub.f32 %v235, %v5682
    %v5684 = vand.u32 %v5683, 4294901760
    %5685 = vmatpush.msra.mxu0 %v5684
    %v5686 = vand.u32 %v227, 4294901760
    %v5687 = vsub.f32 %v227, %v5686
    %v5688 = vand.u32 %v5687, 4294901760
    %5689 = vmatpush.msra.mxu0 %v5688
    %v5690 = vand.u32 %v219, 4294901760
    %v5691 = vsub.f32 %v219, %v5690
    %v5692 = vand.u32 %v5691, 4294901760
    %5693 = vmatpush.msra.mxu0 %v5692
    %v5694 = vand.u32 %v211, 4294901760
    %v5695 = vsub.f32 %v211, %v5694
    %v5696 = vand.u32 %v5695, 4294901760
    %5697 = vmatpush.msra.mxu0 %v5696
    %v5698 = vand.u32 %v203, 4294901760
    %v5699 = vsub.f32 %v203, %v5698
    %v5700 = vand.u32 %v5699, 4294901760
    %5701 = vmatpush.msra.mxu0 %v5700
    %v5702 = vand.u32 %v195, 4294901760
    %v5703 = vsub.f32 %v195, %v5702
    %v5704 = vand.u32 %v5703, 4294901760
    %5705 = vmatpush.msra.mxu0 %v5704
    %v5706 = vand.u32 %v187, 4294901760
    %v5707 = vsub.f32 %v187, %v5706
    %v5708 = vand.u32 %v5707, 4294901760
    %5709 = vmatpush.msra.mxu0 %v5708
    %v5710 = vand.u32 %v179, 4294901760
    %v5711 = vsub.f32 %v179, %v5710
    %v5712 = vand.u32 %v5711, 4294901760
    %5713 = vmatpush.msra.mxu0 %v5712
    %v5714 = vand.u32 %v43, 4294901760
    %5715 = vmatmul.f32.gmra.mxu0 %v5714
    %v5716 = vpop.f32.mrf.mxu0
    %v5717 = vadd.f32 %v5648, %v5716
    %5718 = vdwg.mxu0
    %v5719 = vand.u32 %v299, 4294901760
    %5720 = vmatpush.msra.mxu0 %v5719
    %v5721 = vand.u32 %v291, 4294901760
    %5722 = vmatpush.msra.mxu0 %v5721
    %v5723 = vand.u32 %v283, 4294901760
    %5724 = vmatpush.msra.mxu0 %v5723
    %v5725 = vand.u32 %v275, 4294901760
    %5726 = vmatpush.msra.mxu0 %v5725
    %v5727 = vand.u32 %v267, 4294901760
    %5728 = vmatpush.msra.mxu0 %v5727
    %v5729 = vand.u32 %v259, 4294901760
    %5730 = vmatpush.msra.mxu0 %v5729
    %v5731 = vand.u32 %v251, 4294901760
    %5732 = vmatpush.msra.mxu0 %v5731
    %v5733 = vand.u32 %v243, 4294901760
    %5734 = vmatpush.msra.mxu0 %v5733
    %v5735 = vand.u32 %v235, 4294901760
    %5736 = vmatpush.msra.mxu0 %v5735
    %v5737 = vand.u32 %v227, 4294901760
    %5738 = vmatpush.msra.mxu0 %v5737
    %v5739 = vand.u32 %v219, 4294901760
    %5740 = vmatpush.msra.mxu0 %v5739
    %v5741 = vand.u32 %v211, 4294901760
    %5742 = vmatpush.msra.mxu0 %v5741
    %v5743 = vand.u32 %v203, 4294901760
    %5744 = vmatpush.msra.mxu0 %v5743
    %v5745 = vand.u32 %v195, 4294901760
    %5746 = vmatpush.msra.mxu0 %v5745
    %v5747 = vand.u32 %v187, 4294901760
    %5748 = vmatpush.msra.mxu0 %v5747
    %v5749 = vand.u32 %v179, 4294901760
    %5750 = vmatpush.msra.mxu0 %v5749
    %v5751 = vand.u32 %v43, 4294901760
    %5752 = vmatmul.f32.gmra.mxu0 %v5751
    %v5753 = vpop.f32.mrf.mxu0
    %v5754 = vadd.f32 %v5717, %v5753
    %5755 = vdwg.mxu0
    %5756 = vst [vmem:[#allocation7] sm:$0xff] %v980
    %5757 = vst [vmem:[#allocation7 + $0x8] sm:$0xff] %v1662
    %5758 = vst [vmem:[#allocation7 + $0x10] sm:$0xff] %v2344
    %5759 = vst [vmem:[#allocation7 + $0x18] sm:$0xff] %v3026
    %5760 = vst [vmem:[#allocation7 + $0x20] sm:$0xff] %v3708
    %5761 = vst [vmem:[#allocation7 + $0x28] sm:$0xff] %v4390
    %5762 = vst [vmem:[#allocation7 + $0x30] sm:$0xff] %v5072
    %5763 = vst [vmem:[#allocation7 + $0x38] sm:$0xff] %v5754
    // Predicated region
    $region18: #{tpu_custom_call.1} parent=1 // pred_check
      _
    $region19: #{tpu_custom_call.1} parent=1 // pred_check_branch
      %5765 = sbr.rel (0) target = $region21
    $region20: #{tpu_custom_call.1} parent=1 // pred_region
      %5767 = vsyncadd [#allocation4], 0
      %s5769 = sshll.u32 [#allocation7], 4
      %s5770 = int_to_ptr.vmem [resolvable:$true] %s5769
      %s5771 = sshll.u32 %s2, 4
      %s5772 = int_to_ptr.hbm [resolvable:$true] %s5771
      %5774 = dma.vmem_to_hbm [thread:$0]  %s5770, 1024, %s5772, [#allocation4]
    $region21: #{tpu_custom_call.1} parent=1 // pred_fallthru
      _
    // Predicated region
    $region22: #{tpu_custom_call.1} parent=1 // pred_check
      _
    $region23: #{tpu_custom_call.1} parent=1 // pred_check_branch
      %5776 = sbr.rel (0) target = $region25
    $region24: #{tpu_custom_call.1} parent=1 // pred_region
      %5778 = dma.done [#allocation4], 1024
    $region25: #{tpu_custom_call.1} parent=1 // pred_fallthru
      _
    %5779 = vsyncpa [#allocation3], 1
    %5780 = vsyncpa [#allocation6], 1
    %5781 = vsyncpa [#allocation4], 1

</llo_original>
